<compile_context>
chip_gen: v7x
topology: tpu7x:2x2x1
jax: 0.10.0
libtpu: 0.0.40
codegen_flags: <defaults>
</compile_context>

<pallas_src>
import functools

import jax
import jax.numpy as jnp
from jax import lax
from jax.experimental import pallas as pl
from jax.experimental.pallas import tpu as pltpu


# ----------------------------------------------------------------------------
# helpers
# ----------------------------------------------------------------------------

_TM, _TN, _TK = 512, 512, 1024          # tile targets (multiples of 256)
_VMEM_LIMIT = 32 * 1024 * 1024          # explicit scoped-VMEM budget (all chips)


def _round_up(x, m):
    return -(-x // m) * m


def _tile_and_pad(dim, target, base=128):
    """Pick a tile size and the padded dim it divides.

    Small dims (<= 2*target) use one full-extent block (always legal, no pad).
    Larger dims: prefer a multiple-of-`base` tile that divides the dim exactly
    (no pad / no output slice); fall back to padding only if none exists.
    """
    if dim <= 2 * target:
        return dim, dim
    t = (target // base) * base
    while t >= base:
        if dim % t == 0:
            return t, dim
        t -= base
    return target, _round_up(dim, target)


def _erf_f32(x):
    # erf via Abramowitz–Stegun 7.1.26 (|err| < 1.5e-7), VPU/EUP-only primitives.
    a1, a2, a3, a4, a5 = 0.254829592, -0.284496736, 1.421413741, -1.453152027, 1.061405429
    p = 0.3275911
    sign = jnp.where(x >= 0.0, 1.0, -1.0)
    ax = jnp.abs(x)
    t = 1.0 / (1.0 + p * ax)
    poly = ((((a5 * t + a4) * t + a3) * t + a2) * t + a1) * t
    return sign * (1.0 - poly * jnp.exp(-ax * ax))


def _gelu_exact(x):
    # PyTorch nn.GELU() default = exact (erf-based) GELU; evaluated in f32.
    return 0.5 * x * (1.0 + _erf_f32(x * (2.0 ** -0.5)))


# ----------------------------------------------------------------------------
# Pallas kernels
# ----------------------------------------------------------------------------

def _ln_linear_kernel(x_ref, g_ref, bt_ref, w_ref, b_ref, o_ref, xn_ref,
                      *, eps, activation):
    """o = act(LayerNorm(x) @ w + b).

    Grid = (M tiles, N tiles), N innermost ("arbitrary").  The LN'd, scaled and
    bf16-cast x tile is computed once per M-tile (j == 0) into the VMEM scratch
    `xn_ref` and reused for every N-tile, so the VPU work is not redone Np/tn
    times.
    """
    @pl.when(pl.program_id(1) == 0)
    def _():
        x = x_ref[...].astype(jnp.float32)
        mean = jnp.mean(x, axis=-1, keepdims=True)
        xc = x - mean
        var = jnp.mean(xc * xc, axis=-1, keepdims=True)      # biased var (PyTorch LN)
        y = xc * lax.rsqrt(var + eps)
        y = y * g_ref[...] + bt_ref[...]
        xn_ref[...] = y.astype(jnp.bfloat16)

    acc = jnp.dot(xn_ref[...], w_ref[...], preferred_element_type=jnp.float32)
    acc = acc + b_ref[...]
    if activation == "gelu":
        acc = _gelu_exact(acc)
    o_ref[...] = acc.astype(o_ref.dtype)


def _linear_kernel(x_ref, w_ref, b_ref, *rest, activation, has_residual):
    """K-tiled o = act(x @ w + b) [+ residual]; f32 accumulator in scratch."""
    if has_residual:
        res_ref, o_ref, acc_ref = rest
    else:
        res_ref = None
        o_ref, acc_ref = rest

    k = pl.program_id(2)

    @pl.when(k == 0)
    def _():
        acc_ref[...] = jnp.zeros_like(acc_ref)

    acc_ref[...] += jnp.dot(x_ref[...].astype(jnp.bfloat16), w_ref[...],
                            preferred_element_type=jnp.float32)

    @pl.when(k == pl.num_programs(2) - 1)
    def _():
        out = acc_ref[...] + b_ref[...]
        if activation == "gelu":
            out = _gelu_exact(out)
        if has_residual:
            # NOTE: activation is applied before the residual add; the two are
            # never combined at the current call sites.
            out = out + res_ref[...].astype(jnp.float32)
        o_ref[...] = out.astype(o_ref.dtype)


def _attention_kernel(qkv_ref, o_ref, *, num_heads, head_dim, seq_true, scale):
    """One batch element (all heads) per grid step.

    qkv_ref: (1, Sp, 3*E) bf16, token-major with columns [q | k | v], each
    head-major / head_dim-minor (the nn.Linear(E, 3E) layout).  Output is
    (1, Sp, E) head-major, exactly the layout the proj matmul expects.

    TODO(synk): batch the heads into a single leading-batch dot_general; that
    needs either a head-leading QKV layout or a Mosaic-supported
    (Sp,H,Dh)->(H,Sp,Dh) relayout, so per-head 2-D MXU dots are kept here.
    """
    blk = qkv_ref[0]                               # (Sp, 3E) bf16
    Sp = blk.shape[0]
    E = num_heads * head_dim
    need_mask = seq_true < Sp
    if need_mask:
        key_idx = lax.broadcasted_iota(jnp.int32, (Sp, Sp), 1)

    outs = []
    for h in range(num_heads):
        lo = h * head_dim
        q = lax.slice(blk, (0, lo), (Sp, lo + head_dim))
        k = lax.slice(blk, (0, E + lo), (Sp, E + lo + head_dim))
        v = lax.slice(blk, (0, 2 * E + lo), (Sp, 2 * E + lo + head_dim))
        # scores = q @ k^T * scale (contract head_dim, no explicit transpose)
        s = lax.dot_general(q, k, (((1,), (1,)), ((), ())),
                            preferred_element_type=jnp.float32) * scale
        if need_mask:                              # mask padded keys
            s = jnp.where(key_idx < seq_true, s, -1e30)
        s = s - jnp.max(s, axis=-1, keepdims=True)
        e = jnp.exp(s)
        p = e * pl.reciprocal(jnp.sum(e, axis=-1, keepdims=True), approx=True)
        out = jnp.dot(p.astype(jnp.bfloat16), v, preferred_element_type=jnp.float32)
        outs.append(out)
    # single dense (Sp, E) store
    o_ref[0] = jnp.concatenate(outs, axis=-1).astype(o_ref.dtype)


# ----------------------------------------------------------------------------
# wrappers (grid/tiling logic)
# ----------------------------------------------------------------------------

def pallas_ln_linear(x2d, gamma, beta, w, b, *, activation=None, eps=1e-6,
                     out_dtype=None):
    """Fused LayerNorm + Linear (+GELU). x:(M,K), w:(K,N) bf16."""
    M, K = x2d.shape
    N = w.shape[1]
    if out_dtype is None:
        out_dtype = x2d.dtype
    tm, Mp = _tile_and_pad(M, _TM)
    tn, Np = _tile_and_pad(N, _TN)
    xp = jnp.pad(x2d, ((0, Mp - M), (0, 0))) if Mp != M else x2d
    wp = jnp.pad(w, ((0, 0), (0, Np - N))) if Np != N else w
    bp = jnp.pad(b, ((0, 0), (0, Np - N))) if Np != N else b

    kernel = functools.partial(_ln_linear_kernel, eps=eps, activation=activation)
    out = pl.pallas_call(
        kernel,
        out_shape=jax.ShapeDtypeStruct((Mp, Np), out_dtype),
        grid=(Mp // tm, Np // tn),
        in_specs=[
            pl.BlockSpec((tm, K), lambda i, j: (i, 0)),
            pl.BlockSpec((1, K), lambda i, j: (0, 0)),
            pl.BlockSpec((1, K), lambda i, j: (0, 0)),
            pl.BlockSpec((K, tn), lambda i, j: (0, j)),
            pl.BlockSpec((1, tn), lambda i, j: (0, j)),
        ],
        out_specs=pl.BlockSpec((tm, tn), lambda i, j: (i, j)),
        scratch_shapes=[pltpu.VMEM((tm, K), jnp.bfloat16)],   # cached LN(x) tile
        compiler_params=pltpu.CompilerParams(
            dimension_semantics=("parallel", "arbitrary"),
            vmem_limit_bytes=_VMEM_LIMIT),
    )(xp, gamma, beta, wp, bp)
    if Mp != M or Np != N:
        out = out[:M, :N]
    return out


def pallas_linear(x2d, w, b, *, residual=None, activation=None, out_dtype=None):
    """K-tiled Linear (+GELU) (+fused residual add). x:(M,K), w:(K,N) bf16."""
    M, K = x2d.shape
    N = w.shape[1]
    if out_dtype is None:
        out_dtype = x2d.dtype
    tm, Mp = _tile_and_pad(M, _TM)
    tn, Np = _tile_and_pad(N, _TN)
    tk, Kp = _tile_and_pad(K, _TK)
    xp = jnp.pad(x2d, ((0, Mp - M), (0, Kp - K))) if (Mp != M or Kp != K) else x2d
    wp = jnp.pad(w, ((0, Kp - K), (0, Np - N))) if (Kp != K or Np != N) else w
    bp = jnp.pad(b, ((0, 0), (0, Np - N))) if Np != N else b

    in_specs = [
        pl.BlockSpec((tm, tk), lambda i, j, kk: (i, kk)),
        pl.BlockSpec((tk, tn), lambda i, j, kk: (kk, j)),
        pl.BlockSpec((1, tn), lambda i, j, kk: (0, j)),
    ]
    args = [xp, wp, bp]
    if residual is not None:
        rp = residual
        if Mp != M or Np != N:
            rp = jnp.pad(rp, ((0, Mp - M), (0, Np - N)))
        in_specs.append(pl.BlockSpec((tm, tn), lambda i, j, kk: (i, j)))
        args.append(rp)

    kernel = functools.partial(_linear_kernel, activation=activation,
                               has_residual=residual is not None)
    out = pl.pallas_call(
        kernel,
        out_shape=jax.ShapeDtypeStruct((Mp, Np), out_dtype),
        grid=(Mp // tm, Np // tn, Kp // tk),
        in_specs=in_specs,
        out_specs=pl.BlockSpec((tm, tn), lambda i, j, kk: (i, j)),
        scratch_shapes=[pltpu.VMEM((tm, tn), jnp.float32)],
        compiler_params=pltpu.CompilerParams(
            dimension_semantics=("parallel", "parallel", "arbitrary"),
            vmem_limit_bytes=_VMEM_LIMIT),
    )(*args)
    if Mp != M or Np != N:
        out = out[:M, :N]
    return out


def pallas_attention(qkv, *, num_heads, head_dim, seq_true, scale):
    """qkv: (B, Sp, 3*E) bf16 -> (B, Sp, E) bf16 (head-major last dim)."""
    B, Sp, threeE = qkv.shape
    E = num_heads * head_dim
    kernel = functools.partial(_attention_kernel, num_heads=num_heads,
                               head_dim=head_dim, seq_true=seq_true, scale=scale)
    return pl.pallas_call(
        kernel,
        out_shape=jax.ShapeDtypeStruct((B, Sp, E), qkv.dtype),
        grid=(B,),
        in_specs=[pl.BlockSpec((1, Sp, threeE), lambda b: (b, 0, 0))],
        out_specs=pl.BlockSpec((1, Sp, E), lambda b: (b, 0, 0)),
        compiler_params=pltpu.CompilerParams(
            dimension_semantics=("parallel",),
            vmem_limit_bytes=_VMEM_LIMIT),
    )(qkv)


# ----------------------------------------------------------------------------
# Model (glue in plain JAX; hot paths in Pallas)
# ----------------------------------------------------------------------------

def init_params(key, *, img_size, patch_size, in_chans, n_classes,
                embed_dim, depth, num_heads, mlp_ratio):
    n_patches = (img_size // patch_size) ** 2
    hidden = int(embed_dim * mlp_ratio)
    n_cls_pad = _round_up(n_classes, 128)          # lane-dense head output

    def dense(k, fan_in, fan_out):
        # Weights stored bf16: MXU-native operands, half the weight DMA bytes.
        return (jax.random.normal(k, (fan_in, fan_out), jnp.float32) * 0.02
                ).astype(jnp.bfloat16)

    keys = jax.random.split(key, 3 + depth)
    head_w = jnp.zeros((embed_dim, n_cls_pad), jnp.float32)
    head_w = head_w.at[:, :n_classes].set(
        jax.random.normal(keys[2], (embed_dim, n_classes), jnp.float32) * 0.02)

    params = {
        # conv(patch_size, stride=patch_size) == linear over flattened patches
        "patch_w": dense(keys[0], in_chans * patch_size * patch_size, embed_dim),
        "patch_b": jnp.zeros((1, embed_dim), jnp.float32),
        "cls_token": jnp.zeros((1, 1, embed_dim), jnp.float32),          # torch.zeros
        "pos_embed": jax.random.normal(keys[1], (1, 1 + n_patches, embed_dim),
                                       jnp.float32),                     # torch.randn
        "norm_g": jnp.ones((1, embed_dim), jnp.float32),
        "norm_b": jnp.zeros((1, embed_dim), jnp.float32),
        "head_w": head_w.astype(jnp.bfloat16),
        "head_b": jnp.zeros((1, n_cls_pad), jnp.float32),
        "blocks": [],
    }
    for d in range(depth):
        bk = jax.random.split(keys[3 + d], 4)
        params["blocks"].append({
            "ln1_g": jnp.ones((1, embed_dim), jnp.float32),
            "ln1_b": jnp.zeros((1, embed_dim), jnp.float32),
            "qkv_w": dense(bk[0], embed_dim, 3 * embed_dim),
            "qkv_b": jnp.zeros((1, 3 * embed_dim), jnp.float32),
            "proj_w": dense(bk[1], embed_dim, embed_dim),
            "proj_b": jnp.zeros((1, embed_dim), jnp.float32),
            "ln2_g": jnp.ones((1, embed_dim), jnp.float32),
            "ln2_b": jnp.zeros((1, embed_dim), jnp.float32),
            "fc1_w": dense(bk[2], embed_dim, hidden),
            "fc1_b": jnp.zeros((1, hidden), jnp.float32),
            "fc2_w": dense(bk[3], hidden, embed_dim),
            "fc2_b": jnp.zeros((1, embed_dim), jnp.float32),
        })
    return params


def make_forward(*, img_size, patch_size, in_chans, n_classes,
                 embed_dim, depth, num_heads, mlp_ratio):
    head_size = embed_dim // num_heads
    scale = head_size ** -0.5
    n_side = img_size // patch_size
    n_patches = n_side * n_side
    S = 1 + n_patches
    Sp = _round_up(S, 8)                  # padded sequence (pad keys masked)

    def transformer_block(bp, x2, B):
        # --- attention branch (EfficientAttention, fused LN1 + QKV) ---
        qkv = pallas_ln_linear(x2, bp["ln1_g"], bp["ln1_b"],
                               bp["qkv_w"], bp["qkv_b"],
                               out_dtype=jnp.bfloat16)                  # (B*Sp, 3E)
        wa = pallas_attention(qkv.reshape(B, Sp, 3 * embed_dim),
                              num_heads=num_heads, head_dim=head_size,
                              seq_true=S, scale=scale)                  # (B, Sp, E)
        x2 = pallas_linear(wa.reshape(B * Sp, embed_dim),
                           bp["proj_w"], bp["proj_b"], residual=x2,
                           out_dtype=jnp.bfloat16)                      # + residual
        # --- MLP branch (fused LN2 + fc1 + GELU, then fc2 + residual) ---
        h = pallas_ln_linear(x2, bp["ln2_g"], bp["ln2_b"],
                             bp["fc1_w"], bp["fc1_b"], activation="gelu",
                             out_dtype=jnp.bfloat16)
        x2 = pallas_linear(h, bp["fc2_w"], bp["fc2_b"], residual=x2,
                           out_dtype=jnp.bfloat16)
        return x2

    def forward(params, x):
        # x: (B, C, H, W)  NCHW
        B, C, H, W = x.shape
        p = patch_size
        # Patchify: equivalent to Conv2d(k=p, stride=p) then flatten(2).transpose(1,2).
        # The transpose runs on a bf16 copy (half the HBM bytes of that pass).
        # TODO(synk): fold the patchify gather into the patch-embed kernel's
        # index_map / manual DMA so this XLA transpose pass disappears entirely.
        xb = x.astype(jnp.bfloat16)
        patches = (xb.reshape(B, C, H // p, p, W // p, p)
                     .transpose(0, 2, 4, 1, 3, 5)
                     .reshape(B * n_patches, C * p * p))
        emb = pallas_linear(patches, params["patch_w"], params["patch_b"],
                            out_dtype=jnp.bfloat16)
        emb = emb.reshape(B, n_patches, embed_dim)
        cls = jnp.broadcast_to(params["cls_token"], (B, 1, embed_dim)).astype(jnp.bfloat16)
        tok = jnp.concatenate([cls, emb], axis=1) + params["pos_embed"].astype(jnp.bfloat16)
        # pos_drop: identity (eval mode)
        if Sp != S:
            tok = jnp.pad(tok, ((0, 0), (0, Sp - S), (0, 0)))
        x2 = tok.reshape(B * Sp, embed_dim)          # bf16 residual stream
        for bp in params["blocks"]:
            x2 = transformer_block(bp, x2, B)
        # Final LayerNorm is per-row, so applying it to the cls rows only is
        # exactly equivalent to norm-all-then-slice.  Head output is 128-padded
        # (lane-dense) and sliced back to n_classes.
        cls_final = x2.reshape(B, Sp, embed_dim)[:, 0]               # (B, E) bf16
        logits = pallas_ln_linear(cls_final, params["norm_g"], params["norm_b"],
                                  params["head_w"], params["head_b"],
                                  out_dtype=jnp.float32)
        return logits[:, :n_classes]                                 # (B, n_classes)

    return forward


# ----------------------------------------------------------------------------
# Main
# ----------------------------------------------------------------------------

if __name__ == "__main__":
    cfg = dict(img_size=16, patch_size=4, in_chans=3, n_classes=2,
               embed_dim=32, depth=2, num_heads=4, mlp_ratio=4)

    key = jax.random.PRNGKey(0)
    pkey, xkey = jax.random.split(key)
    params = init_params(pkey, **cfg)

    # layout: NCHW input, matching PyTorch Conv2d
    x = jax.random.normal(xkey, (2, cfg["in_chans"], cfg["img_size"], cfg["img_size"]),
                          jnp.float32)

    forward = jax.jit(make_forward(**cfg))
    logits = forward(params, x)
    jax.block_until_ready(logits)

    assert logits.shape == (2, cfg["n_classes"]), logits.shape
    assert jnp.all(jnp.isfinite(logits))
    print("KERNEL_OK")
</pallas_src>

<mosaic_0001>
module attributes {stable_mosaic.version = 11 : i64} {
  func.func @_linear_kernel(%arg0: i32, %arg1: i32, %arg2: i32, %arg3: memref<32x48xbf16, #tpu.memory_space<vmem>>, %arg4: memref<48x32xbf16, #tpu.memory_space<vmem>>, %arg5: memref<1x32xf32, #tpu.memory_space<vmem>>, %arg6: memref<32x32xbf16, #tpu.memory_space<vmem>>, %arg7: memref<32x32xf32, #tpu.memory_space<vmem>>) attributes {dimension_semantics = [#tpu.dimension_semantics<parallel>, #tpu.dimension_semantics<parallel>, #tpu.dimension_semantics<arbitrary>], iteration_bounds = array<i64: 1, 1, 1>, scalar_prefetch = 0 : i64, scratch_operands = 1 : i64, tpu.core_type = #tpu.core_type<tc>, window_params = [{transform_indices = @transform_0, window_bounds = array<i64: 32, 48>}, {transform_indices = @transform_1, window_bounds = array<i64: 48, 32>}, {transform_indices = @transform_2, window_bounds = array<i64: 1, 32>}, {transform_indices = @transform_3, window_bounds = array<i64: 32, 32>}]} {
    %c0_i32 = arith.constant 0 : i32
    %0 = arith.cmpi eq, %arg2, %c0_i32 : i32
    %1 = arith.extui %0 : i1 to i32
    %c0_i32_0 = arith.constant 0 : i32
    %2 = arith.cmpi ne, %1, %c0_i32_0 : i32
    scf.if %2 {
      %cst_10 = arith.constant 0.000000e+00 : f32
      %12 = vector.broadcast %cst_10 : f32 to vector<32x32xf32>
      %c0_11 = arith.constant 0 : index
      %c0_12 = arith.constant 0 : index
      %13 = vector.load %arg7[%c0_11, %c0_12] : memref<32x32xf32, #tpu.memory_space<vmem>>, vector<32x32xf32>
      tpu.vector_store %arg7[%c0_11, %c0_12], %12 {strides = array<i32>} : memref<32x32xf32, #tpu.memory_space<vmem>>, vector<32x32xf32>,
    } else {
    }
    %c0 = arith.constant 0 : index
    %c0_1 = arith.constant 0 : index
    %3 = vector.load %arg7[%c0, %c0_1] : memref<32x32xf32, #tpu.memory_space<vmem>>, vector<32x32xf32>
    %c0_2 = arith.constant 0 : index
    %c0_3 = arith.constant 0 : index
    %4 = vector.load %arg3[%c0_2, %c0_3] : memref<32x48xbf16, #tpu.memory_space<vmem>>, vector<32x48xbf16>
    %c0_4 = arith.constant 0 : index
    %c0_5 = arith.constant 0 : index
    %5 = vector.load %arg4[%c0_4, %c0_5] : memref<48x32xbf16, #tpu.memory_space<vmem>>, vector<48x32xbf16>
    %cst = arith.constant dense<0.000000e+00> : vector<32x32xf32>
    %6 = tpu.matmul %4, %5, %cst {dimension_numbers = #tpu.dot_dimension_numbers<[1], [0], [0], [1], [0, 0, 1, 1], [], []>} : vector<32x48xbf16>, vector<48x32xbf16>, vector<32x32xf32> -> vector<32x32xf32>
    %7 = arith.addf %3, %6 : vector<32x32xf32>
    %c0_6 = arith.constant 0 : index
    %c0_7 = arith.constant 0 : index
    %8 = vector.load %arg7[%c0_6, %c0_7] : memref<32x32xf32, #tpu.memory_space<vmem>>, vector<32x32xf32>
    tpu.vector_store %arg7[%c0_6, %c0_7], %7 {strides = array<i32>} : memref<32x32xf32, #tpu.memory_space<vmem>>, vector<32x32xf32>,
    %c0_i32_8 = arith.constant 0 : i32
    %9 = arith.cmpi eq, %arg2, %c0_i32_8 : i32
    %10 = arith.extui %9 : i1 to i32
    %c0_i32_9 = arith.constant 0 : i32
    %11 = arith.cmpi ne, %10, %c0_i32_9 : i32
    scf.if %11 {
      %c0_10 = arith.constant 0 : index
      %c0_11 = arith.constant 0 : index
      %12 = vector.load %arg7[%c0_10, %c0_11] : memref<32x32xf32, #tpu.memory_space<vmem>>, vector<32x32xf32>
      %c0_12 = arith.constant 0 : index
      %c0_13 = arith.constant 0 : index
      %13 = vector.load %arg5[%c0_12, %c0_13] : memref<1x32xf32, #tpu.memory_space<vmem>>, vector<1x32xf32>
      %14 = vector.broadcast %13 : vector<1x32xf32> to vector<32x32xf32>
      %15 = arith.addf %12, %14 : vector<32x32xf32>
      %16 = arith.truncf %15 : vector<32x32xf32> to vector<32x32xbf16>
      %c0_14 = arith.constant 0 : index
      %c0_15 = arith.constant 0 : index
      %17 = vector.load %arg6[%c0_14, %c0_15] : memref<32x32xbf16, #tpu.memory_space<vmem>>, vector<32x32xbf16>
      tpu.vector_store %arg6[%c0_14, %c0_15], %16 {strides = array<i32>} : memref<32x32xbf16, #tpu.memory_space<vmem>>, vector<32x32xbf16>,
    } else {
    }
    return
  }
  func.func @transform_0(%arg0: i32, %arg1: i32, %arg2: i32) -> (i32, i32) {
    %c0_i32 = arith.constant 0 : i32
    return %arg0, %arg2 : i32, i32
  }
  func.func @transform_1(%arg0: i32, %arg1: i32, %arg2: i32) -> (i32, i32) {
    %c0_i32 = arith.constant 0 : i32
    return %arg2, %arg1 : i32, i32
  }
  func.func @transform_2(%arg0: i32, %arg1: i32, %arg2: i32) -> (i32, i32) {
    %c0_i32 = arith.constant 0 : i32
    %c0_i32_0 = arith.constant 0 : i32
    return %c0_i32, %arg1 : i32, i32
  }
  func.func @transform_3(%arg0: i32, %arg1: i32, %arg2: i32) -> (i32, i32) {
    %c0_i32 = arith.constant 0 : i32
    return %arg0, %arg1 : i32, i32
  }
}

module attributes {stable_mosaic.version = 11 : i64} {
  func.func @_ln_linear_kernel(%arg0: i32, %arg1: i32, %arg2: memref<48x32xbf16, #tpu.memory_space<vmem>>, %arg3: memref<1x32xf32, #tpu.memory_space<vmem>>, %arg4: memref<1x32xf32, #tpu.memory_space<vmem>>, %arg5: memref<32x96xbf16, #tpu.memory_space<vmem>>, %arg6: memref<1x96xf32, #tpu.memory_space<vmem>>, %arg7: memref<48x96xbf16, #tpu.memory_space<vmem>>, %arg8: memref<48x32xbf16, #tpu.memory_space<vmem>>) attributes {dimension_semantics = [#tpu.dimension_semantics<parallel>, #tpu.dimension_semantics<arbitrary>], iteration_bounds = array<i64: 1, 1>, scalar_prefetch = 0 : i64, scratch_operands = 1 : i64, tpu.core_type = #tpu.core_type<tc>, window_params = [{transform_indices = @transform_0, window_bounds = array<i64: 48, 32>}, {pipeline_mode = #tpu.pipeline_mode<synchronous>, transform_indices = @transform_1, window_bounds = array<i64: 1, 32>}, {pipeline_mode = #tpu.pipeline_mode<synchronous>, transform_indices = @transform_2, window_bounds = array<i64: 1, 32>}, {transform_indices = @transform_3, window_bounds = array<i64: 32, 96>}, {transform_indices = @transform_4, window_bounds = array<i64: 1, 96>}, {transform_indices = @transform_5, window_bounds = array<i64: 48, 96>}]} {
    %c0_i32 = arith.constant 0 : i32
    %0 = arith.cmpi eq, %arg1, %c0_i32 : i32
    %1 = arith.extui %0 : i1 to i32
    %c0_i32_0 = arith.constant 0 : i32
    %2 = arith.cmpi ne, %1, %c0_i32_0 : i32
    scf.if %2 {
      %c0_8 = arith.constant 0 : index
      %c0_9 = arith.constant 0 : index
      %11 = vector.load %arg2[%c0_8, %c0_9] : memref<48x32xbf16, #tpu.memory_space<vmem>>, vector<48x32xbf16>
      %12 = arith.extf %11 : vector<48x32xbf16> to vector<48x32xf32>
      %cst_10 = arith.constant dense<0.000000e+00> : vector<48xf32>
      %13 = vector.multi_reduction <add>, %12, %cst_10 [1] : vector<48x32xf32> to vector<48xf32>
      %14 = vector.shape_cast %13 : vector<48xf32> to vector<48x1xf32>
      %cst_11 = arith.constant 3.200000e+01 : f32
      %15 = vector.broadcast %cst_11 : f32 to vector<48x1xf32>
      %16 = arith.divf %14, %15 : vector<48x1xf32>
      %17 = vector.broadcast %16 : vector<48x1xf32> to vector<48x32xf32>
      %18 = arith.subf %12, %17 : vector<48x32xf32>
      %19 = arith.mulf %18, %18 : vector<48x32xf32>
      %cst_12 = arith.constant dense<0.000000e+00> : vector<48xf32>
      %20 = vector.multi_reduction <add>, %19, %cst_12 [1] : vector<48x32xf32> to vector<48xf32>
      %21 = vector.shape_cast %20 : vector<48xf32> to vector<48x1xf32>
      %cst_13 = arith.constant 3.200000e+01 : f32
      %22 = vector.broadcast %cst_13 : f32 to vector<48x1xf32>
      %23 = arith.divf %21, %22 : vector<48x1xf32>
      %cst_14 = arith.constant 9.99999997E-7 : f32
      %24 = vector.broadcast %cst_14 : f32 to vector<48x1xf32>
      %25 = arith.addf %23, %24 : vector<48x1xf32>
      %26 = math.rsqrt %25 : vector<48x1xf32>
      %27 = vector.broadcast %26 : vector<48x1xf32> to vector<48x32xf32>
      %28 = arith.mulf %18, %27 : vector<48x32xf32>
      %c0_15 = arith.constant 0 : index
      %c0_16 = arith.constant 0 : index
      %29 = vector.load %arg3[%c0_15, %c0_16] : memref<1x32xf32, #tpu.memory_space<vmem>>, vector<1x32xf32>
      %30 = vector.broadcast %29 : vector<1x32xf32> to vector<48x32xf32>
      %31 = arith.mulf %28, %30 : vector<48x32xf32>
      %c0_17 = arith.constant 0 : index
      %c0_18 = arith.constant 0 : index
      %32 = vector.load %arg4[%c0_17, %c0_18] : memref<1x32xf32, #tpu.memory_space<vmem>>, vector<1x32xf32>
      %33 = vector.broadcast %32 : vector<1x32xf32> to vector<48x32xf32>
      %34 = arith.addf %31, %33 : vector<48x32xf32>
      %35 = arith.truncf %34 : vector<48x32xf32> to vector<48x32xbf16>
      %c0_19 = arith.constant 0 : index
      %c0_20 = arith.constant 0 : index
      %36 = vector.load %arg8[%c0_19, %c0_20] : memref<48x32xbf16, #tpu.memory_space<vmem>>, vector<48x32xbf16>
      tpu.vector_store %arg8[%c0_19, %c0_20], %35 {strides = array<i32>} : memref<48x32xbf16, #tpu.memory_space<vmem>>, vector<48x32xbf16>,
    } else {
    }
    %c0 = arith.constant 0 : index
    %c0_1 = arith.constant 0 : index
    %3 = vector.load %arg8[%c0, %c0_1] : memref<48x32xbf16, #tpu.memory_space<vmem>>, vector<48x32xbf16>
    %c0_2 = arith.constant 0 : index
    %c0_3 = arith.constant 0 : index
    %4 = vector.load %arg5[%c0_2, %c0_3] : memref<32x96xbf16, #tpu.memory_space<vmem>>, vector<32x96xbf16>
    %cst = arith.constant dense<0.000000e+00> : vector<48x96xf32>
    %5 = tpu.matmul %3, %4, %cst {dimension_numbers = #tpu.dot_dimension_numbers<[1], [0], [0], [1], [0, 0, 1, 1], [], []>} : vector<48x32xbf16>, vector<32x96xbf16>, vector<48x96xf32> -> vector<48x96xf32>
    %c0_4 = arith.constant 0 : index
    %c0_5 = arith.constant 0 : index
    %6 = vector.load %arg6[%c0_4, %c0_5] : memref<1x96xf32, #tpu.memory_space<vmem>>, vector<1x96xf32>
    %7 = vector.broadcast %6 : vector<1x96xf32> to vector<48x96xf32>
    %8 = arith.addf %5, %7 : vector<48x96xf32>
    %9 = arith.truncf %8 : vector<48x96xf32> to vector<48x96xbf16>
    %c0_6 = arith.constant 0 : index
    %c0_7 = arith.constant 0 : index
    %10 = vector.load %arg7[%c0_6, %c0_7] : memref<48x96xbf16, #tpu.memory_space<vmem>>, vector<48x96xbf16>
    tpu.vector_store %arg7[%c0_6, %c0_7], %9 {strides = array<i32>} : memref<48x96xbf16, #tpu.memory_space<vmem>>, vector<48x96xbf16>,
    return
  }
  func.func @transform_0(%arg0: i32, %arg1: i32) -> (i32, i32) {
    %c0_i32 = arith.constant 0 : i32
    %c0_i32_0 = arith.constant 0 : i32
    return %arg0, %c0_i32 : i32, i32
  }
  func.func @transform_1(%arg0: i32, %arg1: i32) -> (i32, i32) {
    %c0_i32 = arith.constant 0 : i32
    %c0_i32_0 = arith.constant 0 : i32
    %c0_i32_1 = arith.constant 0 : i32
    return %c0_i32, %c0_i32_0 : i32, i32
  }
  func.func @transform_2(%arg0: i32, %arg1: i32) -> (i32, i32) {
    %c0_i32 = arith.constant 0 : i32
    %c0_i32_0 = arith.constant 0 : i32
    %c0_i32_1 = arith.constant 0 : i32
    return %c0_i32, %c0_i32_0 : i32, i32
  }
  func.func @transform_3(%arg0: i32, %arg1: i32) -> (i32, i32) {
    %c0_i32 = arith.constant 0 : i32
    %c0_i32_0 = arith.constant 0 : i32
    return %c0_i32, %arg1 : i32, i32
  }
  func.func @transform_4(%arg0: i32, %arg1: i32) -> (i32, i32) {
    %c0_i32 = arith.constant 0 : i32
    %c0_i32_0 = arith.constant 0 : i32
    return %c0_i32, %arg1 : i32, i32
  }
  func.func @transform_5(%arg0: i32, %arg1: i32) -> (i32, i32) {
    %c0_i32 = arith.constant 0 : i32
    return %arg0, %arg1 : i32, i32
  }
}

module attributes {stable_mosaic.version = 11 : i64} {
  func.func @_linear_kernel(%arg0: i32, %arg1: i32, %arg2: i32, %arg3: memref<48x32xbf16, #tpu.memory_space<vmem>>, %arg4: memref<32x32xbf16, #tpu.memory_space<vmem>>, %arg5: memref<1x32xf32, #tpu.memory_space<vmem>>, %arg6: memref<48x32xbf16, #tpu.memory_space<vmem>>, %arg7: memref<48x32xbf16, #tpu.memory_space<vmem>>, %arg8: memref<48x32xf32, #tpu.memory_space<vmem>>) attributes {dimension_semantics = [#tpu.dimension_semantics<parallel>, #tpu.dimension_semantics<parallel>, #tpu.dimension_semantics<arbitrary>], iteration_bounds = array<i64: 1, 1, 1>, scalar_prefetch = 0 : i64, scratch_operands = 1 : i64, tpu.core_type = #tpu.core_type<tc>, window_params = [{transform_indices = @transform_0, window_bounds = array<i64: 48, 32>}, {transform_indices = @transform_1, window_bounds = array<i64: 32, 32>}, {transform_indices = @transform_2, window_bounds = array<i64: 1, 32>}, {transform_indices = @transform_3, window_bounds = array<i64: 48, 32>}, {transform_indices = @transform_4, window_bounds = array<i64: 48, 32>}]} {
    %c0_i32 = arith.constant 0 : i32
    %0 = arith.cmpi eq, %arg2, %c0_i32 : i32
    %1 = arith.extui %0 : i1 to i32
    %c0_i32_0 = arith.constant 0 : i32
    %2 = arith.cmpi ne, %1, %c0_i32_0 : i32
    scf.if %2 {
      %cst_10 = arith.constant 0.000000e+00 : f32
      %12 = vector.broadcast %cst_10 : f32 to vector<48x32xf32>
      %c0_11 = arith.constant 0 : index
      %c0_12 = arith.constant 0 : index
      %13 = vector.load %arg8[%c0_11, %c0_12] : memref<48x32xf32, #tpu.memory_space<vmem>>, vector<48x32xf32>
      tpu.vector_store %arg8[%c0_11, %c0_12], %12 {strides = array<i32>} : memref<48x32xf32, #tpu.memory_space<vmem>>, vector<48x32xf32>,
    } else {
    }
    %c0 = arith.constant 0 : index
    %c0_1 = arith.constant 0 : index
    %3 = vector.load %arg8[%c0, %c0_1] : memref<48x32xf32, #tpu.memory_space<vmem>>, vector<48x32xf32>
    %c0_2 = arith.constant 0 : index
    %c0_3 = arith.constant 0 : index
    %4 = vector.load %arg3[%c0_2, %c0_3] : memref<48x32xbf16, #tpu.memory_space<vmem>>, vector<48x32xbf16>
    %c0_4 = arith.constant 0 : index
    %c0_5 = arith.constant 0 : index
    %5 = vector.load %arg4[%c0_4, %c0_5] : memref<32x32xbf16, #tpu.memory_space<vmem>>, vector<32x32xbf16>
    %cst = arith.constant dense<0.000000e+00> : vector<48x32xf32>
    %6 = tpu.matmul %4, %5, %cst {dimension_numbers = #tpu.dot_dimension_numbers<[1], [0], [0], [1], [0, 0, 1, 1], [], []>} : vector<48x32xbf16>, vector<32x32xbf16>, vector<48x32xf32> -> vector<48x32xf32>
    %7 = arith.addf %3, %6 : vector<48x32xf32>
    %c0_6 = arith.constant 0 : index
    %c0_7 = arith.constant 0 : index
    %8 = vector.load %arg8[%c0_6, %c0_7] : memref<48x32xf32, #tpu.memory_space<vmem>>, vector<48x32xf32>
    tpu.vector_store %arg8[%c0_6, %c0_7], %7 {strides = array<i32>} : memref<48x32xf32, #tpu.memory_space<vmem>>, vector<48x32xf32>,
    %c0_i32_8 = arith.constant 0 : i32
    %9 = arith.cmpi eq, %arg2, %c0_i32_8 : i32
    %10 = arith.extui %9 : i1 to i32
    %c0_i32_9 = arith.constant 0 : i32
    %11 = arith.cmpi ne, %10, %c0_i32_9 : i32
    scf.if %11 {
      %c0_10 = arith.constant 0 : index
      %c0_11 = arith.constant 0 : index
      %12 = vector.load %arg8[%c0_10, %c0_11] : memref<48x32xf32, #tpu.memory_space<vmem>>, vector<48x32xf32>
      %c0_12 = arith.constant 0 : index
      %c0_13 = arith.constant 0 : index
      %13 = vector.load %arg5[%c0_12, %c0_13] : memref<1x32xf32, #tpu.memory_space<vmem>>, vector<1x32xf32>
      %14 = vector.broadcast %13 : vector<1x32xf32> to vector<48x32xf32>
      %15 = arith.addf %12, %14 : vector<48x32xf32>
      %c0_14 = arith.constant 0 : index
      %c0_15 = arith.constant 0 : index
      %16 = vector.load %arg6[%c0_14, %c0_15] : memref<48x32xbf16, #tpu.memory_space<vmem>>, vector<48x32xbf16>
      %17 = arith.extf %16 : vector<48x32xbf16> to vector<48x32xf32>
      %18 = arith.addf %15, %17 : vector<48x32xf32>
      %19 = arith.truncf %18 : vector<48x32xf32> to vector<48x32xbf16>
      %c0_16 = arith.constant 0 : index
      %c0_17 = arith.constant 0 : index
      %20 = vector.load %arg7[%c0_16, %c0_17] : memref<48x32xbf16, #tpu.memory_space<vmem>>, vector<48x32xbf16>
      tpu.vector_store %arg7[%c0_16, %c0_17], %19 {strides = array<i32>} : memref<48x32xbf16, #tpu.memory_space<vmem>>, vector<48x32xbf16>,
    } else {
    }
    return
  }
  func.func @transform_0(%arg0: i32, %arg1: i32, %arg2: i32) -> (i32, i32) {
    %c0_i32 = arith.constant 0 : i32
    return %arg0, %arg2 : i32, i32
  }
  func.func @transform_1(%arg0: i32, %arg1: i32, %arg2: i32) -> (i32, i32) {
    %c0_i32 = arith.constant 0 : i32
    return %arg2, %arg1 : i32, i32
  }
  func.func @transform_2(%arg0: i32, %arg1: i32, %arg2: i32) -> (i32, i32) {
    %c0_i32 = arith.constant 0 : i32
    %c0_i32_0 = arith.constant 0 : i32
    return %c0_i32, %arg1 : i32, i32
  }
  func.func @transform_3(%arg0: i32, %arg1: i32, %arg2: i32) -> (i32, i32) {
    %c0_i32 = arith.constant 0 : i32
    return %arg0, %arg1 : i32, i32
  }
  func.func @transform_4(%arg0: i32, %arg1: i32, %arg2: i32) -> (i32, i32) {
    %c0_i32 = arith.constant 0 : i32
    return %arg0, %arg1 : i32, i32
  }
}

module attributes {stable_mosaic.version = 11 : i64} {
  func.func @_attention_kernel(%arg0: i32, %arg1: memref<1x24x96xbf16, #tpu.memory_space<vmem>>, %arg2: memref<1x24x32xbf16, #tpu.memory_space<vmem>>) attributes {dimension_semantics = [#tpu.dimension_semantics<parallel>], iteration_bounds = array<i64: 2>, scalar_prefetch = 0 : i64, scratch_operands = 0 : i64, tpu.core_type = #tpu.core_type<tc>, window_params = [{transform_indices = @transform_0, window_bounds = array<i64: 1, 24, 96>}, {transform_indices = @transform_1, window_bounds = array<i64: 1, 24, 32>}]} {
    %c0 = arith.constant 0 : index
    %c0_0 = arith.constant 0 : index
    %c0_1 = arith.constant 0 : index
    %0 = vector.load %arg1[%c0, %c0_0, %c0_1] : memref<1x24x96xbf16, #tpu.memory_space<vmem>>, vector<1x24x96xbf16>
    %1 = vector.shape_cast %0 : vector<1x24x96xbf16> to vector<24x96xbf16>
    %2 = tpu.iota {dimensions = array<i32: 1>} : vector<24x24xi32>
    %3 = vector.extract_strided_slice %1 {offsets = [0, 0], sizes = [24, 8], strides = [1, 1]} : vector<24x96xbf16> to vector<24x8xbf16>
    %4 = vector.extract_strided_slice %1 {offsets = [0, 32], sizes = [24, 8], strides = [1, 1]} : vector<24x96xbf16> to vector<24x8xbf16>
    %5 = vector.extract_strided_slice %1 {offsets = [0, 64], sizes = [24, 8], strides = [1, 1]} : vector<24x96xbf16> to vector<24x8xbf16>
    %cst = arith.constant dense<0.000000e+00> : vector<24x24xf32>
    %6 = tpu.matmul %3, %4, %cst {dimension_numbers = #tpu.dot_dimension_numbers<[1], [1], [0], [0], [0, 0, 1, 0], [], []>} : vector<24x8xbf16>, vector<24x8xbf16>, vector<24x24xf32> -> vector<24x24xf32>
    %cst_2 = arith.constant 0.353553385 : f32
    %7 = vector.broadcast %cst_2 : f32 to vector<24x24xf32>
    %8 = arith.mulf %6, %7 : vector<24x24xf32>
    %c17_i32 = arith.constant 17 : i32
    %9 = vector.broadcast %c17_i32 : i32 to vector<24x24xi32>
    %10 = arith.cmpi slt, %2, %9 : vector<24x24xi32>
    %cst_3 = arith.constant -1.000000e+30 : f32
    %11 = vector.broadcast %cst_3 : f32 to vector<24x24xf32>
    %12 = arith.select %10, %8, %11 : vector<24x24xi1>, vector<24x24xf32>
    %cst_4 = arith.constant dense<0xFF800000> : vector<24xf32>
    %13 = vector.multi_reduction <maximumf>, %12, %cst_4 [1] : vector<24x24xf32> to vector<24xf32>
    %14 = vector.shape_cast %13 : vector<24xf32> to vector<24x1xf32>
    %15 = vector.broadcast %14 : vector<24x1xf32> to vector<24x24xf32>
    %16 = arith.subf %12, %15 : vector<24x24xf32>
    %17 = math.exp %16 : vector<24x24xf32>
    %cst_5 = arith.constant dense<0.000000e+00> : vector<24xf32>
    %18 = vector.multi_reduction <add>, %17, %cst_5 [1] : vector<24x24xf32> to vector<24xf32>
    %19 = vector.shape_cast %18 : vector<24xf32> to vector<24x1xf32>
    %20 = tpu.reciprocal %19 {approx = true} : vector<24x1xf32> -> vector<24x1xf32>
    %21 = vector.broadcast %20 : vector<24x1xf32> to vector<24x24xf32>
    %22 = arith.mulf %17, %21 : vector<24x24xf32>
    %23 = arith.truncf %22 : vector<24x24xf32> to vector<24x24xbf16>
    %cst_6 = arith.constant dense<0.000000e+00> : vector<24x8xf32>
    %24 = tpu.matmul %23, %5, %cst_6 {dimension_numbers = #tpu.dot_dimension_numbers<[1], [0], [0], [1], [0, 0, 1, 1], [], []>} : vector<24x24xbf16>, vector<24x8xbf16>, vector<24x8xf32> -> vector<24x8xf32>
    %25 = vector.extract_strided_slice %1 {offsets = [0, 8], sizes = [24, 8], strides = [1, 1]} : vector<24x96xbf16> to vector<24x8xbf16>
    %26 = vector.extract_strided_slice %1 {offsets = [0, 40], sizes = [24, 8], strides = [1, 1]} : vector<24x96xbf16> to vector<24x8xbf16>
    %27 = vector.extract_strided_slice %1 {offsets = [0, 72], sizes = [24, 8], strides = [1, 1]} : vector<24x96xbf16> to vector<24x8xbf16>
    %cst_7 = arith.constant dense<0.000000e+00> : vector<24x24xf32>
    %28 = tpu.matmul %25, %26, %cst_7 {dimension_numbers = #tpu.dot_dimension_numbers<[1], [1], [0], [0], [0, 0, 1, 0], [], []>} : vector<24x8xbf16>, vector<24x8xbf16>, vector<24x24xf32> -> vector<24x24xf32>
    %cst_8 = arith.constant 0.353553385 : f32
    %29 = vector.broadcast %cst_8 : f32 to vector<24x24xf32>
    %30 = arith.mulf %28, %29 : vector<24x24xf32>
    %c17_i32_9 = arith.constant 17 : i32
    %31 = vector.broadcast %c17_i32_9 : i32 to vector<24x24xi32>
    %32 = arith.cmpi slt, %2, %31 : vector<24x24xi32>
    %cst_10 = arith.constant -1.000000e+30 : f32
    %33 = vector.broadcast %cst_10 : f32 to vector<24x24xf32>
    %34 = arith.select %32, %30, %33 : vector<24x24xi1>, vector<24x24xf32>
    %cst_11 = arith.constant dense<0xFF800000> : vector<24xf32>
    %35 = vector.multi_reduction <maximumf>, %34, %cst_11 [1] : vector<24x24xf32> to vector<24xf32>
    %36 = vector.shape_cast %35 : vector<24xf32> to vector<24x1xf32>
    %37 = vector.broadcast %36 : vector<24x1xf32> to vector<24x24xf32>
    %38 = arith.subf %34, %37 : vector<24x24xf32>
    %39 = math.exp %38 : vector<24x24xf32>
    %cst_12 = arith.constant dense<0.000000e+00> : vector<24xf32>
    %40 = vector.multi_reduction <add>, %39, %cst_12 [1] : vector<24x24xf32> to vector<24xf32>
    %41 = vector.shape_cast %40 : vector<24xf32> to vector<24x1xf32>
    %42 = tpu.reciprocal %41 {approx = true} : vector<24x1xf32> -> vector<24x1xf32>
    %43 = vector.broadcast %42 : vector<24x1xf32> to vector<24x24xf32>
    %44 = arith.mulf %39, %43 : vector<24x24xf32>
    %45 = arith.truncf %44 : vector<24x24xf32> to vector<24x24xbf16>
    %cst_13 = arith.constant dense<0.000000e+00> : vector<24x8xf32>
    %46 = tpu.matmul %45, %27, %cst_13 {dimension_numbers = #tpu.dot_dimension_numbers<[1], [0], [0], [1], [0, 0, 1, 1], [], []>} : vector<24x24xbf16>, vector<24x8xbf16>, vector<24x8xf32> -> vector<24x8xf32>
    %47 = vector.extract_strided_slice %1 {offsets = [0, 16], sizes = [24, 8], strides = [1, 1]} : vector<24x96xbf16> to vector<24x8xbf16>
    %48 = vector.extract_strided_slice %1 {offsets = [0, 48], sizes = [24, 8], strides = [1, 1]} : vector<24x96xbf16> to vector<24x8xbf16>
    %49 = vector.extract_strided_slice %1 {offsets = [0, 80], sizes = [24, 8], strides = [1, 1]} : vector<24x96xbf16> to vector<24x8xbf16>
    %cst_14 = arith.constant dense<0.000000e+00> : vector<24x24xf32>
    %50 = tpu.matmul %47, %48, %cst_14 {dimension_numbers = #tpu.dot_dimension_numbers<[1], [1], [0], [0], [0, 0, 1, 0], [], []>} : vector<24x8xbf16>, vector<24x8xbf16>, vector<24x24xf32> -> vector<24x24xf32>
    %cst_15 = arith.constant 0.353553385 : f32
    %51 = vector.broadcast %cst_15 : f32 to vector<24x24xf32>
    %52 = arith.mulf %50, %51 : vector<24x24xf32>
    %c17_i32_16 = arith.constant 17 : i32
    %53 = vector.broadcast %c17_i32_16 : i32 to vector<24x24xi32>
    %54 = arith.cmpi slt, %2, %53 : vector<24x24xi32>
    %cst_17 = arith.constant -1.000000e+30 : f32
    %55 = vector.broadcast %cst_17 : f32 to vector<24x24xf32>
    %56 = arith.select %54, %52, %55 : vector<24x24xi1>, vector<24x24xf32>
    %cst_18 = arith.constant dense<0xFF800000> : vector<24xf32>
    %57 = vector.multi_reduction <maximumf>, %56, %cst_18 [1] : vector<24x24xf32> to vector<24xf32>
    %58 = vector.shape_cast %57 : vector<24xf32> to vector<24x1xf32>
    %59 = vector.broadcast %58 : vector<24x1xf32> to vector<24x24xf32>
    %60 = arith.subf %56, %59 : vector<24x24xf32>
    %61 = math.exp %60 : vector<24x24xf32>
    %cst_19 = arith.constant dense<0.000000e+00> : vector<24xf32>
    %62 = vector.multi_reduction <add>, %61, %cst_19 [1] : vector<24x24xf32> to vector<24xf32>
    %63 = vector.shape_cast %62 : vector<24xf32> to vector<24x1xf32>
    %64 = tpu.reciprocal %63 {approx = true} : vector<24x1xf32> -> vector<24x1xf32>
    %65 = vector.broadcast %64 : vector<24x1xf32> to vector<24x24xf32>
    %66 = arith.mulf %61, %65 : vector<24x24xf32>
    %67 = arith.truncf %66 : vector<24x24xf32> to vector<24x24xbf16>
    %cst_20 = arith.constant dense<0.000000e+00> : vector<24x8xf32>
    %68 = tpu.matmul %67, %49, %cst_20 {dimension_numbers = #tpu.dot_dimension_numbers<[1], [0], [0], [1], [0, 0, 1, 1], [], []>} : vector<24x24xbf16>, vector<24x8xbf16>, vector<24x8xf32> -> vector<24x8xf32>
    %69 = vector.extract_strided_slice %1 {offsets = [0, 24], sizes = [24, 8], strides = [1, 1]} : vector<24x96xbf16> to vector<24x8xbf16>
    %70 = vector.extract_strided_slice %1 {offsets = [0, 56], sizes = [24, 8], strides = [1, 1]} : vector<24x96xbf16> to vector<24x8xbf16>
    %71 = vector.extract_strided_slice %1 {offsets = [0, 88], sizes = [24, 8], strides = [1, 1]} : vector<24x96xbf16> to vector<24x8xbf16>
    %cst_21 = arith.constant dense<0.000000e+00> : vector<24x24xf32>
    %72 = tpu.matmul %69, %70, %cst_21 {dimension_numbers = #tpu.dot_dimension_numbers<[1], [1], [0], [0], [0, 0, 1, 0], [], []>} : vector<24x8xbf16>, vector<24x8xbf16>, vector<24x24xf32> -> vector<24x24xf32>
    %cst_22 = arith.constant 0.353553385 : f32
    %73 = vector.broadcast %cst_22 : f32 to vector<24x24xf32>
    %74 = arith.mulf %72, %73 : vector<24x24xf32>
    %c17_i32_23 = arith.constant 17 : i32
    %75 = vector.broadcast %c17_i32_23 : i32 to vector<24x24xi32>
    %76 = arith.cmpi slt, %2, %75 : vector<24x24xi32>
    %cst_24 = arith.constant -1.000000e+30 : f32
    %77 = vector.broadcast %cst_24 : f32 to vector<24x24xf32>
    %78 = arith.select %76, %74, %77 : vector<24x24xi1>, vector<24x24xf32>
    %cst_25 = arith.constant dense<0xFF800000> : vector<24xf32>
    %79 = vector.multi_reduction <maximumf>, %78, %cst_25 [1] : vector<24x24xf32> to vector<24xf32>
    %80 = vector.shape_cast %79 : vector<24xf32> to vector<24x1xf32>
    %81 = vector.broadcast %80 : vector<24x1xf32> to vector<24x24xf32>
    %82 = arith.subf %78, %81 : vector<24x24xf32>
    %83 = math.exp %82 : vector<24x24xf32>
    %cst_26 = arith.constant dense<0.000000e+00> : vector<24xf32>
    %84 = vector.multi_reduction <add>, %83, %cst_26 [1] : vector<24x24xf32> to vector<24xf32>
    %85 = vector.shape_cast %84 : vector<24xf32> to vector<24x1xf32>
    %86 = tpu.reciprocal %85 {approx = true} : vector<24x1xf32> -> vector<24x1xf32>
    %87 = vector.broadcast %86 : vector<24x1xf32> to vector<24x24xf32>
    %88 = arith.mulf %83, %87 : vector<24x24xf32>
    %89 = arith.truncf %88 : vector<24x24xf32> to vector<24x24xbf16>
    %cst_27 = arith.constant dense<0.000000e+00> : vector<24x8xf32>
    %90 = tpu.matmul %89, %71, %cst_27 {dimension_numbers = #tpu.dot_dimension_numbers<[1], [0], [0], [1], [0, 0, 1, 1], [], []>} : vector<24x24xbf16>, vector<24x8xbf16>, vector<24x8xf32> -> vector<24x8xf32>
    %91 = tpu.concatenate %24, %46, %68, %90 in 1 : vector<24x8xf32>, vector<24x8xf32>, vector<24x8xf32>, vector<24x8xf32> -> vector<24x32xf32>
    %92 = arith.truncf %91 : vector<24x32xf32> to vector<24x32xbf16>
    %c0_28 = arith.constant 0 : index
    %c0_29 = arith.constant 0 : index
    %c0_30 = arith.constant 0 : index
    %93 = vector.load %arg2[%c0_28, %c0_29, %c0_30] : memref<1x24x32xbf16, #tpu.memory_space<vmem>>, vector<1x24x32xbf16>
    %94 = vector.shape_cast %93 : vector<1x24x32xbf16> to vector<24x32xbf16>
    %95 = vector.shape_cast %92 : vector<24x32xbf16> to vector<1x24x32xbf16>
    tpu.vector_store %arg2[%c0_28, %c0_29, %c0_30], %95 {strides = array<i32>} : memref<1x24x32xbf16, #tpu.memory_space<vmem>>, vector<1x24x32xbf16>,
    return
  }
  func.func @transform_0(%arg0: i32) -> (i32, i32, i32) {
    %c0_i32 = arith.constant 0 : i32
    %c0_i32_0 = arith.constant 0 : i32
    %c0_i32_1 = arith.constant 0 : i32
    return %arg0, %c0_i32, %c0_i32_0 : i32, i32, i32
  }
  func.func @transform_1(%arg0: i32) -> (i32, i32, i32) {
    %c0_i32 = arith.constant 0 : i32
    %c0_i32_0 = arith.constant 0 : i32
    %c0_i32_1 = arith.constant 0 : i32
    return %arg0, %c0_i32, %c0_i32_0 : i32, i32, i32
  }
}

module attributes {stable_mosaic.version = 11 : i64} {
  func.func @_ln_linear_kernel(%arg0: i32, %arg1: i32, %arg2: memref<48x32xbf16, #tpu.memory_space<vmem>>, %arg3: memref<1x32xf32, #tpu.memory_space<vmem>>, %arg4: memref<1x32xf32, #tpu.memory_space<vmem>>, %arg5: memref<32x128xbf16, #tpu.memory_space<vmem>>, %arg6: memref<1x128xf32, #tpu.memory_space<vmem>>, %arg7: memref<48x128xbf16, #tpu.memory_space<vmem>>, %arg8: memref<48x32xbf16, #tpu.memory_space<vmem>>) attributes {dimension_semantics = [#tpu.dimension_semantics<parallel>, #tpu.dimension_semantics<arbitrary>], iteration_bounds = array<i64: 1, 1>, scalar_prefetch = 0 : i64, scratch_operands = 1 : i64, tpu.core_type = #tpu.core_type<tc>, window_params = [{transform_indices = @transform_0, window_bounds = array<i64: 48, 32>}, {pipeline_mode = #tpu.pipeline_mode<synchronous>, transform_indices = @transform_1, window_bounds = array<i64: 1, 32>}, {pipeline_mode = #tpu.pipeline_mode<synchronous>, transform_indices = @transform_2, window_bounds = array<i64: 1, 32>}, {transform_indices = @transform_3, window_bounds = array<i64: 32, 128>}, {transform_indices = @transform_4, window_bounds = array<i64: 1, 128>}, {transform_indices = @transform_5, window_bounds = array<i64: 48, 128>}]} {
    %c0_i32 = arith.constant 0 : i32
    %0 = arith.cmpi eq, %arg1, %c0_i32 : i32
    %1 = arith.extui %0 : i1 to i32
    %c0_i32_0 = arith.constant 0 : i32
    %2 = arith.cmpi ne, %1, %c0_i32_0 : i32
    scf.if %2 {
      %c0_24 = arith.constant 0 : index
      %c0_25 = arith.constant 0 : index
      %52 = vector.load %arg2[%c0_24, %c0_25] : memref<48x32xbf16, #tpu.memory_space<vmem>>, vector<48x32xbf16>
      %53 = arith.extf %52 : vector<48x32xbf16> to vector<48x32xf32>
      %cst_26 = arith.constant dense<0.000000e+00> : vector<48xf32>
      %54 = vector.multi_reduction <add>, %53, %cst_26 [1] : vector<48x32xf32> to vector<48xf32>
      %55 = vector.shape_cast %54 : vector<48xf32> to vector<48x1xf32>
      %cst_27 = arith.constant 3.200000e+01 : f32
      %56 = vector.broadcast %cst_27 : f32 to vector<48x1xf32>
      %57 = arith.divf %55, %56 : vector<48x1xf32>
      %58 = vector.broadcast %57 : vector<48x1xf32> to vector<48x32xf32>
      %59 = arith.subf %53, %58 : vector<48x32xf32>
      %60 = arith.mulf %59, %59 : vector<48x32xf32>
      %cst_28 = arith.constant dense<0.000000e+00> : vector<48xf32>
      %61 = vector.multi_reduction <add>, %60, %cst_28 [1] : vector<48x32xf32> to vector<48xf32>
      %62 = vector.shape_cast %61 : vector<48xf32> to vector<48x1xf32>
      %cst_29 = arith.constant 3.200000e+01 : f32
      %63 = vector.broadcast %cst_29 : f32 to vector<48x1xf32>
      %64 = arith.divf %62, %63 : vector<48x1xf32>
      %cst_30 = arith.constant 9.99999997E-7 : f32
      %65 = vector.broadcast %cst_30 : f32 to vector<48x1xf32>
      %66 = arith.addf %64, %65 : vector<48x1xf32>
      %67 = math.rsqrt %66 : vector<48x1xf32>
      %68 = vector.broadcast %67 : vector<48x1xf32> to vector<48x32xf32>
      %69 = arith.mulf %59, %68 : vector<48x32xf32>
      %c0_31 = arith.constant 0 : index
      %c0_32 = arith.constant 0 : index
      %70 = vector.load %arg3[%c0_31, %c0_32] : memref<1x32xf32, #tpu.memory_space<vmem>>, vector<1x32xf32>
      %71 = vector.broadcast %70 : vector<1x32xf32> to vector<48x32xf32>
      %72 = arith.mulf %69, %71 : vector<48x32xf32>
      %c0_33 = arith.constant 0 : index
      %c0_34 = arith.constant 0 : index
      %73 = vector.load %arg4[%c0_33, %c0_34] : memref<1x32xf32, #tpu.memory_space<vmem>>, vector<1x32xf32>
      %74 = vector.broadcast %73 : vector<1x32xf32> to vector<48x32xf32>
      %75 = arith.addf %72, %74 : vector<48x32xf32>
      %76 = arith.truncf %75 : vector<48x32xf32> to vector<48x32xbf16>
      %c0_35 = arith.constant 0 : index
      %c0_36 = arith.constant 0 : index
      %77 = vector.load %arg8[%c0_35, %c0_36] : memref<48x32xbf16, #tpu.memory_space<vmem>>, vector<48x32xbf16>
      tpu.vector_store %arg8[%c0_35, %c0_36], %76 {strides = array<i32>} : memref<48x32xbf16, #tpu.memory_space<vmem>>, vector<48x32xbf16>,
    } else {
    }
    %c0 = arith.constant 0 : index
    %c0_1 = arith.constant 0 : index
    %3 = vector.load %arg8[%c0, %c0_1] : memref<48x32xbf16, #tpu.memory_space<vmem>>, vector<48x32xbf16>
    %c0_2 = arith.constant 0 : index
    %c0_3 = arith.constant 0 : index
    %4 = vector.load %arg5[%c0_2, %c0_3] : memref<32x128xbf16, #tpu.memory_space<vmem>>, vector<32x128xbf16>
    %cst = arith.constant dense<0.000000e+00> : vector<48x128xf32>
    %5 = tpu.matmul %3, %4, %cst {dimension_numbers = #tpu.dot_dimension_numbers<[1], [0], [0], [1], [0, 0, 1, 1], [], []>} : vector<48x32xbf16>, vector<32x128xbf16>, vector<48x128xf32> -> vector<48x128xf32>
    %c0_4 = arith.constant 0 : index
    %c0_5 = arith.constant 0 : index
    %6 = vector.load %arg6[%c0_4, %c0_5] : memref<1x128xf32, #tpu.memory_space<vmem>>, vector<1x128xf32>
    %7 = vector.broadcast %6 : vector<1x128xf32> to vector<48x128xf32>
    %8 = arith.addf %5, %7 : vector<48x128xf32>
    %cst_6 = arith.constant 5.000000e-01 : f32
    %9 = vector.broadcast %cst_6 : f32 to vector<48x128xf32>
    %10 = arith.mulf %9, %8 : vector<48x128xf32>
    %cst_7 = arith.constant 0.707106769 : f32
    %11 = vector.broadcast %cst_7 : f32 to vector<48x128xf32>
    %12 = arith.mulf %8, %11 : vector<48x128xf32>
    %cst_8 = arith.constant 0.000000e+00 : f32
    %13 = vector.broadcast %cst_8 : f32 to vector<48x128xf32>
    %14 = arith.cmpf oge, %12, %13 : vector<48x128xf32>
    %cst_9 = arith.constant 1.000000e+00 : f32
    %cst_10 = arith.constant -1.000000e+00 : f32
    %15 = vector.broadcast %cst_9 : f32 to vector<48x128xf32>
    %16 = vector.broadcast %cst_10 : f32 to vector<48x128xf32>
    %17 = arith.select %14, %15, %16 : vector<48x128xi1>, vector<48x128xf32>
    %18 = math.absf %12 : vector<48x128xf32>
    %cst_11 = arith.constant 0.327591091 : f32
    %19 = vector.broadcast %cst_11 : f32 to vector<48x128xf32>
    %20 = arith.mulf %19, %18 : vector<48x128xf32>
    %cst_12 = arith.constant 1.000000e+00 : f32
    %21 = vector.broadcast %cst_12 : f32 to vector<48x128xf32>
    %22 = arith.addf %21, %20 : vector<48x128xf32>
    %cst_13 = arith.constant 1.000000e+00 : f32
    %23 = vector.broadcast %cst_13 : f32 to vector<48x128xf32>
    %24 = arith.divf %23, %22 : vector<48x128xf32>
    %cst_14 = arith.constant 1.06140542 : f32
    %25 = vector.broadcast %cst_14 : f32 to vector<48x128xf32>
    %26 = arith.mulf %25, %24 : vector<48x128xf32>
    %cst_15 = arith.constant -1.45315206 : f32
    %27 = vector.broadcast %cst_15 : f32 to vector<48x128xf32>
    %28 = arith.addf %26, %27 : vector<48x128xf32>
    %29 = arith.mulf %28, %24 : vector<48x128xf32>
    %cst_16 = arith.constant 1.42141378 : f32
    %30 = vector.broadcast %cst_16 : f32 to vector<48x128xf32>
    %31 = arith.addf %29, %30 : vector<48x128xf32>
    %32 = arith.mulf %31, %24 : vector<48x128xf32>
    %cst_17 = arith.constant -0.284496725 : f32
    %33 = vector.broadcast %cst_17 : f32 to vector<48x128xf32>
    %34 = arith.addf %32, %33 : vector<48x128xf32>
    %35 = arith.mulf %34, %24 : vector<48x128xf32>
    %cst_18 = arith.constant 0.254829586 : f32
    %36 = vector.broadcast %cst_18 : f32 to vector<48x128xf32>
    %37 = arith.addf %35, %36 : vector<48x128xf32>
    %38 = arith.mulf %37, %24 : vector<48x128xf32>
    %cst_19 = arith.constant 0.000000e+00 : f32
    %39 = vector.broadcast %cst_19 : f32 to vector<48x128xf32>
    %40 = arith.subf %39, %18 : vector<48x128xf32>
    %41 = arith.mulf %40, %18 : vector<48x128xf32>
    %42 = math.exp %41 : vector<48x128xf32>
    %43 = arith.mulf %38, %42 : vector<48x128xf32>
    %cst_20 = arith.constant 1.000000e+00 : f32
    %44 = vector.broadcast %cst_20 : f32 to vector<48x128xf32>
    %45 = arith.subf %44, %43 : vector<48x128xf32>
    %46 = arith.mulf %17, %45 : vector<48x128xf32>
    %cst_21 = arith.constant 1.000000e+00 : f32
    %47 = vector.broadcast %cst_21 : f32 to vector<48x128xf32>
    %48 = arith.addf %47, %46 : vector<48x128xf32>
    %49 = arith.mulf %10, %48 : vector<48x128xf32>
    %50 = arith.truncf %49 : vector<48x128xf32> to vector<48x128xbf16>
    %c0_22 = arith.constant 0 : index
    %c0_23 = arith.constant 0 : index
    %51 = vector.load %arg7[%c0_22, %c0_23] : memref<48x128xbf16, #tpu.memory_space<vmem>>, vector<48x128xbf16>
    tpu.vector_store %arg7[%c0_22, %c0_23], %50 {strides = array<i32>} : memref<48x128xbf16, #tpu.memory_space<vmem>>, vector<48x128xbf16>,
    return
  }
  func.func @transform_0(%arg0: i32, %arg1: i32) -> (i32, i32) {
    %c0_i32 = arith.constant 0 : i32
    %c0_i32_0 = arith.constant 0 : i32
    return %arg0, %c0_i32 : i32, i32
  }
  func.func @transform_1(%arg0: i32, %arg1: i32) -> (i32, i32) {
    %c0_i32 = arith.constant 0 : i32
    %c0_i32_0 = arith.constant 0 : i32
    %c0_i32_1 = arith.constant 0 : i32
    return %c0_i32, %c0_i32_0 : i32, i32
  }
  func.func @transform_2(%arg0: i32, %arg1: i32) -> (i32, i32) {
    %c0_i32 = arith.constant 0 : i32
    %c0_i32_0 = arith.constant 0 : i32
    %c0_i32_1 = arith.constant 0 : i32
    return %c0_i32, %c0_i32_0 : i32, i32
  }
  func.func @transform_3(%arg0: i32, %arg1: i32) -> (i32, i32) {
    %c0_i32 = arith.constant 0 : i32
    %c0_i32_0 = arith.constant 0 : i32
    return %c0_i32, %arg1 : i32, i32
  }
  func.func @transform_4(%arg0: i32, %arg1: i32) -> (i32, i32) {
    %c0_i32 = arith.constant 0 : i32
    %c0_i32_0 = arith.constant 0 : i32
    return %c0_i32, %arg1 : i32, i32
  }
  func.func @transform_5(%arg0: i32, %arg1: i32) -> (i32, i32) {
    %c0_i32 = arith.constant 0 : i32
    return %arg0, %arg1 : i32, i32
  }
}

module attributes {stable_mosaic.version = 11 : i64} {
  func.func @_linear_kernel(%arg0: i32, %arg1: i32, %arg2: i32, %arg3: memref<48x128xbf16, #tpu.memory_space<vmem>>, %arg4: memref<128x32xbf16, #tpu.memory_space<vmem>>, %arg5: memref<1x32xf32, #tpu.memory_space<vmem>>, %arg6: memref<48x32xbf16, #tpu.memory_space<vmem>>, %arg7: memref<48x32xbf16, #tpu.memory_space<vmem>>, %arg8: memref<48x32xf32, #tpu.memory_space<vmem>>) attributes {dimension_semantics = [#tpu.dimension_semantics<parallel>, #tpu.dimension_semantics<parallel>, #tpu.dimension_semantics<arbitrary>], iteration_bounds = array<i64: 1, 1, 1>, scalar_prefetch = 0 : i64, scratch_operands = 1 : i64, tpu.core_type = #tpu.core_type<tc>, window_params = [{transform_indices = @transform_0, window_bounds = array<i64: 48, 128>}, {transform_indices = @transform_1, window_bounds = array<i64: 128, 32>}, {transform_indices = @transform_2, window_bounds = array<i64: 1, 32>}, {transform_indices = @transform_3, window_bounds = array<i64: 48, 32>}, {transform_indices = @transform_4, window_bounds = array<i64: 48, 32>}]} {
    %c0_i32 = arith.constant 0 : i32
    %0 = arith.cmpi eq, %arg2, %c0_i32 : i32
    %1 = arith.extui %0 : i1 to i32
    %c0_i32_0 = arith.constant 0 : i32
    %2 = arith.cmpi ne, %1, %c0_i32_0 : i32
    scf.if %2 {
      %cst_10 = arith.constant 0.000000e+00 : f32
      %12 = vector.broadcast %cst_10 : f32 to vector<48x32xf32>
      %c0_11 = arith.constant 0 : index
      %c0_12 = arith.constant 0 : index
      %13 = vector.load %arg8[%c0_11, %c0_12] : memref<48x32xf32, #tpu.memory_space<vmem>>, vector<48x32xf32>
      tpu.vector_store %arg8[%c0_11, %c0_12], %12 {strides = array<i32>} : memref<48x32xf32, #tpu.memory_space<vmem>>, vector<48x32xf32>,
    } else {
    }
    %c0 = arith.constant 0 : index
    %c0_1 = arith.constant 0 : index
    %3 = vector.load %arg8[%c0, %c0_1] : memref<48x32xf32, #tpu.memory_space<vmem>>, vector<48x32xf32>
    %c0_2 = arith.constant 0 : index
    %c0_3 = arith.constant 0 : index
    %4 = vector.load %arg3[%c0_2, %c0_3] : memref<48x128xbf16, #tpu.memory_space<vmem>>, vector<48x128xbf16>
    %c0_4 = arith.constant 0 : index
    %c0_5 = arith.constant 0 : index
    %5 = vector.load %arg4[%c0_4, %c0_5] : memref<128x32xbf16, #tpu.memory_space<vmem>>, vector<128x32xbf16>
    %cst = arith.constant dense<0.000000e+00> : vector<48x32xf32>
    %6 = tpu.matmul %4, %5, %cst {dimension_numbers = #tpu.dot_dimension_numbers<[1], [0], [0], [1], [0, 0, 1, 1], [], []>} : vector<48x128xbf16>, vector<128x32xbf16>, vector<48x32xf32> -> vector<48x32xf32>
    %7 = arith.addf %3, %6 : vector<48x32xf32>
    %c0_6 = arith.constant 0 : index
    %c0_7 = arith.constant 0 : index
    %8 = vector.load %arg8[%c0_6, %c0_7] : memref<48x32xf32, #tpu.memory_space<vmem>>, vector<48x32xf32>
    tpu.vector_store %arg8[%c0_6, %c0_7], %7 {strides = array<i32>} : memref<48x32xf32, #tpu.memory_space<vmem>>, vector<48x32xf32>,
    %c0_i32_8 = arith.constant 0 : i32
    %9 = arith.cmpi eq, %arg2, %c0_i32_8 : i32
    %10 = arith.extui %9 : i1 to i32
    %c0_i32_9 = arith.constant 0 : i32
    %11 = arith.cmpi ne, %10, %c0_i32_9 : i32
    scf.if %11 {
      %c0_10 = arith.constant 0 : index
      %c0_11 = arith.constant 0 : index
      %12 = vector.load %arg8[%c0_10, %c0_11] : memref<48x32xf32, #tpu.memory_space<vmem>>, vector<48x32xf32>
      %c0_12 = arith.constant 0 : index
      %c0_13 = arith.constant 0 : index
      %13 = vector.load %arg5[%c0_12, %c0_13] : memref<1x32xf32, #tpu.memory_space<vmem>>, vector<1x32xf32>
      %14 = vector.broadcast %13 : vector<1x32xf32> to vector<48x32xf32>
      %15 = arith.addf %12, %14 : vector<48x32xf32>
      %c0_14 = arith.constant 0 : index
      %c0_15 = arith.constant 0 : index
      %16 = vector.load %arg6[%c0_14, %c0_15] : memref<48x32xbf16, #tpu.memory_space<vmem>>, vector<48x32xbf16>
      %17 = arith.extf %16 : vector<48x32xbf16> to vector<48x32xf32>
      %18 = arith.addf %15, %17 : vector<48x32xf32>
      %19 = arith.truncf %18 : vector<48x32xf32> to vector<48x32xbf16>
      %c0_16 = arith.constant 0 : index
      %c0_17 = arith.constant 0 : index
      %20 = vector.load %arg7[%c0_16, %c0_17] : memref<48x32xbf16, #tpu.memory_space<vmem>>, vector<48x32xbf16>
      tpu.vector_store %arg7[%c0_16, %c0_17], %19 {strides = array<i32>} : memref<48x32xbf16, #tpu.memory_space<vmem>>, vector<48x32xbf16>,
    } else {
    }
    return
  }
  func.func @transform_0(%arg0: i32, %arg1: i32, %arg2: i32) -> (i32, i32) {
    %c0_i32 = arith.constant 0 : i32
    return %arg0, %arg2 : i32, i32
  }
  func.func @transform_1(%arg0: i32, %arg1: i32, %arg2: i32) -> (i32, i32) {
    %c0_i32 = arith.constant 0 : i32
    return %arg2, %arg1 : i32, i32
  }
  func.func @transform_2(%arg0: i32, %arg1: i32, %arg2: i32) -> (i32, i32) {
    %c0_i32 = arith.constant 0 : i32
    %c0_i32_0 = arith.constant 0 : i32
    return %c0_i32, %arg1 : i32, i32
  }
  func.func @transform_3(%arg0: i32, %arg1: i32, %arg2: i32) -> (i32, i32) {
    %c0_i32 = arith.constant 0 : i32
    return %arg0, %arg1 : i32, i32
  }
  func.func @transform_4(%arg0: i32, %arg1: i32, %arg2: i32) -> (i32, i32) {
    %c0_i32 = arith.constant 0 : i32
    return %arg0, %arg1 : i32, i32
  }
}

module attributes {stable_mosaic.version = 11 : i64} {
  func.func @_ln_linear_kernel(%arg0: i32, %arg1: i32, %arg2: memref<2x32xbf16, #tpu.memory_space<vmem>>, %arg3: memref<1x32xf32, #tpu.memory_space<vmem>>, %arg4: memref<1x32xf32, #tpu.memory_space<vmem>>, %arg5: memref<32x128xbf16, #tpu.memory_space<vmem>>, %arg6: memref<1x128xf32, #tpu.memory_space<vmem>>, %arg7: memref<2x128xf32, #tpu.memory_space<vmem>>, %arg8: memref<2x32xbf16, #tpu.memory_space<vmem>>) attributes {dimension_semantics = [#tpu.dimension_semantics<parallel>, #tpu.dimension_semantics<arbitrary>], iteration_bounds = array<i64: 1, 1>, scalar_prefetch = 0 : i64, scratch_operands = 1 : i64, tpu.core_type = #tpu.core_type<tc>, window_params = [{transform_indices = @transform_0, window_bounds = array<i64: 2, 32>}, {pipeline_mode = #tpu.pipeline_mode<synchronous>, transform_indices = @transform_1, window_bounds = array<i64: 1, 32>}, {pipeline_mode = #tpu.pipeline_mode<synchronous>, transform_indices = @transform_2, window_bounds = array<i64: 1, 32>}, {transform_indices = @transform_3, window_bounds = array<i64: 32, 128>}, {transform_indices = @transform_4, window_bounds = array<i64: 1, 128>}, {transform_indices = @transform_5, window_bounds = array<i64: 2, 128>}]} {
    %c0_i32 = arith.constant 0 : i32
    %0 = arith.cmpi eq, %arg1, %c0_i32 : i32
    %1 = arith.extui %0 : i1 to i32
    %c0_i32_0 = arith.constant 0 : i32
    %2 = arith.cmpi ne, %1, %c0_i32_0 : i32
    scf.if %2 {
      %c0_8 = arith.constant 0 : index
      %c0_9 = arith.constant 0 : index
      %10 = vector.load %arg2[%c0_8, %c0_9] : memref<2x32xbf16, #tpu.memory_space<vmem>>, vector<2x32xbf16>
      %11 = arith.extf %10 : vector<2x32xbf16> to vector<2x32xf32>
      %cst_10 = arith.constant dense<0.000000e+00> : vector<2xf32>
      %12 = vector.multi_reduction <add>, %11, %cst_10 [1] : vector<2x32xf32> to vector<2xf32>
      %13 = vector.shape_cast %12 : vector<2xf32> to vector<2x1xf32>
      %cst_11 = arith.constant 3.200000e+01 : f32
      %14 = vector.broadcast %cst_11 : f32 to vector<2x1xf32>
      %15 = arith.divf %13, %14 : vector<2x1xf32>
      %16 = vector.broadcast %15 : vector<2x1xf32> to vector<2x32xf32>
      %17 = arith.subf %11, %16 : vector<2x32xf32>
      %18 = arith.mulf %17, %17 : vector<2x32xf32>
      %cst_12 = arith.constant dense<0.000000e+00> : vector<2xf32>
      %19 = vector.multi_reduction <add>, %18, %cst_12 [1] : vector<2x32xf32> to vector<2xf32>
      %20 = vector.shape_cast %19 : vector<2xf32> to vector<2x1xf32>
      %cst_13 = arith.constant 3.200000e+01 : f32
      %21 = vector.broadcast %cst_13 : f32 to vector<2x1xf32>
      %22 = arith.divf %20, %21 : vector<2x1xf32>
      %cst_14 = arith.constant 9.99999997E-7 : f32
      %23 = vector.broadcast %cst_14 : f32 to vector<2x1xf32>
      %24 = arith.addf %22, %23 : vector<2x1xf32>
      %25 = math.rsqrt %24 : vector<2x1xf32>
      %26 = vector.broadcast %25 : vector<2x1xf32> to vector<2x32xf32>
      %27 = arith.mulf %17, %26 : vector<2x32xf32>
      %c0_15 = arith.constant 0 : index
      %c0_16 = arith.constant 0 : index
      %28 = vector.load %arg3[%c0_15, %c0_16] : memref<1x32xf32, #tpu.memory_space<vmem>>, vector<1x32xf32>
      %29 = vector.broadcast %28 : vector<1x32xf32> to vector<2x32xf32>
      %30 = arith.mulf %27, %29 : vector<2x32xf32>
      %c0_17 = arith.constant 0 : index
      %c0_18 = arith.constant 0 : index
      %31 = vector.load %arg4[%c0_17, %c0_18] : memref<1x32xf32, #tpu.memory_space<vmem>>, vector<1x32xf32>
      %32 = vector.broadcast %31 : vector<1x32xf32> to vector<2x32xf32>
      %33 = arith.addf %30, %32 : vector<2x32xf32>
      %34 = arith.truncf %33 : vector<2x32xf32> to vector<2x32xbf16>
      %c0_19 = arith.constant 0 : index
      %c0_20 = arith.constant 0 : index
      %35 = vector.load %arg8[%c0_19, %c0_20] : memref<2x32xbf16, #tpu.memory_space<vmem>>, vector<2x32xbf16>
      tpu.vector_store %arg8[%c0_19, %c0_20], %34 {strides = array<i32>} : memref<2x32xbf16, #tpu.memory_space<vmem>>, vector<2x32xbf16>,
    } else {
    }
    %c0 = arith.constant 0 : index
    %c0_1 = arith.constant 0 : index
    %3 = vector.load %arg8[%c0, %c0_1] : memref<2x32xbf16, #tpu.memory_space<vmem>>, vector<2x32xbf16>
    %c0_2 = arith.constant 0 : index
    %c0_3 = arith.constant 0 : index
    %4 = vector.load %arg5[%c0_2, %c0_3] : memref<32x128xbf16, #tpu.memory_space<vmem>>, vector<32x128xbf16>
    %cst = arith.constant dense<0.000000e+00> : vector<2x128xf32>
    %5 = tpu.matmul %3, %4, %cst {dimension_numbers = #tpu.dot_dimension_numbers<[1], [0], [0], [1], [0, 0, 1, 1], [], []>} : vector<2x32xbf16>, vector<32x128xbf16>, vector<2x128xf32> -> vector<2x128xf32>
    %c0_4 = arith.constant 0 : index
    %c0_5 = arith.constant 0 : index
    %6 = vector.load %arg6[%c0_4, %c0_5] : memref<1x128xf32, #tpu.memory_space<vmem>>, vector<1x128xf32>
    %7 = vector.broadcast %6 : vector<1x128xf32> to vector<2x128xf32>
    %8 = arith.addf %5, %7 : vector<2x128xf32>
    %c0_6 = arith.constant 0 : index
    %c0_7 = arith.constant 0 : index
    %9 = vector.load %arg7[%c0_6, %c0_7] : memref<2x128xf32, #tpu.memory_space<vmem>>, vector<2x128xf32>
    tpu.vector_store %arg7[%c0_6, %c0_7], %8 {strides = array<i32>} : memref<2x128xf32, #tpu.memory_space<vmem>>, vector<2x128xf32>,
    return
  }
  func.func @transform_0(%arg0: i32, %arg1: i32) -> (i32, i32) {
    %c0_i32 = arith.constant 0 : i32
    %c0_i32_0 = arith.constant 0 : i32
    return %arg0, %c0_i32 : i32, i32
  }
  func.func @transform_1(%arg0: i32, %arg1: i32) -> (i32, i32) {
    %c0_i32 = arith.constant 0 : i32
    %c0_i32_0 = arith.constant 0 : i32
    %c0_i32_1 = arith.constant 0 : i32
    return %c0_i32, %c0_i32_0 : i32, i32
  }
  func.func @transform_2(%arg0: i32, %arg1: i32) -> (i32, i32) {
    %c0_i32 = arith.constant 0 : i32
    %c0_i32_0 = arith.constant 0 : i32
    %c0_i32_1 = arith.constant 0 : i32
    return %c0_i32, %c0_i32_0 : i32, i32
  }
  func.func @transform_3(%arg0: i32, %arg1: i32) -> (i32, i32) {
    %c0_i32 = arith.constant 0 : i32
    %c0_i32_0 = arith.constant 0 : i32
    return %c0_i32, %arg1 : i32, i32
  }
  func.func @transform_4(%arg0: i32, %arg1: i32) -> (i32, i32) {
    %c0_i32 = arith.constant 0 : i32
    %c0_i32_0 = arith.constant 0 : i32
    return %c0_i32, %arg1 : i32, i32
  }
  func.func @transform_5(%arg0: i32, %arg1: i32) -> (i32, i32) {
    %c0_i32 = arith.constant 0 : i32
    return %arg0, %arg1 : i32, i32
  }
}

</mosaic_0001>

<llo_original>
// kernel: forward.15
$region0: #{forward.15}
  #allocation0 [shape = 'u32[]', space=smem, size = 0x4, offset = 0x4, fixed_abs, tag = 'smem constant byte address 0x4 - core index']
  #allocation1 [shape = 'u32[144,128]{1,0:T(1,128)}', space=vmem, size = 0x12000, scoped, tag = 'internal scratch']
  #allocation2 [shape = 'f32[48,32]{1,0:T(8,128)}', space=vmem, size = 0x6000, scoped, tag = 'scratch operand']
  %s0 = inlined_call_operand.vmem [shape: bf16[48,32], index: 0, kind: input, shape index: {}]
  %s1 = inlined_call_operand.vmem [shape: bf16[32,32], index: 1, kind: input, shape index: {}]
  %s2 = inlined_call_operand.vmem [shape: f32[1,32], index: 2, kind: input, shape index: {}]
  %s3 = inlined_call_operand.vmem [shape: bf16[48,32], index: 3, kind: input, shape index: {}]
  %s4 = inlined_call_operand.vmem [shape: bf16[48,32], index: 4, kind: output, shape index: {}]
  %s5 = sld [smem:[#allocation0]]
  $region34: #{forward.15} parent=0
    _
  %s7 = ssub.s32 1, %s5
  %s8 = scalar_select 0, %s7, %s5
  // Predicated region
  $region2: #{forward.15} parent=0 // pred_check
    _
  $region3: #{forward.15} parent=0 // pred_check_branch
    %10 = sbr.rel (0) target = $region5
  $region4: #{forward.15} parent=0 // pred_region
    _
  $region5: #{forward.15} parent=0 // pred_fallthru
    _
  // Predicated region
  $region6: #{forward.15} parent=0 // pred_check
    _
  $region7: #{forward.15} parent=0 // pred_check_branch
    %12 = sbr.rel (0) target = $region9
  $region8: #{forward.15} parent=0 // pred_region
    _
  $region9: #{forward.15} parent=0 // pred_fallthru
    _
  // Predicated region
  $region10: #{forward.15} parent=0 // pred_check
    _
  $region11: #{forward.15} parent=0 // pred_check_branch
    %14 = sbr.rel (0) target = $region13
  $region12: #{forward.15} parent=0 // pred_region
    _
  $region13: #{forward.15} parent=0 // pred_fallthru
    _
  // Predicated region
  $region14: #{forward.15} parent=0 // pred_check
    _
  $region15: #{forward.15} parent=0 // pred_check_branch
    %16 = sbr.rel (0) target = $region17
  $region16: #{forward.15} parent=0 // pred_region
    _
  $region17: #{forward.15} parent=0 // pred_fallthru
    _
  %p18 = scmp.eq.s32.totalorder 0, 0
  // Predicated region
  $region18: #{forward.15} parent=0 // pred_check
    %p19 = pneg %p18
  $region19: #{forward.15} parent=0 // pred_check_branch
    %21 = sbr.rel (%p19) target = $region21
  $region20: #{forward.15} parent=0 // pred_region
    %vm22 = vcmask 261120
    %23 = vst.msk [vmem:[#allocation2] sm:$0xff] %vm22, 0.0
    %24 = vst.msk [vmem:[#allocation2 + $0x8] sm:$0xff] %vm22, 0.0
    %25 = vst.msk [vmem:[#allocation2 + $0x10] sm:$0xff] %vm22, 0.0
    %26 = vst.msk [vmem:[#allocation2 + $0x18] sm:$0xff] %vm22, 0.0
    %27 = vst.msk [vmem:[#allocation2 + $0x20] sm:$0xff] %vm22, 0.0
    %28 = vst.msk [vmem:[#allocation2 + $0x28] sm:$0xff] %vm22, 0.0
  $region21: #{forward.15} parent=0 // pred_fallthru
    _
  %v29 = vld [vmem:[#allocation2] sm:$0xff]
  %v30 = vld [vmem:[#allocation2 + $0x8] sm:$0xff]
  %v31 = vld [vmem:[#allocation2 + $0x10] sm:$0xff]
  %v32 = vld [vmem:[#allocation2 + $0x18] sm:$0xff]
  %v33 = vld [vmem:[#allocation2 + $0x20] sm:$0xff]
  %v34 = vld [vmem:[#allocation2 + $0x28] sm:$0xff]
  %v35 = vld [vmem:[%s0] sm:$0xf]
  %v36 = vld [vmem:[%s0 + $0x4] sm:$0xf]
  %v37 = vld [vmem:[%s0 + $0x8] sm:$0xf]
  %v38 = vld [vmem:[%s0 + $0xc] sm:$0xf]
  %v39 = vld [vmem:[%s0 + $0x10] sm:$0xf]
  %v40 = vld [vmem:[%s0 + $0x14] sm:$0xf]
  %v41 = vld [vmem:[%s1] sm:$0xf]
  %v42 = vld [vmem:[%s1 + $0x4] sm:$0xf]
  %v43 = vld [vmem:[%s1 + $0x8] sm:$0xf]
  %v44 = vld [vmem:[%s1 + $0xc] sm:$0xf]
  %v51 = vunpack.c.l.b16 %v35
  %v52 = vunpack.c.l.b16 %v36
  %v53 = vunpack.c.l.b16 %v37
  %v54 = vunpack.c.l.b16 %v38
  %v55 = vunpack.c.l.b16 %v39
  %v56 = vunpack.c.l.b16 %v40
  %v57 = vpack.c.b16 %v52, %v51
  %v58 = vpack.c.b16 %v54, %v53
  %v59 = vpack.c.b16 %v56, %v55
  %v64 = vunpack.c.l.b16 %v41
  %v65 = vunpack.c.l.b16 %v42
  %v66 = vunpack.c.l.b16 %v43
  %v67 = vunpack.c.l.b16 %v44
  %v68 = vpack.c.b16 %v65, %v64
  %v69 = vpack.c.b16 %v67, %v66
  %vm72 = vcmask 261120
  %v74 = vsel %vm72, %v57, 0
  %v77 = vsel %vm72, %v58, 0
  %v80 = vsel %vm72, %v59, 0
  %82 = vmatprep.subr.bf16.mxu0 0
  %83 = vmatpush1.bf16.msra.mxu0 %v68
  %84 = vmatprep.subr.bf16.mxu0 0
  %85 = vmatpush1.bf16.msra.mxu0 %v69
  %86 = vmatprep.subr.bf16.mxu0 0
  %87 = vmatpush1.bf16.msra.mxu0 0
  %88 = vmatprep.subr.bf16.mxu0 0
  %89 = vmatpush1.bf16.msra.mxu0 0
  %90 = vmatprep.subr.bf16.mxu0 0
  %91 = vmatpush1.bf16.msra.mxu0 0
  %92 = vmatprep.subr.bf16.mxu0 0
  %93 = vmatpush1.bf16.msra.mxu0 0
  %94 = vmatprep.subr.bf16.mxu0 0
  %95 = vmatpush1.bf16.msra.mxu0 0
  %96 = vmatprep.subr.bf16.mxu0 0
  %97 = vmatpush1.bf16.msra.mxu0 0
  %98 = vmatprep.subr.bf16.mxu0 0
  %99 = vmatpush1.bf16.msra.mxu0 0
  %100 = vmatprep.subr.bf16.mxu0 0
  %101 = vmatpush1.bf16.msra.mxu0 0
  %102 = vmatprep.subr.bf16.mxu0 0
  %103 = vmatpush1.bf16.msra.mxu0 0
  %104 = vmatprep.subr.bf16.mxu0 0
  %105 = vmatpush1.bf16.msra.mxu0 0
  %106 = vmatprep.subr.bf16.mxu0 0
  %107 = vmatpush1.bf16.msra.mxu0 0
  %108 = vmatprep.subr.bf16.mxu0 0
  %109 = vmatpush1.bf16.msra.mxu0 0
  %110 = vmatprep.subr.bf16.mxu0 0
  %111 = vmatpush1.bf16.msra.mxu0 0
  %112 = vmatprep.subr.bf16.mxu0 0
  %113 = vmatpush1.bf16.msra.mxu0 0
  %114 = vmatprep.mubr.bf16.mxu0 0
  %115 = vmatmul.mubr.bf16.gmra.mrb[0].mxu0 %v74
  %v116 = vpop.f32.mrb[0].mxu0
  %v117 = vadd.f32 0.0, %v116
  %v118 = vpop.f32.mrb[0].mxu0
  %v119 = vpop.f32.mrb[0].mxu0
  %v120 = vadd.f32 0.0, %v119
  %v121 = vpop.f32.mrb[0].mxu0
  %122 = vmatprep.mubr.bf16.mxu0 0
  %123 = vmatmul.mubr.bf16.gmra.mrb[0].mxu0 %v77
  %v124 = vpop.f32.mrb[0].mxu0
  %v125 = vadd.f32 0.0, %v124
  %v126 = vpop.f32.mrb[0].mxu0
  %v127 = vpop.f32.mrb[0].mxu0
  %v128 = vadd.f32 0.0, %v127
  %v129 = vpop.f32.mrb[0].mxu0
  %130 = vmatprep.mubr.bf16.mxu0 0
  %131 = vmatmul.mubr.bf16.gmra.mrb[0].mxu0 %v80
  %v132 = vpop.f32.mrb[0].mxu0
  %v133 = vadd.f32 0.0, %v132
  %v134 = vpop.f32.mrb[0].mxu0
  %v135 = vpop.f32.mrb[0].mxu0
  %v136 = vadd.f32 0.0, %v135
  %v137 = vpop.f32.mrb[0].mxu0
  %138 = vdwg.mxu0
  %v139 = vadd.f32 %v29, %v117
  %v140 = vadd.f32 %v30, %v120
  %v141 = vadd.f32 %v31, %v125
  %v142 = vadd.f32 %v32, %v128
  %v143 = vadd.f32 %v33, %v133
  %v144 = vadd.f32 %v34, %v136
  %145 = vst.msk [vmem:[#allocation2] sm:$0xff] %vm72, %v139
  %146 = vst.msk [vmem:[#allocation2 + $0x8] sm:$0xff] %vm72, %v140
  %147 = vst.msk [vmem:[#allocation2 + $0x10] sm:$0xff] %vm72, %v141
  %148 = vst.msk [vmem:[#allocation2 + $0x18] sm:$0xff] %vm72, %v142
  %149 = vst.msk [vmem:[#allocation2 + $0x20] sm:$0xff] %vm72, %v143
  %150 = vst.msk [vmem:[#allocation2 + $0x28] sm:$0xff] %vm72, %v144
  // Predicated region
  $region22: #{forward.15} parent=0 // pred_check
    %p151 = pneg %p18
  $region23: #{forward.15} parent=0 // pred_check_branch
    %153 = sbr.rel (%p151) target = $region25
  $region24: #{forward.15} parent=0 // pred_region
    %v154 = vld [vmem:[#allocation2] sm:$0xff]
    %v155 = vld [vmem:[#allocation2 + $0x8] sm:$0xff]
    %v156 = vld [vmem:[#allocation2 + $0x10] sm:$0xff]
    %v157 = vld [vmem:[#allocation2 + $0x18] sm:$0xff]
    %v158 = vld [vmem:[#allocation2 + $0x20] sm:$0xff]
    %v159 = vld [vmem:[#allocation2 + $0x28] sm:$0xff]
    %v160 = vld [vmem:[%s2] sm:$0x1]
    %v162 = vlaneseq
    %v163 = vshrl.u32 %v162, 7
    %v164 = vsub.s32 0, %v163
    %v165 = vrot.slane %v160, %v164
    %v167 = vadd.f32 %v154, %v165
    %v168 = vadd.f32 %v155, %v165
    %v169 = vadd.f32 %v156, %v165
    %v170 = vadd.f32 %v157, %v165
    %v171 = vadd.f32 %v158, %v165
    %v172 = vadd.f32 %v159, %v165
    %v173 = vld [vmem:[%s3] sm:$0xf]
    %v174 = vld [vmem:[%s3 + $0x4] sm:$0xf]
    %v175 = vld [vmem:[%s3 + $0x8] sm:$0xf]
    %v176 = vld [vmem:[%s3 + $0xc] sm:$0xf]
    %v177 = vld [vmem:[%s3 + $0x10] sm:$0xf]
    %v178 = vld [vmem:[%s3 + $0x14] sm:$0xf]
    %v179 = vunpack.c.l.bf16 %v173
    %v180 = vunpack.c.l.bf16 %v174
    %v181 = vunpack.c.l.bf16 %v175
    %v182 = vunpack.c.l.bf16 %v176
    %v183 = vunpack.c.l.bf16 %v177
    %v184 = vunpack.c.l.bf16 %v178
    %v185 = vadd.f32 %v167, %v179
    %v186 = vadd.f32 %v168, %v180
    %v187 = vadd.f32 %v169, %v181
    %v188 = vadd.f32 %v170, %v182
    %v189 = vadd.f32 %v171, %v183
    %v190 = vadd.f32 %v172, %v184
    %v191 = vpack.c.bf16 %v186, %v185
    %v192 = vpack.c.bf16 %v188, %v187
    %v193 = vpack.c.bf16 %v190, %v189
    %v197 = vunpack.c.l.b16 %v191
    %v198 = vunpack.c.h.b16 %v191
    %v199 = vunpack.c.l.b16 %v192
    %v200 = vunpack.c.h.b16 %v192
    %v201 = vunpack.c.l.b16 %v193
    %v202 = vunpack.c.h.b16 %v193
    %v203 = vpack.c.b16 %v197, %v197
    %v204 = vpack.c.b16 %v198, %v198
    %v205 = vpack.c.b16 %v199, %v199
    %v206 = vpack.c.b16 %v200, %v200
    %v207 = vpack.c.b16 %v201, %v201
    %v208 = vpack.c.b16 %v202, %v202
    %vm215 = vcmask 257024
    %216 = vst.msk [vmem:[%s4] sm:$0xf] %vm215, %v203
    %217 = vst.msk [vmem:[%s4 + $0x4] sm:$0xf] %vm215, %v204
    %218 = vst.msk [vmem:[%s4 + $0x8] sm:$0xf] %vm215, %v205
    %219 = vst.msk [vmem:[%s4 + $0xc] sm:$0xf] %vm215, %v206
    %220 = vst.msk [vmem:[%s4 + $0x10] sm:$0xf] %vm215, %v207
    %221 = vst.msk [vmem:[%s4 + $0x14] sm:$0xf] %vm215, %v208
  $region25: #{forward.15} parent=0 // pred_fallthru
    _
  // Predicated region
  $region26: #{forward.15} parent=0 // pred_check
    _
  $region27: #{forward.15} parent=0 // pred_check_branch
    %223 = sbr.rel (0) target = $region29
  $region28: #{forward.15} parent=0 // pred_region
    _
  $region29: #{forward.15} parent=0 // pred_fallthru
    _
  // Predicated region
  $region30: #{forward.15} parent=0 // pred_check
    _
  $region31: #{forward.15} parent=0 // pred_check_branch
    %225 = sbr.rel (0) target = $region33
  $region32: #{forward.15} parent=0 // pred_region
    _
  $region33: #{forward.15} parent=0 // pred_fallthru
    _

// kernel: forward.12
$region0: #{forward.12}
  #allocation0 [shape = 'u32[]', space=smem, size = 0x4, offset = 0x4, fixed_abs, tag = 'smem constant byte address 0x4 - core index']
  #allocation1 [shape = 'u32[144,128]{1,0:T(1,128)}', space=vmem, size = 0x12000, scoped, tag = 'internal scratch']
  #allocation2 [shape = 'f32[32,32]{1,0:T(8,128)}', space=vmem, size = 0x4000, scoped, tag = 'scratch operand']
  %s0 = inlined_call_operand.vmem [shape: bf16[32,48], index: 0, kind: input, shape index: {}]
  %s1 = inlined_call_operand.vmem [shape: bf16[48,32], index: 1, kind: input, shape index: {}]
  %s2 = inlined_call_operand.vmem [shape: f32[1,32], index: 2, kind: input, shape index: {}]
  %s3 = inlined_call_operand.vmem [shape: bf16[32,32], index: 3, kind: output, shape index: {}]
  %s4 = sld [smem:[#allocation0]]
  $region30: #{forward.12} parent=0
    _
  %s6 = ssub.s32 1, %s4
  %s7 = scalar_select 0, %s6, %s4
  // Predicated region
  $region2: #{forward.12} parent=0 // pred_check
    _
  $region3: #{forward.12} parent=0 // pred_check_branch
    %9 = sbr.rel (0) target = $region5
  $region4: #{forward.12} parent=0 // pred_region
    _
  $region5: #{forward.12} parent=0 // pred_fallthru
    _
  // Predicated region
  $region6: #{forward.12} parent=0 // pred_check
    _
  $region7: #{forward.12} parent=0 // pred_check_branch
    %11 = sbr.rel (0) target = $region9
  $region8: #{forward.12} parent=0 // pred_region
    _
  $region9: #{forward.12} parent=0 // pred_fallthru
    _
  // Predicated region
  $region10: #{forward.12} parent=0 // pred_check
    _
  $region11: #{forward.12} parent=0 // pred_check_branch
    %13 = sbr.rel (0) target = $region13
  $region12: #{forward.12} parent=0 // pred_region
    _
  $region13: #{forward.12} parent=0 // pred_fallthru
    _
  %p15 = scmp.eq.s32.totalorder 0, 0
  // Predicated region
  $region14: #{forward.12} parent=0 // pred_check
    %p16 = pneg %p15
  $region15: #{forward.12} parent=0 // pred_check_branch
    %18 = sbr.rel (%p16) target = $region17
  $region16: #{forward.12} parent=0 // pred_region
    %vm19 = vcmask 261120
    %20 = vst.msk [vmem:[#allocation2] sm:$0xff] %vm19, 0.0
    %21 = vst.msk [vmem:[#allocation2 + $0x8] sm:$0xff] %vm19, 0.0
    %22 = vst.msk [vmem:[#allocation2 + $0x10] sm:$0xff] %vm19, 0.0
    %23 = vst.msk [vmem:[#allocation2 + $0x18] sm:$0xff] %vm19, 0.0
  $region17: #{forward.12} parent=0 // pred_fallthru
    _
  %v24 = vld [vmem:[#allocation2] sm:$0xff]
  %v25 = vld [vmem:[#allocation2 + $0x8] sm:$0xff]
  %v26 = vld [vmem:[#allocation2 + $0x10] sm:$0xff]
  %v27 = vld [vmem:[#allocation2 + $0x18] sm:$0xff]
  %v28 = vld [vmem:[%s0] sm:$0xf]
  %v29 = vld [vmem:[%s0 + $0x4] sm:$0xf]
  %v30 = vld [vmem:[%s0 + $0x8] sm:$0xf]
  %v31 = vld [vmem:[%s0 + $0xc] sm:$0xf]
  %v32 = vld [vmem:[%s1] sm:$0xf]
  %v33 = vld [vmem:[%s1 + $0x4] sm:$0xf]
  %v34 = vld [vmem:[%s1 + $0x8] sm:$0xf]
  %v35 = vld [vmem:[%s1 + $0xc] sm:$0xf]
  %v36 = vld [vmem:[%s1 + $0x10] sm:$0xf]
  %v37 = vld [vmem:[%s1 + $0x14] sm:$0xf]
  %v42 = vunpack.c.l.b16 %v28
  %v43 = vunpack.c.l.b16 %v29
  %v44 = vunpack.c.l.b16 %v30
  %v45 = vunpack.c.l.b16 %v31
  %v46 = vpack.c.b16 %v43, %v42
  %v47 = vpack.c.b16 %v45, %v44
  %v54 = vunpack.c.l.b16 %v32
  %v55 = vunpack.c.l.b16 %v33
  %v56 = vunpack.c.l.b16 %v34
  %v57 = vunpack.c.l.b16 %v35
  %v58 = vunpack.c.l.b16 %v36
  %v59 = vunpack.c.l.b16 %v37
  %v60 = vpack.c.b16 %v55, %v54
  %v61 = vpack.c.b16 %v57, %v56
  %v62 = vpack.c.b16 %v59, %v58
  %vm66 = vcmask 392192
  %v68 = vsel %vm66, %v46, 0
  %v71 = vsel %vm66, %v47, 0
  %73 = vmatprep.subr.bf16.mxu0 0
  %74 = vmatpush1.bf16.msra.mxu0 %v60
  %75 = vmatprep.subr.bf16.mxu0 0
  %76 = vmatpush1.bf16.msra.mxu0 %v61
  %77 = vmatprep.subr.bf16.mxu0 0
  %78 = vmatpush1.bf16.msra.mxu0 %v62
  %79 = vmatprep.subr.bf16.mxu0 0
  %80 = vmatpush1.bf16.msra.mxu0 0
  %81 = vmatprep.subr.bf16.mxu0 0
  %82 = vmatpush1.bf16.msra.mxu0 0
  %83 = vmatprep.subr.bf16.mxu0 0
  %84 = vmatpush1.bf16.msra.mxu0 0
  %85 = vmatprep.subr.bf16.mxu0 0
  %86 = vmatpush1.bf16.msra.mxu0 0
  %87 = vmatprep.subr.bf16.mxu0 0
  %88 = vmatpush1.bf16.msra.mxu0 0
  %89 = vmatprep.subr.bf16.mxu0 0
  %90 = vmatpush1.bf16.msra.mxu0 0
  %91 = vmatprep.subr.bf16.mxu0 0
  %92 = vmatpush1.bf16.msra.mxu0 0
  %93 = vmatprep.subr.bf16.mxu0 0
  %94 = vmatpush1.bf16.msra.mxu0 0
  %95 = vmatprep.subr.bf16.mxu0 0
  %96 = vmatpush1.bf16.msra.mxu0 0
  %97 = vmatprep.subr.bf16.mxu0 0
  %98 = vmatpush1.bf16.msra.mxu0 0
  %99 = vmatprep.subr.bf16.mxu0 0
  %100 = vmatpush1.bf16.msra.mxu0 0
  %101 = vmatprep.subr.bf16.mxu0 0
  %102 = vmatpush1.bf16.msra.mxu0 0
  %103 = vmatprep.subr.bf16.mxu0 0
  %104 = vmatpush1.bf16.msra.mxu0 0
  %105 = vmatprep.mubr.bf16.mxu0 0
  %106 = vmatmul.mubr.bf16.gmra.mrb[0].mxu0 %v68
  %v107 = vpop.f32.mrb[0].mxu0
  %v108 = vadd.f32 0.0, %v107
  %v109 = vpop.f32.mrb[0].mxu0
  %v110 = vpop.f32.mrb[0].mxu0
  %v111 = vadd.f32 0.0, %v110
  %v112 = vpop.f32.mrb[0].mxu0
  %113 = vmatprep.mubr.bf16.mxu0 0
  %114 = vmatmul.mubr.bf16.gmra.mrb[0].mxu0 %v71
  %v115 = vpop.f32.mrb[0].mxu0
  %v116 = vadd.f32 0.0, %v115
  %v117 = vpop.f32.mrb[0].mxu0
  %v118 = vpop.f32.mrb[0].mxu0
  %v119 = vadd.f32 0.0, %v118
  %v120 = vpop.f32.mrb[0].mxu0
  %121 = vdwg.mxu0
  %v122 = vadd.f32 %v24, %v108
  %v123 = vadd.f32 %v25, %v111
  %v124 = vadd.f32 %v26, %v116
  %v125 = vadd.f32 %v27, %v119
  %vm126 = vcmask 261120
  %127 = vst.msk [vmem:[#allocation2] sm:$0xff] %vm126, %v122
  %128 = vst.msk [vmem:[#allocation2 + $0x8] sm:$0xff] %vm126, %v123
  %129 = vst.msk [vmem:[#allocation2 + $0x10] sm:$0xff] %vm126, %v124
  %130 = vst.msk [vmem:[#allocation2 + $0x18] sm:$0xff] %vm126, %v125
  // Predicated region
  $region18: #{forward.12} parent=0 // pred_check
    %p131 = pneg %p15
  $region19: #{forward.12} parent=0 // pred_check_branch
    %133 = sbr.rel (%p131) target = $region21
  $region20: #{forward.12} parent=0 // pred_region
    %v134 = vld [vmem:[#allocation2] sm:$0xff]
    %v135 = vld [vmem:[#allocation2 + $0x8] sm:$0xff]
    %v136 = vld [vmem:[#allocation2 + $0x10] sm:$0xff]
    %v137 = vld [vmem:[#allocation2 + $0x18] sm:$0xff]
    %v138 = vld [vmem:[%s2] sm:$0x1]
    %v140 = vlaneseq
    %v141 = vshrl.u32 %v140, 7
    %v142 = vsub.s32 0, %v141
    %v143 = vrot.slane %v138, %v142
    %v145 = vadd.f32 %v134, %v143
    %v146 = vadd.f32 %v135, %v143
    %v147 = vadd.f32 %v136, %v143
    %v148 = vadd.f32 %v137, %v143
    %v149 = vpack.c.bf16 %v146, %v145
    %v150 = vpack.c.bf16 %v148, %v147
    %v153 = vunpack.c.l.b16 %v149
    %v154 = vunpack.c.h.b16 %v149
    %v155 = vunpack.c.l.b16 %v150
    %v156 = vunpack.c.h.b16 %v150
    %v157 = vpack.c.b16 %v153, %v153
    %v158 = vpack.c.b16 %v154, %v154
    %v159 = vpack.c.b16 %v155, %v155
    %v160 = vpack.c.b16 %v156, %v156
    %vm165 = vcmask 257024
    %166 = vst.msk [vmem:[%s3] sm:$0xf] %vm165, %v157
    %167 = vst.msk [vmem:[%s3 + $0x4] sm:$0xf] %vm165, %v158
    %168 = vst.msk [vmem:[%s3 + $0x8] sm:$0xf] %vm165, %v159
    %169 = vst.msk [vmem:[%s3 + $0xc] sm:$0xf] %vm165, %v160
  $region21: #{forward.12} parent=0 // pred_fallthru
    _
  // Predicated region
  $region22: #{forward.12} parent=0 // pred_check
    _
  $region23: #{forward.12} parent=0 // pred_check_branch
    %171 = sbr.rel (0) target = $region25
  $region24: #{forward.12} parent=0 // pred_region
    _
  $region25: #{forward.12} parent=0 // pred_fallthru
    _
  // Predicated region
  $region26: #{forward.12} parent=0 // pred_check
    _
  $region27: #{forward.12} parent=0 // pred_check_branch
    %173 = sbr.rel (0) target = $region29
  $region28: #{forward.12} parent=0 // pred_region
    _
  $region29: #{forward.12} parent=0 // pred_fallthru
    _

// kernel: forward.13
$region0: #{forward.13}
  #allocation0 [shape = 'u32[]', space=smem, size = 0x4, offset = 0x4, fixed_abs, tag = 'smem constant byte address 0x4 - core index']
  #allocation1 [shape = 'u32[144,128]{1,0:T(1,128)}', space=vmem, size = 0x12000, scoped, tag = 'internal scratch']
  #allocation2 [shape = 'bf16[48,32]{1,0:T(16,128)(2,1)}', space=vmem, size = 0x3000, scoped, tag = 'scratch operand']
  %s0 = inlined_call_operand.vmem [shape: bf16[48,32], index: 0, kind: input, shape index: {}]
  %s1 = inlined_call_operand.vmem [shape: f32[1,32], index: 1, kind: input, shape index: {}]
  %s2 = inlined_call_operand.vmem [shape: f32[1,32], index: 2, kind: input, shape index: {}]
  %s3 = inlined_call_operand.vmem [shape: bf16[32,96], index: 3, kind: input, shape index: {}]
  %s4 = inlined_call_operand.vmem [shape: f32[1,96], index: 4, kind: input, shape index: {}]
  %s5 = inlined_call_operand.vmem [shape: bf16[48,96], index: 5, kind: output, shape index: {}]
  %s6 = sld [smem:[#allocation0]]
  $region34: #{forward.13} parent=0
    _
  %s8 = ssub.s32 1, %s6
  %s9 = scalar_select 0, %s8, %s6
  // Predicated region
  $region2: #{forward.13} parent=0 // pred_check
    _
  $region3: #{forward.13} parent=0 // pred_check_branch
    %11 = sbr.rel (0) target = $region5
  $region4: #{forward.13} parent=0 // pred_region
    _
  $region5: #{forward.13} parent=0 // pred_fallthru
    _
  // Predicated region
  $region6: #{forward.13} parent=0 // pred_check
    _
  $region7: #{forward.13} parent=0 // pred_check_branch
    %13 = sbr.rel (0) target = $region9
  $region8: #{forward.13} parent=0 // pred_region
    _
  $region9: #{forward.13} parent=0 // pred_fallthru
    _
  // Predicated region
  $region10: #{forward.13} parent=0 // pred_check
    _
  $region11: #{forward.13} parent=0 // pred_check_branch
    %15 = sbr.rel (0) target = $region13
  $region12: #{forward.13} parent=0 // pred_region
    _
  $region13: #{forward.13} parent=0 // pred_fallthru
    _
  // Predicated region
  $region14: #{forward.13} parent=0 // pred_check
    _
  $region15: #{forward.13} parent=0 // pred_check_branch
    %17 = sbr.rel (0) target = $region17
  $region16: #{forward.13} parent=0 // pred_region
    _
  $region17: #{forward.13} parent=0 // pred_fallthru
    _
  // Predicated region
  $region18: #{forward.13} parent=0 // pred_check
    _
  $region19: #{forward.13} parent=0 // pred_check_branch
    %19 = sbr.rel (0) target = $region21
  $region20: #{forward.13} parent=0 // pred_region
    _
  $region21: #{forward.13} parent=0 // pred_fallthru
    _
  %p21 = scmp.eq.s32.totalorder 0, 0
  // Predicated region
  $region22: #{forward.13} parent=0 // pred_check
    %p22 = pneg %p21
  $region23: #{forward.13} parent=0 // pred_check_branch
    %24 = sbr.rel (%p22) target = $region25
  $region24: #{forward.13} parent=0 // pred_region
    %v25 = vld [vmem:[%s0] sm:$0xf]
    %v26 = vld [vmem:[%s0 + $0x4] sm:$0xf]
    %v27 = vld [vmem:[%s0 + $0x8] sm:$0xf]
    %v28 = vld [vmem:[%s0 + $0xc] sm:$0xf]
    %v29 = vld [vmem:[%s0 + $0x10] sm:$0xf]
    %v30 = vld [vmem:[%s0 + $0x14] sm:$0xf]
    %v31 = vunpack.c.l.bf16 %v25
    %v32 = vunpack.c.l.bf16 %v26
    %v33 = vunpack.c.l.bf16 %v27
    %v34 = vunpack.c.l.bf16 %v28
    %v35 = vunpack.c.l.bf16 %v29
    %v36 = vunpack.c.l.bf16 %v30
    %vm37 = vcmask 261120
    %v38 = vsel %vm37, %v31, 0.0
    %39 = vadd.xlane.f32.xlu0 %v38
    %v40 = vpop.xlane.xlu0 %39
    %v41 = vsel %vm37, %v32, 0.0
    %42 = vadd.xlane.f32.xlu0 %v41
    %v43 = vpop.xlane.xlu0 %42
    %v44 = vsel %vm37, %v33, 0.0
    %45 = vadd.xlane.f32.xlu0 %v44
    %v46 = vpop.xlane.xlu0 %45
    %v47 = vsel %vm37, %v34, 0.0
    %48 = vadd.xlane.f32.xlu0 %v47
    %v49 = vpop.xlane.xlu0 %48
    %v50 = vsel %vm37, %v35, 0.0
    %51 = vadd.xlane.f32.xlu0 %v50
    %v52 = vpop.xlane.xlu0 %51
    %v53 = vsel %vm37, %v36, 0.0
    %54 = vadd.xlane.f32.xlu0 %v53
    %v55 = vpop.xlane.xlu0 %54
    %v56 = vrcp.pop 32.0
    %v57 = vmul.f32 %v40, %v56
    %v58 = vmul.f32 %v43, %v56
    %v59 = vmul.f32 %v46, %v56
    %v60 = vmul.f32 %v49, %v56
    %v61 = vmul.f32 %v52, %v56
    %v62 = vmul.f32 %v55, %v56
    %v63 = vsub.f32 %v31, %v57
    %v64 = vsub.f32 %v32, %v58
    %v65 = vsub.f32 %v33, %v59
    %v66 = vsub.f32 %v34, %v60
    %v67 = vsub.f32 %v35, %v61
    %v68 = vsub.f32 %v36, %v62
    %v69 = vmul.f32 %v63, %v63
    %v70 = vmul.f32 %v64, %v64
    %v71 = vmul.f32 %v65, %v65
    %v72 = vmul.f32 %v66, %v66
    %v73 = vmul.f32 %v67, %v67
    %v74 = vmul.f32 %v68, %v68
    %v75 = vsel %vm37, %v69, 0.0
    %76 = vadd.xlane.f32.xlu0 %v75
    %v77 = vpop.xlane.xlu0 %76
    %v78 = vsel %vm37, %v70, 0.0
    %79 = vadd.xlane.f32.xlu0 %v78
    %v80 = vpop.xlane.xlu0 %79
    %v81 = vsel %vm37, %v71, 0.0
    %82 = vadd.xlane.f32.xlu0 %v81
    %v83 = vpop.xlane.xlu0 %82
    %v84 = vsel %vm37, %v72, 0.0
    %85 = vadd.xlane.f32.xlu0 %v84
    %v86 = vpop.xlane.xlu0 %85
    %v87 = vsel %vm37, %v73, 0.0
    %88 = vadd.xlane.f32.xlu0 %v87
    %v89 = vpop.xlane.xlu0 %88
    %v90 = vsel %vm37, %v74, 0.0
    %91 = vadd.xlane.f32.xlu0 %v90
    %v92 = vpop.xlane.xlu0 %91
    %v93 = vmul.f32 %v77, %v56
    %v94 = vmul.f32 %v80, %v56
    %v95 = vmul.f32 %v83, %v56
    %v96 = vmul.f32 %v86, %v56
    %v97 = vmul.f32 %v89, %v56
    %v98 = vmul.f32 %v92, %v56
    %v99 = vadd.f32 %v93, 1e-06
    %v100 = vadd.f32 %v94, 1e-06
    %v101 = vadd.f32 %v95, 1e-06
    %v102 = vadd.f32 %v96, 1e-06
    %v103 = vadd.f32 %v97, 1e-06
    %v104 = vadd.f32 %v98, 1e-06
    %v105 = vrsqrt.pop %v99
    %v106 = vrsqrt.pop %v100
    %v107 = vrsqrt.pop %v101
    %v108 = vrsqrt.pop %v102
    %v109 = vrsqrt.pop %v103
    %v110 = vrsqrt.pop %v104
    %v111 = vmul.f32 %v63, %v105
    %v112 = vmul.f32 %v64, %v106
    %v113 = vmul.f32 %v65, %v107
    %v114 = vmul.f32 %v66, %v108
    %v115 = vmul.f32 %v67, %v109
    %v116 = vmul.f32 %v68, %v110
    %v117 = vld [vmem:[%s1] sm:$0x1]
    %v119 = vlaneseq
    %v120 = vshrl.u32 %v119, 7
    %v121 = vsub.s32 0, %v120
    %v122 = vrot.slane %v117, %v121
    %v124 = vmul.f32 %v111, %v122
    %v125 = vmul.f32 %v112, %v122
    %v126 = vmul.f32 %v113, %v122
    %v127 = vmul.f32 %v114, %v122
    %v128 = vmul.f32 %v115, %v122
    %v129 = vmul.f32 %v116, %v122
    %v130 = vld [vmem:[%s2] sm:$0x1]
    %v132 = vlaneseq
    %v133 = vshrl.u32 %v132, 7
    %v134 = vsub.s32 0, %v133
    %v135 = vrot.slane %v130, %v134
    %v137 = vadd.f32 %v124, %v135
    %v138 = vadd.f32 %v125, %v135
    %v139 = vadd.f32 %v126, %v135
    %v140 = vadd.f32 %v127, %v135
    %v141 = vadd.f32 %v128, %v135
    %v142 = vadd.f32 %v129, %v135
    %v143 = vpack.c.bf16 %v138, %v137
    %v144 = vpack.c.bf16 %v140, %v139
    %v145 = vpack.c.bf16 %v142, %v141
    %146 = vst.msk [vmem:[#allocation2] sm:$0xff] %vm37, %v143
    %147 = vst.msk [vmem:[#allocation2 + $0x8] sm:$0xff] %vm37, %v144
    %148 = vst.msk [vmem:[#allocation2 + $0x10] sm:$0xff] %vm37, %v145
  $region25: #{forward.13} parent=0 // pred_fallthru
    _
  %v149 = vld [vmem:[#allocation2] sm:$0xff]
  %v150 = vld [vmem:[#allocation2 + $0x8] sm:$0xff]
  %v151 = vld [vmem:[#allocation2 + $0x10] sm:$0xff]
  %v152 = vld [vmem:[%s3] sm:$0xf]
  %v153 = vld [vmem:[%s3 + $0x4] sm:$0xf]
  %v154 = vld [vmem:[%s3 + $0x8] sm:$0xf]
  %v155 = vld [vmem:[%s3 + $0xc] sm:$0xf]
  %v156 = vld [vmem:[%s4] sm:$0x1]
  %v158 = vlaneseq
  %v159 = vshrl.u32 %v158, 7
  %v160 = vsub.s32 0, %v159
  %v161 = vrot.slane %v156, %v160
  %v167 = vunpack.c.l.b16 %v152
  %v168 = vunpack.c.l.b16 %v153
  %v169 = vunpack.c.l.b16 %v154
  %v170 = vunpack.c.l.b16 %v155
  %v171 = vpack.c.b16 %v168, %v167
  %v172 = vpack.c.b16 %v170, %v169
  %vm175 = vcmask 261120
  %v177 = vsel %vm175, %v149, 0
  %v180 = vsel %vm175, %v150, 0
  %v183 = vsel %vm175, %v151, 0
  %185 = vmatprep.subr.bf16.mxu0 0
  %186 = vmatpush1.bf16.msra.mxu0 %v171
  %187 = vmatprep.subr.bf16.mxu0 0
  %188 = vmatpush1.bf16.msra.mxu0 %v172
  %189 = vmatprep.subr.bf16.mxu0 0
  %190 = vmatpush1.bf16.msra.mxu0 0
  %191 = vmatprep.subr.bf16.mxu0 0
  %192 = vmatpush1.bf16.msra.mxu0 0
  %193 = vmatprep.subr.bf16.mxu0 0
  %194 = vmatpush1.bf16.msra.mxu0 0
  %195 = vmatprep.subr.bf16.mxu0 0
  %196 = vmatpush1.bf16.msra.mxu0 0
  %197 = vmatprep.subr.bf16.mxu0 0
  %198 = vmatpush1.bf16.msra.mxu0 0
  %199 = vmatprep.subr.bf16.mxu0 0
  %200 = vmatpush1.bf16.msra.mxu0 0
  %201 = vmatprep.subr.bf16.mxu0 0
  %202 = vmatpush1.bf16.msra.mxu0 0
  %203 = vmatprep.subr.bf16.mxu0 0
  %204 = vmatpush1.bf16.msra.mxu0 0
  %205 = vmatprep.subr.bf16.mxu0 0
  %206 = vmatpush1.bf16.msra.mxu0 0
  %207 = vmatprep.subr.bf16.mxu0 0
  %208 = vmatpush1.bf16.msra.mxu0 0
  %209 = vmatprep.subr.bf16.mxu0 0
  %210 = vmatpush1.bf16.msra.mxu0 0
  %211 = vmatprep.subr.bf16.mxu0 0
  %212 = vmatpush1.bf16.msra.mxu0 0
  %213 = vmatprep.subr.bf16.mxu0 0
  %214 = vmatpush1.bf16.msra.mxu0 0
  %215 = vmatprep.subr.bf16.mxu0 0
  %216 = vmatpush1.bf16.msra.mxu0 0
  %217 = vmatprep.mubr.bf16.mxu0 0
  %218 = vmatmul.mubr.bf16.gmra.mrb[0].mxu0 %v177
  %v219 = vpop.f32.mrb[0].mxu0
  %v220 = vadd.f32 %v161, %v219
  %v221 = vpop.f32.mrb[0].mxu0
  %v222 = vpop.f32.mrb[0].mxu0
  %v223 = vadd.f32 %v161, %v222
  %v224 = vpop.f32.mrb[0].mxu0
  %225 = vmatprep.mubr.bf16.mxu0 0
  %226 = vmatmul.mubr.bf16.gmra.mrb[0].mxu0 %v180
  %v227 = vpop.f32.mrb[0].mxu0
  %v228 = vadd.f32 %v161, %v227
  %v229 = vpop.f32.mrb[0].mxu0
  %v230 = vpop.f32.mrb[0].mxu0
  %v231 = vadd.f32 %v161, %v230
  %v232 = vpop.f32.mrb[0].mxu0
  %233 = vmatprep.mubr.bf16.mxu0 0
  %234 = vmatmul.mubr.bf16.gmra.mrb[0].mxu0 %v183
  %v235 = vpop.f32.mrb[0].mxu0
  %v236 = vadd.f32 %v161, %v235
  %v237 = vpop.f32.mrb[0].mxu0
  %v238 = vpop.f32.mrb[0].mxu0
  %v239 = vadd.f32 %v161, %v238
  %v240 = vpop.f32.mrb[0].mxu0
  %241 = vdwg.mxu0
  %v242 = vpack.c.bf16 %v223, %v220
  %v243 = vpack.c.bf16 %v231, %v228
  %v244 = vpack.c.bf16 %v239, %v236
  %v248 = vunpack.c.l.b16 %v242
  %v249 = vunpack.c.h.b16 %v242
  %v250 = vunpack.c.l.b16 %v243
  %v251 = vunpack.c.h.b16 %v243
  %v252 = vunpack.c.l.b16 %v244
  %v253 = vunpack.c.h.b16 %v244
  %v254 = vpack.c.b16 %v248, %v248
  %v255 = vpack.c.b16 %v249, %v249
  %v256 = vpack.c.b16 %v250, %v250
  %v257 = vpack.c.b16 %v251, %v251
  %v258 = vpack.c.b16 %v252, %v252
  %v259 = vpack.c.b16 %v253, %v253
  %vm266 = vcmask 781312
  %267 = vst.msk [vmem:[%s5] sm:$0xf] %vm266, %v254
  %268 = vst.msk [vmem:[%s5 + $0x4] sm:$0xf] %vm266, %v255
  %269 = vst.msk [vmem:[%s5 + $0x8] sm:$0xf] %vm266, %v256
  %270 = vst.msk [vmem:[%s5 + $0xc] sm:$0xf] %vm266, %v257
  %271 = vst.msk [vmem:[%s5 + $0x10] sm:$0xf] %vm266, %v258
  %272 = vst.msk [vmem:[%s5 + $0x14] sm:$0xf] %vm266, %v259
  // Predicated region
  $region26: #{forward.13} parent=0 // pred_check
    _
  $region27: #{forward.13} parent=0 // pred_check_branch
    %274 = sbr.rel (0) target = $region29
  $region28: #{forward.13} parent=0 // pred_region
    _
  $region29: #{forward.13} parent=0 // pred_fallthru
    _
  // Predicated region
  $region30: #{forward.13} parent=0 // pred_check
    _
  $region31: #{forward.13} parent=0 // pred_check_branch
    %276 = sbr.rel (0) target = $region33
  $region32: #{forward.13} parent=0 // pred_region
    _
  $region33: #{forward.13} parent=0 // pred_fallthru
    _

// kernel: forward.14
$region0: #{forward.14}
  #allocation0 [shape = 'u32[]', space=smem, size = 0x4, offset = 0x4, fixed_abs, tag = 'smem constant byte address 0x4 - core index']
  #allocation1 [shape = 'u32[144,128]{1,0:T(1,128)}', space=vmem, size = 0x12000, scoped, tag = 'internal scratch']
  %s0 = inlined_call_operand.vmem [shape: bf16[2,24,96], index: 0, kind: input, shape index: {}]
  %s1 = inlined_call_operand.vmem [shape: bf16[2,24,32], index: 1, kind: output, shape index: {}]
  %s2 = sld [smem:[#allocation0]]
  $region37: #{forward.14} parent=0
    _
  %s4 = ssub.s32 1, %s2
  %s5 = scalar_select 0, %s4, %s2
  loop: start=0, step=1, limit=4
  $region2: #{forward.14} parent=0 // loop_pre_header
    _
  $region3: #{forward.14} parent=0 // loop_header
    %s7 = sphi 0, %s11
    %p8 = scmp.ge.s32.totalorder %s7, 4
    %s17 = sphi 0, %s19
    %s20 = sphi 0, %s17
    %s21 = sphi 0, %s20
    %s37 = sphi 0, %s21
    %s43 = sphi 0, %s45
    %s46 = sphi 0, %s43
    %s47 = sphi 0, %s46
    %s63 = sphi 0, %s47
  $region4: #{forward.14} parent=0 // loop_header_branch
    %10 = sbr.rel (%p8) target = $region8
  $region5: #{forward.14} parent=0 // loop_body
    %s12 = ssub.s32 %s7, 1
    %s13 = ssub.s32 %s7, 2
    %s14 = sadd.s32 %s7, 1
    %s15 = ssub.s32 %s7, %s14
    %p16 = scmp.eq.s32.totalorder %s15, 0
    %s18 = sadd.s32 %s17, 1
    %s19 = scalar_select %p16, %s17, %s18
    %p22 = pneg %p16
    %p23 = scmp.eq.s32.totalorder %s7, 1
    %p24 = por %p22, %p23
    %p25 = scmp.ne.s32.totalorder %s17, %s20
    %p26 = scmp.eq.s32.totalorder %s7, 0
    %p27 = por %p25, %p26
    %p28 = scmp.ne.s32.totalorder %s17, %s20
    %p29 = scmp.eq.s32.totalorder %s12, 1
    %p30 = por %p28, %p29
    %p31 = scmp.ne.s32.totalorder %s20, %s21
    %p32 = scmp.eq.s32.totalorder %s12, 0
    %p33 = por %p31, %p32
    %p34 = scmp.ne.s32.totalorder %s20, %s21
    %p35 = scmp.eq.s32.totalorder %s13, 1
    %p36 = por %p34, %p35
    %p38 = scmp.ne.s32.totalorder %s21, %s37
    %p39 = scmp.eq.s32.totalorder %s13, 0
    %p40 = por %p38, %p39
    %s41 = ssub.s32 %s7, %s14
    %p42 = scmp.eq.s32.totalorder %s41, 0
    %s44 = sadd.s32 %s43, 1
    %s45 = scalar_select %p42, %s43, %s44
    %p48 = pneg %p42
    %p49 = scmp.eq.s32.totalorder %s7, 1
    %p50 = por %p48, %p49
    %p51 = scmp.ne.s32.totalorder %s43, %s46
    %p52 = scmp.eq.s32.totalorder %s7, 0
    %p53 = por %p51, %p52
    %p54 = scmp.ne.s32.totalorder %s43, %s46
    %p55 = scmp.eq.s32.totalorder %s12, 1
    %p56 = por %p54, %p55
    %p57 = scmp.ne.s32.totalorder %s46, %s47
    %p58 = scmp.eq.s32.totalorder %s12, 0
    %p59 = por %p57, %p58
    %p60 = scmp.ne.s32.totalorder %s46, %s47
    %p61 = scmp.eq.s32.totalorder %s13, 1
    %p62 = por %p60, %p61
    %p64 = scmp.ne.s32.totalorder %s47, %s63
    %p65 = scmp.eq.s32.totalorder %s13, 0
    %p66 = por %p64, %p65
    %p67 = scmp.le.s32.totalorder 1, %s7
    %p68 = scmp.lt.s32.totalorder %s7, 3
    %p69 = pnand %p67, %p68
    %p70 = pneg %p69
    // Predicated region
    $region9: #{forward.14} parent=5 // pred_check
      _
    $region10: #{forward.14} parent=5 // pred_check_branch
      %72 = sbr.rel (%p69) target = $region12
    $region11: #{forward.14} parent=5 // pred_region
      %s73 = ssub.s32 %s7, 1
    $region12: #{forward.14} parent=5 // pred_fallthru
      _
    %p74 = scmp.lt.s32.totalorder %s7, 2
    // Predicated region
    $region13: #{forward.14} parent=5 // pred_check
      %p75 = pneg %p74
    $region14: #{forward.14} parent=5 // pred_check_branch
      %77 = sbr.rel (%p75) target = $region16
    $region15: #{forward.14} parent=5 // pred_region
      // Predicated region
      $region17: #{forward.14} parent=15 // pred_check
        %p78 = pneg %p27
      $region18: #{forward.14} parent=15 // pred_check_branch
        %80 = sbr.rel (%p78) target = $region20
      $region19: #{forward.14} parent=15 // pred_region
        %p81 = scmp.lt.s32.totalorder %s7, 1
        %s82 = scalar_select %p81, %s7, 1
        %s83 = smul.addr %s82, 3
        %s84 = smul.addr %s83, 4
        %s85 = scalar_lea.vmem %s0, %s84
      $region20: #{forward.14} parent=15 // pred_fallthru
        _
    $region16: #{forward.14} parent=5 // pred_fallthru
      _
    %p86 = scmp.le.s32.totalorder 1, %s7
    %p87 = scmp.lt.s32.totalorder %s7, 3
    %p88 = pnand %p86, %p87
    %p89 = pneg %p88
    // Predicated region
    $region21: #{forward.14} parent=5 // pred_check
      _
    $region22: #{forward.14} parent=5 // pred_check_branch
      %91 = sbr.rel (%p88) target = $region24
    $region23: #{forward.14} parent=5 // pred_region
      %s92 = ssub.s32 %s7, 1
      %p93 = scmp.lt.s32.totalorder %s12, 1
      %s94 = scalar_select %p93, %s12, 1
      %s95 = smul.addr %s94, 3
      %s96 = smul.addr %s95, 4
      %s97 = scalar_lea.vmem %s0, %s96
      %p98 = pneg %p33
      %p99 = pneg %p30
      %p100 = pneg %p59
      %p101 = pneg %p56
      %p102 = scmp.lt.s32.totalorder %s12, 1
      %s103 = scalar_select %p102, %s12, 1
      %s104 = smul.addr %s103, 3
      %s105 = smul.addr %s104, 4
      %s106 = scalar_lea.vmem %s1, %s105
      %p107 = scmp.lt.s32.totalorder %s12, 1
      %s108 = scalar_select %p107, %s12, 1
      %s109 = smul.addr %s108, 3
      %s110 = smul.addr %s109, 4
      %s111 = scalar_lea.vmem %s0, %s110
      %p112 = scmp.lt.s32.totalorder %s12, 1
      %s113 = scalar_select %p112, %s12, 1
      %s114 = smul.addr %s113, 3
      %s115 = smul.addr %s114, 4
      %s116 = scalar_lea.vmem %s1, %s115
      %v118 = vld [vmem:[%s111] sm:$0xf]
      %v119 = vld [vmem:[%s111 + $0x4] sm:$0xf]
      %v120 = vld [vmem:[%s111 + $0x8] sm:$0xf]
      %v121 = vlaneseq
      %v122 = vand.u32 %v121, 127
      %v126 = vunpack.c.l.b16 %v118
      %v127 = vunpack.c.l.b16 %v119
      %v128 = vunpack.c.l.b16 %v120
      %v129 = vpack.c.b16 %v127, %v126
      %v130 = vpack.c.b16 %v128, %v128
      %131 = vrot.lane.b32.xlu0 %v129, 96
      %v132 = vpop.permute.xlu0 %131
      %133 = vrot.lane.b32.xlu0 %v130, 96
      %v134 = vpop.permute.xlu0 %133
      %vm135 = vcmask 64512
      %v137 = vsel %vm135, %v129, 0
      %v140 = vsel %vm135, %v130, 0
      %v143 = vsel %vm135, %v132, 0
      %v146 = vsel %vm135, %v134, 0
      %148 = vmatprep.subr.bf16.mxu0 0
      %149 = vmatpush1.bf16.xpose.msra.mxu0 %v143
      %150 = vmatprep.subr.bf16.mxu0 0
      %151 = vmatpush1.bf16.xpose.msra.mxu0 %v146
      %152 = vmatprep.subr.bf16.mxu0 0
      %153 = vmatpush1.bf16.xpose.msra.mxu0 0
      %154 = vmatprep.subr.bf16.mxu0 0
      %155 = vmatpush1.bf16.xpose.msra.mxu0 0
      %156 = vmatprep.subr.bf16.mxu0 0
      %157 = vmatpush1.bf16.xpose.msra.mxu0 0
      %158 = vmatprep.subr.bf16.mxu0 0
      %159 = vmatpush1.bf16.xpose.msra.mxu0 0
      %160 = vmatprep.subr.bf16.mxu0 0
      %161 = vmatpush1.bf16.xpose.msra.mxu0 0
      %162 = vmatprep.subr.bf16.mxu0 0
      %163 = vmatpush1.bf16.xpose.msra.mxu0 0
      %164 = vmatprep.subr.bf16.mxu0 0
      %165 = vmatpush1.bf16.xpose.msra.mxu0 0
      %166 = vmatprep.subr.bf16.mxu0 0
      %167 = vmatpush1.bf16.xpose.msra.mxu0 0
      %168 = vmatprep.subr.bf16.mxu0 0
      %169 = vmatpush1.bf16.xpose.msra.mxu0 0
      %170 = vmatprep.subr.bf16.mxu0 0
      %171 = vmatpush1.bf16.xpose.msra.mxu0 0
      %172 = vmatprep.subr.bf16.mxu0 0
      %173 = vmatpush1.bf16.xpose.msra.mxu0 0
      %174 = vmatprep.subr.bf16.mxu0 0
      %175 = vmatpush1.bf16.xpose.msra.mxu0 0
      %176 = vmatprep.subr.bf16.mxu0 0
      %177 = vmatpush1.bf16.xpose.msra.mxu0 0
      %178 = vmatprep.subr.bf16.mxu0 0
      %179 = vmatpush1.bf16.xpose.msra.mxu0 0
      %180 = vmatprep.mubr.bf16.mxu0 0
      %181 = vmatmul.mubr.bf16.gmra.mrb[0].mxu0 %v137
      %v182 = vpop.f32.mrb[0].mxu0
      %v183 = vadd.f32 0.0, %v182
      %v184 = vpop.f32.mrb[0].mxu0
      %v185 = vpop.f32.mrb[0].mxu0
      %v186 = vadd.f32 0.0, %v185
      %v187 = vpop.f32.mrb[0].mxu0
      %188 = vmatprep.mubr.bf16.mxu0 0
      %189 = vmatmul.mubr.bf16.gmra.mrb[0].mxu0 %v140
      %v190 = vpop.f32.mrb[0].mxu0
      %v191 = vadd.f32 0.0, %v190
      %v192 = vpop.f32.mrb[0].mxu0
      %v193 = vpop.f32.mrb[0].mxu0
      %v194 = vpop.f32.mrb[0].mxu0
      %195 = vdwg.mxu0
      %v196 = vmul.f32 %v183, 0.35355338
      %v197 = vmul.f32 %v186, 0.35355338
      %v198 = vmul.f32 %v191, 0.35355338
      %vm199 = vcmp.lt.s32.totalorder %v122, 17
      %v200 = vsel %vm199, %v196, -1e+30
      %v201 = vsel %vm199, %v197, -1e+30
      %v202 = vsel %vm199, %v198, -1e+30
      %vm203 = vcmask 195584
      %v204 = vsel %vm203, %v200, -inf
      %205 = vmax.xlane.f32.xlu0 %v204
      %v206 = vpop.xlane.xlu0 %205
      %v207 = vsel %vm203, %v201, -inf
      %208 = vmax.xlane.f32.xlu0 %v207
      %v209 = vpop.xlane.xlu0 %208
      %v210 = vsel %vm203, %v202, -inf
      %211 = vmax.xlane.f32.xlu0 %v210
      %v212 = vpop.xlane.xlu0 %211
      %v213 = vsub.f32 %v200, %v206
      %v214 = vsub.f32 %v201, %v209
      %v215 = vsub.f32 %v202, %v212
      %v216 = vmul.f32 %v213, 1.442695
      %v217 = vpow.pop %v216
      %v218 = vmul.f32 %v214, 1.442695
      %v219 = vpow.pop %v218
      %v220 = vmul.f32 %v215, 1.442695
      %v221 = vpow.pop %v220
      %v222 = vsel %vm203, %v217, 0.0
      %223 = vadd.xlane.f32.xlu0 %v222
      %v224 = vpop.xlane.xlu0 %223
      %v225 = vsel %vm203, %v219, 0.0
      %226 = vadd.xlane.f32.xlu0 %v225
      %v227 = vpop.xlane.xlu0 %226
      %v228 = vsel %vm203, %v221, 0.0
      %229 = vadd.xlane.f32.xlu0 %v228
      %v230 = vpop.xlane.xlu0 %229
      %v231 = vrcp.pop %v224
      %v232 = vrcp.pop %v227
      %v233 = vrcp.pop %v230
      %v234 = vmul.f32 %v217, %v231
      %v235 = vmul.f32 %v219, %v232
      %v236 = vmul.f32 %v221, %v233
      %v237 = vpack.c.bf16 %v235, %v234
      %v238 = vpack.c.bf16 %v236, %v236
      %239 = vrot.lane.b32.xlu0 %v129, 64
      %v240 = vpop.permute.xlu0 %239
      %241 = vrot.lane.b32.xlu0 %v130, 64
      %v242 = vpop.permute.xlu0 %241
      %v245 = vsel %vm203, %v237, 0
      %v248 = vsel %vm203, %v238, 0
      %vm250 = vcmask 1043456
      %v252 = vsel %vm250, %v242, 0
      %254 = vmatprep.subr.bf16.mxu0 0
      %255 = vmatpush1.bf16.msra.mxu0 %v240
      %256 = vmatprep.subr.bf16.mxu0 0
      %257 = vmatpush1.bf16.msra.mxu0 %v252
      %258 = vmatprep.subr.bf16.mxu0 0
      %259 = vmatpush1.bf16.msra.mxu0 0
      %260 = vmatprep.subr.bf16.mxu0 0
      %261 = vmatpush1.bf16.msra.mxu0 0
      %262 = vmatprep.subr.bf16.mxu0 0
      %263 = vmatpush1.bf16.msra.mxu0 0
      %264 = vmatprep.subr.bf16.mxu0 0
      %265 = vmatpush1.bf16.msra.mxu0 0
      %266 = vmatprep.subr.bf16.mxu0 0
      %267 = vmatpush1.bf16.msra.mxu0 0
      %268 = vmatprep.subr.bf16.mxu0 0
      %269 = vmatpush1.bf16.msra.mxu0 0
      %270 = vmatprep.subr.bf16.mxu0 0
      %271 = vmatpush1.bf16.msra.mxu0 0
      %272 = vmatprep.subr.bf16.mxu0 0
      %273 = vmatpush1.bf16.msra.mxu0 0
      %274 = vmatprep.subr.bf16.mxu0 0
      %275 = vmatpush1.bf16.msra.mxu0 0
      %276 = vmatprep.subr.bf16.mxu0 0
      %277 = vmatpush1.bf16.msra.mxu0 0
      %278 = vmatprep.subr.bf16.mxu0 0
      %279 = vmatpush1.bf16.msra.mxu0 0
      %280 = vmatprep.subr.bf16.mxu0 0
      %281 = vmatpush1.bf16.msra.mxu0 0
      %282 = vmatprep.subr.bf16.mxu0 0
      %283 = vmatpush1.bf16.msra.mxu0 0
      %284 = vmatprep.subr.bf16.mxu0 0
      %285 = vmatpush1.bf16.msra.mxu0 0
      %286 = vmatprep.mubr.bf16.mxu0 0
      %287 = vmatmul.mubr.bf16.gmra.mrb[0].mxu0 %v245
      %v288 = vpop.f32.mrb[0].mxu0
      %v289 = vadd.f32 0.0, %v288
      %v290 = vpop.f32.mrb[0].mxu0
      %v291 = vpop.f32.mrb[0].mxu0
      %v292 = vadd.f32 0.0, %v291
      %v293 = vpop.f32.mrb[0].mxu0
      %294 = vmatprep.mubr.bf16.mxu0 0
      %295 = vmatmul.mubr.bf16.gmra.mrb[0].mxu0 %v248
      %v296 = vpop.f32.mrb[0].mxu0
      %v297 = vadd.f32 0.0, %v296
      %v298 = vpop.f32.mrb[0].mxu0
      %v299 = vpop.f32.mrb[0].mxu0
      %v300 = vpop.f32.mrb[0].mxu0
      %301 = vdwg.mxu0
      %302 = vrot.lane.b32.xlu0 %v129, 120
      %v303 = vpop.permute.xlu0 %302
      %304 = vrot.lane.b32.xlu0 %v130, 120
      %v305 = vpop.permute.xlu0 %304
      %306 = vrot.lane.b32.xlu0 %v129, 88
      %v307 = vpop.permute.xlu0 %306
      %308 = vrot.lane.b32.xlu0 %v130, 88
      %v309 = vpop.permute.xlu0 %308
      %v311 = vsel %vm135, %v303, 0
      %v314 = vsel %vm135, %v305, 0
      %v317 = vsel %vm135, %v307, 0
      %v320 = vsel %vm135, %v309, 0
      %322 = vmatprep.subr.bf16.mxu0 0
      %323 = vmatpush1.bf16.xpose.msra.mxu0 %v317
      %324 = vmatprep.subr.bf16.mxu0 0
      %325 = vmatpush1.bf16.xpose.msra.mxu0 %v320
      %326 = vmatprep.subr.bf16.mxu0 0
      %327 = vmatpush1.bf16.xpose.msra.mxu0 0
      %328 = vmatprep.subr.bf16.mxu0 0
      %329 = vmatpush1.bf16.xpose.msra.mxu0 0
      %330 = vmatprep.subr.bf16.mxu0 0
      %331 = vmatpush1.bf16.xpose.msra.mxu0 0
      %332 = vmatprep.subr.bf16.mxu0 0
      %333 = vmatpush1.bf16.xpose.msra.mxu0 0
      %334 = vmatprep.subr.bf16.mxu0 0
      %335 = vmatpush1.bf16.xpose.msra.mxu0 0
      %336 = vmatprep.subr.bf16.mxu0 0
      %337 = vmatpush1.bf16.xpose.msra.mxu0 0
      %338 = vmatprep.subr.bf16.mxu0 0
      %339 = vmatpush1.bf16.xpose.msra.mxu0 0
      %340 = vmatprep.subr.bf16.mxu0 0
      %341 = vmatpush1.bf16.xpose.msra.mxu0 0
      %342 = vmatprep.subr.bf16.mxu0 0
      %343 = vmatpush1.bf16.xpose.msra.mxu0 0
      %344 = vmatprep.subr.bf16.mxu0 0
      %345 = vmatpush1.bf16.xpose.msra.mxu0 0
      %346 = vmatprep.subr.bf16.mxu0 0
      %347 = vmatpush1.bf16.xpose.msra.mxu0 0
      %348 = vmatprep.subr.bf16.mxu0 0
      %349 = vmatpush1.bf16.xpose.msra.mxu0 0
      %350 = vmatprep.subr.bf16.mxu0 0
      %351 = vmatpush1.bf16.xpose.msra.mxu0 0
      %352 = vmatprep.subr.bf16.mxu0 0
      %353 = vmatpush1.bf16.xpose.msra.mxu0 0
      %354 = vmatprep.mubr.bf16.mxu0 0
      %355 = vmatmul.mubr.bf16.gmra.mrb[0].mxu0 %v311
      %v356 = vpop.f32.mrb[0].mxu0
      %v357 = vadd.f32 0.0, %v356
      %v358 = vpop.f32.mrb[0].mxu0
      %v359 = vpop.f32.mrb[0].mxu0
      %v360 = vadd.f32 0.0, %v359
      %v361 = vpop.f32.mrb[0].mxu0
      %362 = vmatprep.mubr.bf16.mxu0 0
      %363 = vmatmul.mubr.bf16.gmra.mrb[0].mxu0 %v314
      %v364 = vpop.f32.mrb[0].mxu0
      %v365 = vadd.f32 0.0, %v364
      %v366 = vpop.f32.mrb[0].mxu0
      %v367 = vpop.f32.mrb[0].mxu0
      %v368 = vpop.f32.mrb[0].mxu0
      %369 = vdwg.mxu0
      %v370 = vmul.f32 %v357, 0.35355338
      %v371 = vmul.f32 %v360, 0.35355338
      %v372 = vmul.f32 %v365, 0.35355338
      %v373 = vsel %vm199, %v370, -1e+30
      %v374 = vsel %vm199, %v371, -1e+30
      %v375 = vsel %vm199, %v372, -1e+30
      %v376 = vsel %vm203, %v373, -inf
      %377 = vmax.xlane.f32.xlu0 %v376
      %v378 = vpop.xlane.xlu0 %377
      %v379 = vsel %vm203, %v374, -inf
      %380 = vmax.xlane.f32.xlu0 %v379
      %v381 = vpop.xlane.xlu0 %380
      %v382 = vsel %vm203, %v375, -inf
      %383 = vmax.xlane.f32.xlu0 %v382
      %v384 = vpop.xlane.xlu0 %383
      %v385 = vsub.f32 %v373, %v378
      %v386 = vsub.f32 %v374, %v381
      %v387 = vsub.f32 %v375, %v384
      %v388 = vmul.f32 %v385, 1.442695
      %v389 = vpow.pop %v388
      %v390 = vmul.f32 %v386, 1.442695
      %v391 = vpow.pop %v390
      %v392 = vmul.f32 %v387, 1.442695
      %v393 = vpow.pop %v392
      %v394 = vsel %vm203, %v389, 0.0
      %395 = vadd.xlane.f32.xlu0 %v394
      %v396 = vpop.xlane.xlu0 %395
      %v397 = vsel %vm203, %v391, 0.0
      %398 = vadd.xlane.f32.xlu0 %v397
      %v399 = vpop.xlane.xlu0 %398
      %v400 = vsel %vm203, %v393, 0.0
      %401 = vadd.xlane.f32.xlu0 %v400
      %v402 = vpop.xlane.xlu0 %401
      %v403 = vrcp.pop %v396
      %v404 = vrcp.pop %v399
      %v405 = vrcp.pop %v402
      %v406 = vmul.f32 %v389, %v403
      %v407 = vmul.f32 %v391, %v404
      %v408 = vmul.f32 %v393, %v405
      %v409 = vpack.c.bf16 %v407, %v406
      %v410 = vpack.c.bf16 %v408, %v408
      %411 = vrot.lane.b32.xlu0 %v129, 56
      %v412 = vpop.permute.xlu0 %411
      %413 = vrot.lane.b32.xlu0 %v130, 56
      %v414 = vpop.permute.xlu0 %413
      %v417 = vsel %vm203, %v409, 0
      %v420 = vsel %vm203, %v410, 0
      %v423 = vsel %vm250, %v414, 0
      %425 = vmatprep.subr.bf16.mxu0 0
      %426 = vmatpush1.bf16.msra.mxu0 %v412
      %427 = vmatprep.subr.bf16.mxu0 0
      %428 = vmatpush1.bf16.msra.mxu0 %v423
      %429 = vmatprep.subr.bf16.mxu0 0
      %430 = vmatpush1.bf16.msra.mxu0 0
      %431 = vmatprep.subr.bf16.mxu0 0
      %432 = vmatpush1.bf16.msra.mxu0 0
      %433 = vmatprep.subr.bf16.mxu0 0
      %434 = vmatpush1.bf16.msra.mxu0 0
      %435 = vmatprep.subr.bf16.mxu0 0
      %436 = vmatpush1.bf16.msra.mxu0 0
      %437 = vmatprep.subr.bf16.mxu0 0
      %438 = vmatpush1.bf16.msra.mxu0 0
      %439 = vmatprep.subr.bf16.mxu0 0
      %440 = vmatpush1.bf16.msra.mxu0 0
      %441 = vmatprep.subr.bf16.mxu0 0
      %442 = vmatpush1.bf16.msra.mxu0 0
      %443 = vmatprep.subr.bf16.mxu0 0
      %444 = vmatpush1.bf16.msra.mxu0 0
      %445 = vmatprep.subr.bf16.mxu0 0
      %446 = vmatpush1.bf16.msra.mxu0 0
      %447 = vmatprep.subr.bf16.mxu0 0
      %448 = vmatpush1.bf16.msra.mxu0 0
      %449 = vmatprep.subr.bf16.mxu0 0
      %450 = vmatpush1.bf16.msra.mxu0 0
      %451 = vmatprep.subr.bf16.mxu0 0
      %452 = vmatpush1.bf16.msra.mxu0 0
      %453 = vmatprep.subr.bf16.mxu0 0
      %454 = vmatpush1.bf16.msra.mxu0 0
      %455 = vmatprep.subr.bf16.mxu0 0
      %456 = vmatpush1.bf16.msra.mxu0 0
      %457 = vmatprep.mubr.bf16.mxu0 0
      %458 = vmatmul.mubr.bf16.gmra.mrb[0].mxu0 %v417
      %v459 = vpop.f32.mrb[0].mxu0
      %v460 = vadd.f32 0.0, %v459
      %v461 = vpop.f32.mrb[0].mxu0
      %v462 = vpop.f32.mrb[0].mxu0
      %v463 = vadd.f32 0.0, %v462
      %v464 = vpop.f32.mrb[0].mxu0
      %465 = vmatprep.mubr.bf16.mxu0 0
      %466 = vmatmul.mubr.bf16.gmra.mrb[0].mxu0 %v420
      %v467 = vpop.f32.mrb[0].mxu0
      %v468 = vadd.f32 0.0, %v467
      %v469 = vpop.f32.mrb[0].mxu0
      %v470 = vpop.f32.mrb[0].mxu0
      %v471 = vpop.f32.mrb[0].mxu0
      %472 = vdwg.mxu0
      %473 = vrot.lane.b32.xlu0 %v129, 112
      %v474 = vpop.permute.xlu0 %473
      %475 = vrot.lane.b32.xlu0 %v130, 112
      %v476 = vpop.permute.xlu0 %475
      %477 = vrot.lane.b32.xlu0 %v129, 80
      %v478 = vpop.permute.xlu0 %477
      %479 = vrot.lane.b32.xlu0 %v130, 80
      %v480 = vpop.permute.xlu0 %479
      %v482 = vsel %vm135, %v474, 0
      %v485 = vsel %vm135, %v476, 0
      %v488 = vsel %vm135, %v478, 0
      %v491 = vsel %vm135, %v480, 0
      %493 = vmatprep.subr.bf16.mxu0 0
      %494 = vmatpush1.bf16.xpose.msra.mxu0 %v488
      %495 = vmatprep.subr.bf16.mxu0 0
      %496 = vmatpush1.bf16.xpose.msra.mxu0 %v491
      %497 = vmatprep.subr.bf16.mxu0 0
      %498 = vmatpush1.bf16.xpose.msra.mxu0 0
      %499 = vmatprep.subr.bf16.mxu0 0
      %500 = vmatpush1.bf16.xpose.msra.mxu0 0
      %501 = vmatprep.subr.bf16.mxu0 0
      %502 = vmatpush1.bf16.xpose.msra.mxu0 0
      %503 = vmatprep.subr.bf16.mxu0 0
      %504 = vmatpush1.bf16.xpose.msra.mxu0 0
      %505 = vmatprep.subr.bf16.mxu0 0
      %506 = vmatpush1.bf16.xpose.msra.mxu0 0
      %507 = vmatprep.subr.bf16.mxu0 0
      %508 = vmatpush1.bf16.xpose.msra.mxu0 0
      %509 = vmatprep.subr.bf16.mxu0 0
      %510 = vmatpush1.bf16.xpose.msra.mxu0 0
      %511 = vmatprep.subr.bf16.mxu0 0
      %512 = vmatpush1.bf16.xpose.msra.mxu0 0
      %513 = vmatprep.subr.bf16.mxu0 0
      %514 = vmatpush1.bf16.xpose.msra.mxu0 0
      %515 = vmatprep.subr.bf16.mxu0 0
      %516 = vmatpush1.bf16.xpose.msra.mxu0 0
      %517 = vmatprep.subr.bf16.mxu0 0
      %518 = vmatpush1.bf16.xpose.msra.mxu0 0
      %519 = vmatprep.subr.bf16.mxu0 0
      %520 = vmatpush1.bf16.xpose.msra.mxu0 0
      %521 = vmatprep.subr.bf16.mxu0 0
      %522 = vmatpush1.bf16.xpose.msra.mxu0 0
      %523 = vmatprep.subr.bf16.mxu0 0
      %524 = vmatpush1.bf16.xpose.msra.mxu0 0
      %525 = vmatprep.mubr.bf16.mxu0 0
      %526 = vmatmul.mubr.bf16.gmra.mrb[0].mxu0 %v482
      %v527 = vpop.f32.mrb[0].mxu0
      %v528 = vadd.f32 0.0, %v527
      %v529 = vpop.f32.mrb[0].mxu0
      %v530 = vpop.f32.mrb[0].mxu0
      %v531 = vadd.f32 0.0, %v530
      %v532 = vpop.f32.mrb[0].mxu0
      %533 = vmatprep.mubr.bf16.mxu0 0
      %534 = vmatmul.mubr.bf16.gmra.mrb[0].mxu0 %v485
      %v535 = vpop.f32.mrb[0].mxu0
      %v536 = vadd.f32 0.0, %v535
      %v537 = vpop.f32.mrb[0].mxu0
      %v538 = vpop.f32.mrb[0].mxu0
      %v539 = vpop.f32.mrb[0].mxu0
      %540 = vdwg.mxu0
      %v541 = vmul.f32 %v528, 0.35355338
      %v542 = vmul.f32 %v531, 0.35355338
      %v543 = vmul.f32 %v536, 0.35355338
      %v544 = vsel %vm199, %v541, -1e+30
      %v545 = vsel %vm199, %v542, -1e+30
      %v546 = vsel %vm199, %v543, -1e+30
      %v547 = vsel %vm203, %v544, -inf
      %548 = vmax.xlane.f32.xlu0 %v547
      %v549 = vpop.xlane.xlu0 %548
      %v550 = vsel %vm203, %v545, -inf
      %551 = vmax.xlane.f32.xlu0 %v550
      %v552 = vpop.xlane.xlu0 %551
      %v553 = vsel %vm203, %v546, -inf
      %554 = vmax.xlane.f32.xlu0 %v553
      %v555 = vpop.xlane.xlu0 %554
      %v556 = vsub.f32 %v544, %v549
      %v557 = vsub.f32 %v545, %v552
      %v558 = vsub.f32 %v546, %v555
      %v559 = vmul.f32 %v556, 1.442695
      %v560 = vpow.pop %v559
      %v561 = vmul.f32 %v557, 1.442695
      %v562 = vpow.pop %v561
      %v563 = vmul.f32 %v558, 1.442695
      %v564 = vpow.pop %v563
      %v565 = vsel %vm203, %v560, 0.0
      %566 = vadd.xlane.f32.xlu0 %v565
      %v567 = vpop.xlane.xlu0 %566
      %v568 = vsel %vm203, %v562, 0.0
      %569 = vadd.xlane.f32.xlu0 %v568
      %v570 = vpop.xlane.xlu0 %569
      %v571 = vsel %vm203, %v564, 0.0
      %572 = vadd.xlane.f32.xlu0 %v571
      %v573 = vpop.xlane.xlu0 %572
      %v574 = vrcp.pop %v567
      %v575 = vrcp.pop %v570
      %v576 = vrcp.pop %v573
      %v577 = vmul.f32 %v560, %v574
      %v578 = vmul.f32 %v562, %v575
      %v579 = vmul.f32 %v564, %v576
      %v580 = vpack.c.bf16 %v578, %v577
      %v581 = vpack.c.bf16 %v579, %v579
      %582 = vrot.lane.b32.xlu0 %v129, 48
      %v583 = vpop.permute.xlu0 %582
      %584 = vrot.lane.b32.xlu0 %v130, 48
      %v585 = vpop.permute.xlu0 %584
      %v588 = vsel %vm203, %v580, 0
      %v591 = vsel %vm203, %v581, 0
      %v594 = vsel %vm250, %v585, 0
      %596 = vmatprep.subr.bf16.mxu0 0
      %597 = vmatpush1.bf16.msra.mxu0 %v583
      %598 = vmatprep.subr.bf16.mxu0 0
      %599 = vmatpush1.bf16.msra.mxu0 %v594
      %600 = vmatprep.subr.bf16.mxu0 0
      %601 = vmatpush1.bf16.msra.mxu0 0
      %602 = vmatprep.subr.bf16.mxu0 0
      %603 = vmatpush1.bf16.msra.mxu0 0
      %604 = vmatprep.subr.bf16.mxu0 0
      %605 = vmatpush1.bf16.msra.mxu0 0
      %606 = vmatprep.subr.bf16.mxu0 0
      %607 = vmatpush1.bf16.msra.mxu0 0
      %608 = vmatprep.subr.bf16.mxu0 0
      %609 = vmatpush1.bf16.msra.mxu0 0
      %610 = vmatprep.subr.bf16.mxu0 0
      %611 = vmatpush1.bf16.msra.mxu0 0
      %612 = vmatprep.subr.bf16.mxu0 0
      %613 = vmatpush1.bf16.msra.mxu0 0
      %614 = vmatprep.subr.bf16.mxu0 0
      %615 = vmatpush1.bf16.msra.mxu0 0
      %616 = vmatprep.subr.bf16.mxu0 0
      %617 = vmatpush1.bf16.msra.mxu0 0
      %618 = vmatprep.subr.bf16.mxu0 0
      %619 = vmatpush1.bf16.msra.mxu0 0
      %620 = vmatprep.subr.bf16.mxu0 0
      %621 = vmatpush1.bf16.msra.mxu0 0
      %622 = vmatprep.subr.bf16.mxu0 0
      %623 = vmatpush1.bf16.msra.mxu0 0
      %624 = vmatprep.subr.bf16.mxu0 0
      %625 = vmatpush1.bf16.msra.mxu0 0
      %626 = vmatprep.subr.bf16.mxu0 0
      %627 = vmatpush1.bf16.msra.mxu0 0
      %628 = vmatprep.mubr.bf16.mxu0 0
      %629 = vmatmul.mubr.bf16.gmra.mrb[0].mxu0 %v588
      %v630 = vpop.f32.mrb[0].mxu0
      %v631 = vadd.f32 0.0, %v630
      %v632 = vpop.f32.mrb[0].mxu0
      %v633 = vpop.f32.mrb[0].mxu0
      %v634 = vadd.f32 0.0, %v633
      %v635 = vpop.f32.mrb[0].mxu0
      %636 = vmatprep.mubr.bf16.mxu0 0
      %637 = vmatmul.mubr.bf16.gmra.mrb[0].mxu0 %v591
      %v638 = vpop.f32.mrb[0].mxu0
      %v639 = vadd.f32 0.0, %v638
      %v640 = vpop.f32.mrb[0].mxu0
      %v641 = vpop.f32.mrb[0].mxu0
      %v642 = vpop.f32.mrb[0].mxu0
      %643 = vdwg.mxu0
      %644 = vrot.lane.b32.xlu0 %v129, 104
      %v645 = vpop.permute.xlu0 %644
      %646 = vrot.lane.b32.xlu0 %v130, 104
      %v647 = vpop.permute.xlu0 %646
      %648 = vrot.lane.b32.xlu0 %v129, 72
      %v649 = vpop.permute.xlu0 %648
      %650 = vrot.lane.b32.xlu0 %v130, 72
      %v651 = vpop.permute.xlu0 %650
      %v653 = vsel %vm135, %v645, 0
      %v656 = vsel %vm135, %v647, 0
      %v659 = vsel %vm135, %v649, 0
      %v662 = vsel %vm135, %v651, 0
      %664 = vmatprep.subr.bf16.mxu0 0
      %665 = vmatpush1.bf16.xpose.msra.mxu0 %v659
      %666 = vmatprep.subr.bf16.mxu0 0
      %667 = vmatpush1.bf16.xpose.msra.mxu0 %v662
      %668 = vmatprep.subr.bf16.mxu0 0
      %669 = vmatpush1.bf16.xpose.msra.mxu0 0
      %670 = vmatprep.subr.bf16.mxu0 0
      %671 = vmatpush1.bf16.xpose.msra.mxu0 0
      %672 = vmatprep.subr.bf16.mxu0 0
      %673 = vmatpush1.bf16.xpose.msra.mxu0 0
      %674 = vmatprep.subr.bf16.mxu0 0
      %675 = vmatpush1.bf16.xpose.msra.mxu0 0
      %676 = vmatprep.subr.bf16.mxu0 0
      %677 = vmatpush1.bf16.xpose.msra.mxu0 0
      %678 = vmatprep.subr.bf16.mxu0 0
      %679 = vmatpush1.bf16.xpose.msra.mxu0 0
      %680 = vmatprep.subr.bf16.mxu0 0
      %681 = vmatpush1.bf16.xpose.msra.mxu0 0
      %682 = vmatprep.subr.bf16.mxu0 0
      %683 = vmatpush1.bf16.xpose.msra.mxu0 0
      %684 = vmatprep.subr.bf16.mxu0 0
      %685 = vmatpush1.bf16.xpose.msra.mxu0 0
      %686 = vmatprep.subr.bf16.mxu0 0
      %687 = vmatpush1.bf16.xpose.msra.mxu0 0
      %688 = vmatprep.subr.bf16.mxu0 0
      %689 = vmatpush1.bf16.xpose.msra.mxu0 0
      %690 = vmatprep.subr.bf16.mxu0 0
      %691 = vmatpush1.bf16.xpose.msra.mxu0 0
      %692 = vmatprep.subr.bf16.mxu0 0
      %693 = vmatpush1.bf16.xpose.msra.mxu0 0
      %694 = vmatprep.subr.bf16.mxu0 0
      %695 = vmatpush1.bf16.xpose.msra.mxu0 0
      %696 = vmatprep.mubr.bf16.mxu0 0
      %697 = vmatmul.mubr.bf16.gmra.mrb[0].mxu0 %v653
      %v698 = vpop.f32.mrb[0].mxu0
      %v699 = vadd.f32 0.0, %v698
      %v700 = vpop.f32.mrb[0].mxu0
      %v701 = vpop.f32.mrb[0].mxu0
      %v702 = vadd.f32 0.0, %v701
      %v703 = vpop.f32.mrb[0].mxu0
      %704 = vmatprep.mubr.bf16.mxu0 0
      %705 = vmatmul.mubr.bf16.gmra.mrb[0].mxu0 %v656
      %v706 = vpop.f32.mrb[0].mxu0
      %v707 = vadd.f32 0.0, %v706
      %v708 = vpop.f32.mrb[0].mxu0
      %v709 = vpop.f32.mrb[0].mxu0
      %v710 = vpop.f32.mrb[0].mxu0
      %711 = vdwg.mxu0
      %v712 = vmul.f32 %v699, 0.35355338
      %v713 = vmul.f32 %v702, 0.35355338
      %v714 = vmul.f32 %v707, 0.35355338
      %v715 = vsel %vm199, %v712, -1e+30
      %v716 = vsel %vm199, %v713, -1e+30
      %v717 = vsel %vm199, %v714, -1e+30
      %v718 = vsel %vm203, %v715, -inf
      %719 = vmax.xlane.f32.xlu0 %v718
      %v720 = vpop.xlane.xlu0 %719
      %v721 = vsel %vm203, %v716, -inf
      %722 = vmax.xlane.f32.xlu0 %v721
      %v723 = vpop.xlane.xlu0 %722
      %v724 = vsel %vm203, %v717, -inf
      %725 = vmax.xlane.f32.xlu0 %v724
      %v726 = vpop.xlane.xlu0 %725
      %v727 = vsub.f32 %v715, %v720
      %v728 = vsub.f32 %v716, %v723
      %v729 = vsub.f32 %v717, %v726
      %v730 = vmul.f32 %v727, 1.442695
      %v731 = vpow.pop %v730
      %v732 = vmul.f32 %v728, 1.442695
      %v733 = vpow.pop %v732
      %v734 = vmul.f32 %v729, 1.442695
      %v735 = vpow.pop %v734
      %v736 = vsel %vm203, %v731, 0.0
      %737 = vadd.xlane.f32.xlu0 %v736
      %v738 = vpop.xlane.xlu0 %737
      %v739 = vsel %vm203, %v733, 0.0
      %740 = vadd.xlane.f32.xlu0 %v739
      %v741 = vpop.xlane.xlu0 %740
      %v742 = vsel %vm203, %v735, 0.0
      %743 = vadd.xlane.f32.xlu0 %v742
      %v744 = vpop.xlane.xlu0 %743
      %v745 = vrcp.pop %v738
      %v746 = vrcp.pop %v741
      %v747 = vrcp.pop %v744
      %v748 = vmul.f32 %v731, %v745
      %v749 = vmul.f32 %v733, %v746
      %v750 = vmul.f32 %v735, %v747
      %v751 = vpack.c.bf16 %v749, %v748
      %v752 = vpack.c.bf16 %v750, %v750
      %753 = vrot.lane.b32.xlu0 %v129, 40
      %v754 = vpop.permute.xlu0 %753
      %755 = vrot.lane.b32.xlu0 %v130, 40
      %v756 = vpop.permute.xlu0 %755
      %v759 = vsel %vm203, %v751, 0
      %v762 = vsel %vm203, %v752, 0
      %v765 = vsel %vm250, %v756, 0
      %767 = vmatprep.subr.bf16.mxu0 0
      %768 = vmatpush1.bf16.msra.mxu0 %v754
      %769 = vmatprep.subr.bf16.mxu0 0
      %770 = vmatpush1.bf16.msra.mxu0 %v765
      %771 = vmatprep.subr.bf16.mxu0 0
      %772 = vmatpush1.bf16.msra.mxu0 0
      %773 = vmatprep.subr.bf16.mxu0 0
      %774 = vmatpush1.bf16.msra.mxu0 0
      %775 = vmatprep.subr.bf16.mxu0 0
      %776 = vmatpush1.bf16.msra.mxu0 0
      %777 = vmatprep.subr.bf16.mxu0 0
      %778 = vmatpush1.bf16.msra.mxu0 0
      %779 = vmatprep.subr.bf16.mxu0 0
      %780 = vmatpush1.bf16.msra.mxu0 0
      %781 = vmatprep.subr.bf16.mxu0 0
      %782 = vmatpush1.bf16.msra.mxu0 0
      %783 = vmatprep.subr.bf16.mxu0 0
      %784 = vmatpush1.bf16.msra.mxu0 0
      %785 = vmatprep.subr.bf16.mxu0 0
      %786 = vmatpush1.bf16.msra.mxu0 0
      %787 = vmatprep.subr.bf16.mxu0 0
      %788 = vmatpush1.bf16.msra.mxu0 0
      %789 = vmatprep.subr.bf16.mxu0 0
      %790 = vmatpush1.bf16.msra.mxu0 0
      %791 = vmatprep.subr.bf16.mxu0 0
      %792 = vmatpush1.bf16.msra.mxu0 0
      %793 = vmatprep.subr.bf16.mxu0 0
      %794 = vmatpush1.bf16.msra.mxu0 0
      %795 = vmatprep.subr.bf16.mxu0 0
      %796 = vmatpush1.bf16.msra.mxu0 0
      %797 = vmatprep.subr.bf16.mxu0 0
      %798 = vmatpush1.bf16.msra.mxu0 0
      %799 = vmatprep.mubr.bf16.mxu0 0
      %800 = vmatmul.mubr.bf16.gmra.mrb[0].mxu0 %v759
      %v801 = vpop.f32.mrb[0].mxu0
      %v802 = vadd.f32 0.0, %v801
      %v803 = vpop.f32.mrb[0].mxu0
      %v804 = vpop.f32.mrb[0].mxu0
      %v805 = vadd.f32 0.0, %v804
      %v806 = vpop.f32.mrb[0].mxu0
      %807 = vmatprep.mubr.bf16.mxu0 0
      %808 = vmatmul.mubr.bf16.gmra.mrb[0].mxu0 %v762
      %v809 = vpop.f32.mrb[0].mxu0
      %v810 = vadd.f32 0.0, %v809
      %v811 = vpop.f32.mrb[0].mxu0
      %v812 = vpop.f32.mrb[0].mxu0
      %v813 = vpop.f32.mrb[0].mxu0
      %814 = vdwg.mxu0
      %818 = vrot.lane.b32.xlu0 %v460, 8
      %v819 = vpop.permute.xlu0 %818
      %820 = vrot.lane.b32.xlu0 %v463, 8
      %v821 = vpop.permute.xlu0 %820
      %822 = vrot.lane.b32.xlu0 %v468, 8
      %v823 = vpop.permute.xlu0 %822
      %830 = vrot.lane.b32.xlu0 %v631, 16
      %v831 = vpop.permute.xlu0 %830
      %832 = vrot.lane.b32.xlu0 %v634, 16
      %v833 = vpop.permute.xlu0 %832
      %834 = vrot.lane.b32.xlu0 %v639, 16
      %v835 = vpop.permute.xlu0 %834
      %842 = vrot.lane.b32.xlu0 %v802, 24
      %v843 = vpop.permute.xlu0 %842
      %844 = vrot.lane.b32.xlu0 %v805, 24
      %v845 = vpop.permute.xlu0 %844
      %846 = vrot.lane.b32.xlu0 %v810, 24
      %v847 = vpop.permute.xlu0 %846
      %v851 = vsel %vm135, %v289, %v819
      %v852 = vsel %vm135, %v292, %v821
      %v853 = vsel %vm135, %v297, %v823
      %vm854 = vcmask 130048
      %v855 = vsel %vm854, %v851, %v831
      %v856 = vsel %vm854, %v852, %v833
      %v857 = vsel %vm854, %v853, %v835
      %v858 = vsel %vm203, %v855, %v843
      %v859 = vsel %vm203, %v856, %v845
      %v860 = vsel %vm203, %v857, %v847
      %v861 = vpack.c.bf16 %v859, %v858
      %v862 = vpack.c.bf16 %v860, %v860
      %v865 = vunpack.c.l.b16 %v861
      %v866 = vunpack.c.h.b16 %v861
      %v867 = vunpack.c.l.b16 %v862
      %v868 = vpack.c.b16 %v865, %v865
      %v869 = vpack.c.b16 %v866, %v866
      %v870 = vpack.c.b16 %v867, %v867
      %vm874 = vcmask 257024
      %875 = vst.msk [vmem:[%s116] sm:$0xf] %vm874, %v868
      %876 = vst.msk [vmem:[%s116 + $0x4] sm:$0xf] %vm874, %v869
      %877 = vst.msk [vmem:[%s116 + $0x8] sm:$0xf] %vm874, %v870
      %p878 = scmp.lt.s32.totalorder %s12, 1
      %s879 = scalar_select %p878, %s12, 1
      %s880 = smul.addr %s879, 3
      %s881 = smul.addr %s880, 4
      %s882 = scalar_lea.vmem %s1, %s881
      // Predicated region
      $region25: #{forward.14} parent=23 // pred_check
        %p883 = pneg %p56
      $region26: #{forward.14} parent=23 // pred_check_branch
        %885 = sbr.rel (%p883) target = $region28
      $region27: #{forward.14} parent=23 // pred_region
        _
      $region28: #{forward.14} parent=23 // pred_fallthru
        _
    $region24: #{forward.14} parent=5 // pred_fallthru
      _
    %p886 = scmp.le.s32.totalorder 2, %s7
    // Predicated region
    $region29: #{forward.14} parent=5 // pred_check
      %p887 = pneg %p886
    $region30: #{forward.14} parent=5 // pred_check_branch
      %889 = sbr.rel (%p887) target = $region32
    $region31: #{forward.14} parent=5 // pred_region
      %s890 = ssub.s32 %s7, 2
      // Predicated region
      $region33: #{forward.14} parent=31 // pred_check
        %p891 = pneg %p62
      $region34: #{forward.14} parent=31 // pred_check_branch
        %893 = sbr.rel (%p891) target = $region36
      $region35: #{forward.14} parent=31 // pred_region
        %p894 = scmp.lt.s32.totalorder %s13, 1
        %s895 = scalar_select %p894, %s13, 1
        %s896 = smul.addr %s895, 3
        %s897 = smul.addr %s896, 4
        %s898 = scalar_lea.vmem %s1, %s897
      $region36: #{forward.14} parent=31 // pred_fallthru
        _
    $region32: #{forward.14} parent=5 // pred_fallthru
      _
  $region6: #{forward.14} parent=0 // loop_footer
    %s11 = sadd.s32 1, %s7
  $region7: #{forward.14} parent=0 // loop_footer_branch
    %6 = sbr.rel target = $region3
  $region8: #{forward.14} parent=0 // loop_exit
    _

// kernel: forward.17
$region0: #{forward.17}
  #allocation0 [shape = 'u32[]', space=smem, size = 0x4, offset = 0x4, fixed_abs, tag = 'smem constant byte address 0x4 - core index']
  #allocation1 [shape = 'u32[144,128]{1,0:T(1,128)}', space=vmem, size = 0x12000, scoped, tag = 'internal scratch']
  #allocation2 [shape = 'f32[48,32]{1,0:T(8,128)}', space=vmem, size = 0x6000, scoped, tag = 'scratch operand']
  %s0 = inlined_call_operand.vmem [shape: bf16[48,128], index: 0, kind: input, shape index: {}]
  %s1 = inlined_call_operand.vmem [shape: bf16[128,32], index: 1, kind: input, shape index: {}]
  %s2 = inlined_call_operand.vmem [shape: f32[1,32], index: 2, kind: input, shape index: {}]
  %s3 = inlined_call_operand.vmem [shape: bf16[48,32], index: 3, kind: input, shape index: {}]
  %s4 = inlined_call_operand.vmem [shape: bf16[48,32], index: 4, kind: output, shape index: {}]
  %s5 = sld [smem:[#allocation0]]
  $region34: #{forward.17} parent=0
    _
  %s7 = ssub.s32 1, %s5
  %s8 = scalar_select 0, %s7, %s5
  // Predicated region
  $region2: #{forward.17} parent=0 // pred_check
    _
  $region3: #{forward.17} parent=0 // pred_check_branch
    %10 = sbr.rel (0) target = $region5
  $region4: #{forward.17} parent=0 // pred_region
    _
  $region5: #{forward.17} parent=0 // pred_fallthru
    _
  // Predicated region
  $region6: #{forward.17} parent=0 // pred_check
    _
  $region7: #{forward.17} parent=0 // pred_check_branch
    %12 = sbr.rel (0) target = $region9
  $region8: #{forward.17} parent=0 // pred_region
    _
  $region9: #{forward.17} parent=0 // pred_fallthru
    _
  // Predicated region
  $region10: #{forward.17} parent=0 // pred_check
    _
  $region11: #{forward.17} parent=0 // pred_check_branch
    %14 = sbr.rel (0) target = $region13
  $region12: #{forward.17} parent=0 // pred_region
    _
  $region13: #{forward.17} parent=0 // pred_fallthru
    _
  // Predicated region
  $region14: #{forward.17} parent=0 // pred_check
    _
  $region15: #{forward.17} parent=0 // pred_check_branch
    %16 = sbr.rel (0) target = $region17
  $region16: #{forward.17} parent=0 // pred_region
    _
  $region17: #{forward.17} parent=0 // pred_fallthru
    _
  %p18 = scmp.eq.s32.totalorder 0, 0
  // Predicated region
  $region18: #{forward.17} parent=0 // pred_check
    %p19 = pneg %p18
  $region19: #{forward.17} parent=0 // pred_check_branch
    %21 = sbr.rel (%p19) target = $region21
  $region20: #{forward.17} parent=0 // pred_region
    %vm22 = vcmask 261120
    %23 = vst.msk [vmem:[#allocation2] sm:$0xff] %vm22, 0.0
    %24 = vst.msk [vmem:[#allocation2 + $0x8] sm:$0xff] %vm22, 0.0
    %25 = vst.msk [vmem:[#allocation2 + $0x10] sm:$0xff] %vm22, 0.0
    %26 = vst.msk [vmem:[#allocation2 + $0x18] sm:$0xff] %vm22, 0.0
    %27 = vst.msk [vmem:[#allocation2 + $0x20] sm:$0xff] %vm22, 0.0
    %28 = vst.msk [vmem:[#allocation2 + $0x28] sm:$0xff] %vm22, 0.0
  $region21: #{forward.17} parent=0 // pred_fallthru
    _
  %v29 = vld [vmem:[#allocation2] sm:$0xff]
  %v30 = vld [vmem:[#allocation2 + $0x8] sm:$0xff]
  %v31 = vld [vmem:[#allocation2 + $0x10] sm:$0xff]
  %v32 = vld [vmem:[#allocation2 + $0x18] sm:$0xff]
  %v33 = vld [vmem:[#allocation2 + $0x20] sm:$0xff]
  %v34 = vld [vmem:[#allocation2 + $0x28] sm:$0xff]
  %v35 = vld [vmem:[%s0] sm:$0xf]
  %v36 = vld [vmem:[%s0 + $0x4] sm:$0xf]
  %v37 = vld [vmem:[%s0 + $0x8] sm:$0xf]
  %v38 = vld [vmem:[%s0 + $0xc] sm:$0xf]
  %v39 = vld [vmem:[%s0 + $0x10] sm:$0xf]
  %v40 = vld [vmem:[%s0 + $0x14] sm:$0xf]
  %v41 = vld [vmem:[%s1] sm:$0xf]
  %v42 = vld [vmem:[%s1 + $0x4] sm:$0xf]
  %v43 = vld [vmem:[%s1 + $0x8] sm:$0xf]
  %v44 = vld [vmem:[%s1 + $0xc] sm:$0xf]
  %v45 = vld [vmem:[%s1 + $0x10] sm:$0xf]
  %v46 = vld [vmem:[%s1 + $0x14] sm:$0xf]
  %v47 = vld [vmem:[%s1 + $0x18] sm:$0xf]
  %v48 = vld [vmem:[%s1 + $0x1c] sm:$0xf]
  %v49 = vld [vmem:[%s1 + $0x20] sm:$0xf]
  %v50 = vld [vmem:[%s1 + $0x24] sm:$0xf]
  %v51 = vld [vmem:[%s1 + $0x28] sm:$0xf]
  %v52 = vld [vmem:[%s1 + $0x2c] sm:$0xf]
  %v53 = vld [vmem:[%s1 + $0x30] sm:$0xf]
  %v54 = vld [vmem:[%s1 + $0x34] sm:$0xf]
  %v55 = vld [vmem:[%s1 + $0x38] sm:$0xf]
  %v56 = vld [vmem:[%s1 + $0x3c] sm:$0xf]
  %v63 = vunpack.c.l.b16 %v35
  %v64 = vunpack.c.l.b16 %v36
  %v65 = vunpack.c.l.b16 %v37
  %v66 = vunpack.c.l.b16 %v38
  %v67 = vunpack.c.l.b16 %v39
  %v68 = vunpack.c.l.b16 %v40
  %v69 = vpack.c.b16 %v64, %v63
  %v70 = vpack.c.b16 %v66, %v65
  %v71 = vpack.c.b16 %v68, %v67
  %v91 = vunpack.c.l.b16 %v41
  %v92 = vunpack.c.l.b16 %v42
  %v93 = vunpack.c.l.b16 %v43
  %v94 = vunpack.c.l.b16 %v44
  %v95 = vunpack.c.l.b16 %v45
  %v96 = vunpack.c.l.b16 %v46
  %v97 = vunpack.c.l.b16 %v47
  %v98 = vunpack.c.l.b16 %v48
  %v99 = vunpack.c.l.b16 %v49
  %v100 = vunpack.c.l.b16 %v50
  %v101 = vunpack.c.l.b16 %v51
  %v102 = vunpack.c.l.b16 %v52
  %v103 = vunpack.c.l.b16 %v53
  %v104 = vunpack.c.l.b16 %v54
  %v105 = vunpack.c.l.b16 %v55
  %v106 = vunpack.c.l.b16 %v56
  %v107 = vpack.c.b16 %v92, %v91
  %v108 = vpack.c.b16 %v94, %v93
  %v109 = vpack.c.b16 %v96, %v95
  %v110 = vpack.c.b16 %v98, %v97
  %v111 = vpack.c.b16 %v100, %v99
  %v112 = vpack.c.b16 %v102, %v101
  %v113 = vpack.c.b16 %v104, %v103
  %v114 = vpack.c.b16 %v106, %v105
  %123 = vmatprep.subr.bf16.mxu0 0
  %124 = vmatpush1.bf16.msra.mxu0 %v107
  %125 = vmatprep.subr.bf16.mxu0 0
  %126 = vmatpush1.bf16.msra.mxu0 %v108
  %127 = vmatprep.subr.bf16.mxu0 0
  %128 = vmatpush1.bf16.msra.mxu0 %v109
  %129 = vmatprep.subr.bf16.mxu0 0
  %130 = vmatpush1.bf16.msra.mxu0 %v110
  %131 = vmatprep.subr.bf16.mxu0 0
  %132 = vmatpush1.bf16.msra.mxu0 %v111
  %133 = vmatprep.subr.bf16.mxu0 0
  %134 = vmatpush1.bf16.msra.mxu0 %v112
  %135 = vmatprep.subr.bf16.mxu0 0
  %136 = vmatpush1.bf16.msra.mxu0 %v113
  %137 = vmatprep.subr.bf16.mxu0 0
  %138 = vmatpush1.bf16.msra.mxu0 %v114
  %139 = vmatprep.subr.bf16.mxu0 0
  %140 = vmatpush1.bf16.msra.mxu0 0
  %141 = vmatprep.subr.bf16.mxu0 0
  %142 = vmatpush1.bf16.msra.mxu0 0
  %143 = vmatprep.subr.bf16.mxu0 0
  %144 = vmatpush1.bf16.msra.mxu0 0
  %145 = vmatprep.subr.bf16.mxu0 0
  %146 = vmatpush1.bf16.msra.mxu0 0
  %147 = vmatprep.subr.bf16.mxu0 0
  %148 = vmatpush1.bf16.msra.mxu0 0
  %149 = vmatprep.subr.bf16.mxu0 0
  %150 = vmatpush1.bf16.msra.mxu0 0
  %151 = vmatprep.subr.bf16.mxu0 0
  %152 = vmatpush1.bf16.msra.mxu0 0
  %153 = vmatprep.subr.bf16.mxu0 0
  %154 = vmatpush1.bf16.msra.mxu0 0
  %155 = vmatprep.mubr.bf16.mxu0 0
  %156 = vmatmul.mubr.bf16.gmra.mrb[0].mxu0 %v69
  %v157 = vpop.f32.mrb[0].mxu0
  %v158 = vadd.f32 0.0, %v157
  %v159 = vpop.f32.mrb[0].mxu0
  %v160 = vpop.f32.mrb[0].mxu0
  %v161 = vadd.f32 0.0, %v160
  %v162 = vpop.f32.mrb[0].mxu0
  %163 = vmatprep.mubr.bf16.mxu0 0
  %164 = vmatmul.mubr.bf16.gmra.mrb[0].mxu0 %v70
  %v165 = vpop.f32.mrb[0].mxu0
  %v166 = vadd.f32 0.0, %v165
  %v167 = vpop.f32.mrb[0].mxu0
  %v168 = vpop.f32.mrb[0].mxu0
  %v169 = vadd.f32 0.0, %v168
  %v170 = vpop.f32.mrb[0].mxu0
  %171 = vmatprep.mubr.bf16.mxu0 0
  %172 = vmatmul.mubr.bf16.gmra.mrb[0].mxu0 %v71
  %v173 = vpop.f32.mrb[0].mxu0
  %v174 = vadd.f32 0.0, %v173
  %v175 = vpop.f32.mrb[0].mxu0
  %v176 = vpop.f32.mrb[0].mxu0
  %v177 = vadd.f32 0.0, %v176
  %v178 = vpop.f32.mrb[0].mxu0
  %179 = vdwg.mxu0
  %v180 = vadd.f32 %v29, %v158
  %v181 = vadd.f32 %v30, %v161
  %v182 = vadd.f32 %v31, %v166
  %v183 = vadd.f32 %v32, %v169
  %v184 = vadd.f32 %v33, %v174
  %v185 = vadd.f32 %v34, %v177
  %vm186 = vcmask 261120
  %187 = vst.msk [vmem:[#allocation2] sm:$0xff] %vm186, %v180
  %188 = vst.msk [vmem:[#allocation2 + $0x8] sm:$0xff] %vm186, %v181
  %189 = vst.msk [vmem:[#allocation2 + $0x10] sm:$0xff] %vm186, %v182
  %190 = vst.msk [vmem:[#allocation2 + $0x18] sm:$0xff] %vm186, %v183
  %191 = vst.msk [vmem:[#allocation2 + $0x20] sm:$0xff] %vm186, %v184
  %192 = vst.msk [vmem:[#allocation2 + $0x28] sm:$0xff] %vm186, %v185
  // Predicated region
  $region22: #{forward.17} parent=0 // pred_check
    %p193 = pneg %p18
  $region23: #{forward.17} parent=0 // pred_check_branch
    %195 = sbr.rel (%p193) target = $region25
  $region24: #{forward.17} parent=0 // pred_region
    %v196 = vld [vmem:[#allocation2] sm:$0xff]
    %v197 = vld [vmem:[#allocation2 + $0x8] sm:$0xff]
    %v198 = vld [vmem:[#allocation2 + $0x10] sm:$0xff]
    %v199 = vld [vmem:[#allocation2 + $0x18] sm:$0xff]
    %v200 = vld [vmem:[#allocation2 + $0x20] sm:$0xff]
    %v201 = vld [vmem:[#allocation2 + $0x28] sm:$0xff]
    %v202 = vld [vmem:[%s2] sm:$0x1]
    %v204 = vlaneseq
    %v205 = vshrl.u32 %v204, 7
    %v206 = vsub.s32 0, %v205
    %v207 = vrot.slane %v202, %v206
    %v209 = vadd.f32 %v196, %v207
    %v210 = vadd.f32 %v197, %v207
    %v211 = vadd.f32 %v198, %v207
    %v212 = vadd.f32 %v199, %v207
    %v213 = vadd.f32 %v200, %v207
    %v214 = vadd.f32 %v201, %v207
    %v215 = vld [vmem:[%s3] sm:$0xf]
    %v216 = vld [vmem:[%s3 + $0x4] sm:$0xf]
    %v217 = vld [vmem:[%s3 + $0x8] sm:$0xf]
    %v218 = vld [vmem:[%s3 + $0xc] sm:$0xf]
    %v219 = vld [vmem:[%s3 + $0x10] sm:$0xf]
    %v220 = vld [vmem:[%s3 + $0x14] sm:$0xf]
    %v221 = vunpack.c.l.bf16 %v215
    %v222 = vunpack.c.l.bf16 %v216
    %v223 = vunpack.c.l.bf16 %v217
    %v224 = vunpack.c.l.bf16 %v218
    %v225 = vunpack.c.l.bf16 %v219
    %v226 = vunpack.c.l.bf16 %v220
    %v227 = vadd.f32 %v209, %v221
    %v228 = vadd.f32 %v210, %v222
    %v229 = vadd.f32 %v211, %v223
    %v230 = vadd.f32 %v212, %v224
    %v231 = vadd.f32 %v213, %v225
    %v232 = vadd.f32 %v214, %v226
    %v233 = vpack.c.bf16 %v228, %v227
    %v234 = vpack.c.bf16 %v230, %v229
    %v235 = vpack.c.bf16 %v232, %v231
    %v239 = vunpack.c.l.b16 %v233
    %v240 = vunpack.c.h.b16 %v233
    %v241 = vunpack.c.l.b16 %v234
    %v242 = vunpack.c.h.b16 %v234
    %v243 = vunpack.c.l.b16 %v235
    %v244 = vunpack.c.h.b16 %v235
    %v245 = vpack.c.b16 %v239, %v239
    %v246 = vpack.c.b16 %v240, %v240
    %v247 = vpack.c.b16 %v241, %v241
    %v248 = vpack.c.b16 %v242, %v242
    %v249 = vpack.c.b16 %v243, %v243
    %v250 = vpack.c.b16 %v244, %v244
    %vm257 = vcmask 257024
    %258 = vst.msk [vmem:[%s4] sm:$0xf] %vm257, %v245
    %259 = vst.msk [vmem:[%s4 + $0x4] sm:$0xf] %vm257, %v246
    %260 = vst.msk [vmem:[%s4 + $0x8] sm:$0xf] %vm257, %v247
    %261 = vst.msk [vmem:[%s4 + $0xc] sm:$0xf] %vm257, %v248
    %262 = vst.msk [vmem:[%s4 + $0x10] sm:$0xf] %vm257, %v249
    %263 = vst.msk [vmem:[%s4 + $0x14] sm:$0xf] %vm257, %v250
  $region25: #{forward.17} parent=0 // pred_fallthru
    _
  // Predicated region
  $region26: #{forward.17} parent=0 // pred_check
    _
  $region27: #{forward.17} parent=0 // pred_check_branch
    %265 = sbr.rel (0) target = $region29
  $region28: #{forward.17} parent=0 // pred_region
    _
  $region29: #{forward.17} parent=0 // pred_fallthru
    _
  // Predicated region
  $region30: #{forward.17} parent=0 // pred_check
    _
  $region31: #{forward.17} parent=0 // pred_check_branch
    %267 = sbr.rel (0) target = $region33
  $region32: #{forward.17} parent=0 // pred_region
    _
  $region33: #{forward.17} parent=0 // pred_fallthru
    _

// kernel: forward.16
$region0: #{forward.16}
  #allocation0 [shape = 'u32[]', space=smem, size = 0x4, offset = 0x4, fixed_abs, tag = 'smem constant byte address 0x4 - core index']
  #allocation1 [shape = 'u32[144,128]{1,0:T(1,128)}', space=vmem, size = 0x12000, scoped, tag = 'internal scratch']
  #allocation2 [shape = 'bf16[48,32]{1,0:T(16,128)(2,1)}', space=vmem, size = 0x3000, scoped, tag = 'scratch operand']
  %s0 = inlined_call_operand.vmem [shape: bf16[48,32], index: 0, kind: input, shape index: {}]
  %s1 = inlined_call_operand.vmem [shape: f32[1,32], index: 1, kind: input, shape index: {}]
  %s2 = inlined_call_operand.vmem [shape: f32[1,32], index: 2, kind: input, shape index: {}]
  %s3 = inlined_call_operand.vmem [shape: bf16[32,128], index: 3, kind: input, shape index: {}]
  %s4 = inlined_call_operand.vmem [shape: f32[1,128], index: 4, kind: input, shape index: {}]
  %s5 = inlined_call_operand.vmem [shape: bf16[48,128], index: 5, kind: output, shape index: {}]
  %s6 = sld [smem:[#allocation0]]
  $region34: #{forward.16} parent=0
    _
  %s8 = ssub.s32 1, %s6
  %s9 = scalar_select 0, %s8, %s6
  // Predicated region
  $region2: #{forward.16} parent=0 // pred_check
    _
  $region3: #{forward.16} parent=0 // pred_check_branch
    %11 = sbr.rel (0) target = $region5
  $region4: #{forward.16} parent=0 // pred_region
    _
  $region5: #{forward.16} parent=0 // pred_fallthru
    _
  // Predicated region
  $region6: #{forward.16} parent=0 // pred_check
    _
  $region7: #{forward.16} parent=0 // pred_check_branch
    %13 = sbr.rel (0) target = $region9
  $region8: #{forward.16} parent=0 // pred_region
    _
  $region9: #{forward.16} parent=0 // pred_fallthru
    _
  // Predicated region
  $region10: #{forward.16} parent=0 // pred_check
    _
  $region11: #{forward.16} parent=0 // pred_check_branch
    %15 = sbr.rel (0) target = $region13
  $region12: #{forward.16} parent=0 // pred_region
    _
  $region13: #{forward.16} parent=0 // pred_fallthru
    _
  // Predicated region
  $region14: #{forward.16} parent=0 // pred_check
    _
  $region15: #{forward.16} parent=0 // pred_check_branch
    %17 = sbr.rel (0) target = $region17
  $region16: #{forward.16} parent=0 // pred_region
    _
  $region17: #{forward.16} parent=0 // pred_fallthru
    _
  // Predicated region
  $region18: #{forward.16} parent=0 // pred_check
    _
  $region19: #{forward.16} parent=0 // pred_check_branch
    %19 = sbr.rel (0) target = $region21
  $region20: #{forward.16} parent=0 // pred_region
    _
  $region21: #{forward.16} parent=0 // pred_fallthru
    _
  %p21 = scmp.eq.s32.totalorder 0, 0
  // Predicated region
  $region22: #{forward.16} parent=0 // pred_check
    %p22 = pneg %p21
  $region23: #{forward.16} parent=0 // pred_check_branch
    %24 = sbr.rel (%p22) target = $region25
  $region24: #{forward.16} parent=0 // pred_region
    %v25 = vld [vmem:[%s0] sm:$0xf]
    %v26 = vld [vmem:[%s0 + $0x4] sm:$0xf]
    %v27 = vld [vmem:[%s0 + $0x8] sm:$0xf]
    %v28 = vld [vmem:[%s0 + $0xc] sm:$0xf]
    %v29 = vld [vmem:[%s0 + $0x10] sm:$0xf]
    %v30 = vld [vmem:[%s0 + $0x14] sm:$0xf]
    %v31 = vunpack.c.l.bf16 %v25
    %v32 = vunpack.c.l.bf16 %v26
    %v33 = vunpack.c.l.bf16 %v27
    %v34 = vunpack.c.l.bf16 %v28
    %v35 = vunpack.c.l.bf16 %v29
    %v36 = vunpack.c.l.bf16 %v30
    %vm37 = vcmask 261120
    %v38 = vsel %vm37, %v31, 0.0
    %39 = vadd.xlane.f32.xlu0 %v38
    %v40 = vpop.xlane.xlu0 %39
    %v41 = vsel %vm37, %v32, 0.0
    %42 = vadd.xlane.f32.xlu0 %v41
    %v43 = vpop.xlane.xlu0 %42
    %v44 = vsel %vm37, %v33, 0.0
    %45 = vadd.xlane.f32.xlu0 %v44
    %v46 = vpop.xlane.xlu0 %45
    %v47 = vsel %vm37, %v34, 0.0
    %48 = vadd.xlane.f32.xlu0 %v47
    %v49 = vpop.xlane.xlu0 %48
    %v50 = vsel %vm37, %v35, 0.0
    %51 = vadd.xlane.f32.xlu0 %v50
    %v52 = vpop.xlane.xlu0 %51
    %v53 = vsel %vm37, %v36, 0.0
    %54 = vadd.xlane.f32.xlu0 %v53
    %v55 = vpop.xlane.xlu0 %54
    %v56 = vrcp.pop 32.0
    %v57 = vmul.f32 %v40, %v56
    %v58 = vmul.f32 %v43, %v56
    %v59 = vmul.f32 %v46, %v56
    %v60 = vmul.f32 %v49, %v56
    %v61 = vmul.f32 %v52, %v56
    %v62 = vmul.f32 %v55, %v56
    %v63 = vsub.f32 %v31, %v57
    %v64 = vsub.f32 %v32, %v58
    %v65 = vsub.f32 %v33, %v59
    %v66 = vsub.f32 %v34, %v60
    %v67 = vsub.f32 %v35, %v61
    %v68 = vsub.f32 %v36, %v62
    %v69 = vmul.f32 %v63, %v63
    %v70 = vmul.f32 %v64, %v64
    %v71 = vmul.f32 %v65, %v65
    %v72 = vmul.f32 %v66, %v66
    %v73 = vmul.f32 %v67, %v67
    %v74 = vmul.f32 %v68, %v68
    %v75 = vsel %vm37, %v69, 0.0
    %76 = vadd.xlane.f32.xlu0 %v75
    %v77 = vpop.xlane.xlu0 %76
    %v78 = vsel %vm37, %v70, 0.0
    %79 = vadd.xlane.f32.xlu0 %v78
    %v80 = vpop.xlane.xlu0 %79
    %v81 = vsel %vm37, %v71, 0.0
    %82 = vadd.xlane.f32.xlu0 %v81
    %v83 = vpop.xlane.xlu0 %82
    %v84 = vsel %vm37, %v72, 0.0
    %85 = vadd.xlane.f32.xlu0 %v84
    %v86 = vpop.xlane.xlu0 %85
    %v87 = vsel %vm37, %v73, 0.0
    %88 = vadd.xlane.f32.xlu0 %v87
    %v89 = vpop.xlane.xlu0 %88
    %v90 = vsel %vm37, %v74, 0.0
    %91 = vadd.xlane.f32.xlu0 %v90
    %v92 = vpop.xlane.xlu0 %91
    %v93 = vmul.f32 %v77, %v56
    %v94 = vmul.f32 %v80, %v56
    %v95 = vmul.f32 %v83, %v56
    %v96 = vmul.f32 %v86, %v56
    %v97 = vmul.f32 %v89, %v56
    %v98 = vmul.f32 %v92, %v56
    %v99 = vadd.f32 %v93, 1e-06
    %v100 = vadd.f32 %v94, 1e-06
    %v101 = vadd.f32 %v95, 1e-06
    %v102 = vadd.f32 %v96, 1e-06
    %v103 = vadd.f32 %v97, 1e-06
    %v104 = vadd.f32 %v98, 1e-06
    %v105 = vrsqrt.pop %v99
    %v106 = vrsqrt.pop %v100
    %v107 = vrsqrt.pop %v101
    %v108 = vrsqrt.pop %v102
    %v109 = vrsqrt.pop %v103
    %v110 = vrsqrt.pop %v104
    %v111 = vmul.f32 %v63, %v105
    %v112 = vmul.f32 %v64, %v106
    %v113 = vmul.f32 %v65, %v107
    %v114 = vmul.f32 %v66, %v108
    %v115 = vmul.f32 %v67, %v109
    %v116 = vmul.f32 %v68, %v110
    %v117 = vld [vmem:[%s1] sm:$0x1]
    %v119 = vlaneseq
    %v120 = vshrl.u32 %v119, 7
    %v121 = vsub.s32 0, %v120
    %v122 = vrot.slane %v117, %v121
    %v124 = vmul.f32 %v111, %v122
    %v125 = vmul.f32 %v112, %v122
    %v126 = vmul.f32 %v113, %v122
    %v127 = vmul.f32 %v114, %v122
    %v128 = vmul.f32 %v115, %v122
    %v129 = vmul.f32 %v116, %v122
    %v130 = vld [vmem:[%s2] sm:$0x1]
    %v132 = vlaneseq
    %v133 = vshrl.u32 %v132, 7
    %v134 = vsub.s32 0, %v133
    %v135 = vrot.slane %v130, %v134
    %v137 = vadd.f32 %v124, %v135
    %v138 = vadd.f32 %v125, %v135
    %v139 = vadd.f32 %v126, %v135
    %v140 = vadd.f32 %v127, %v135
    %v141 = vadd.f32 %v128, %v135
    %v142 = vadd.f32 %v129, %v135
    %v143 = vpack.c.bf16 %v138, %v137
    %v144 = vpack.c.bf16 %v140, %v139
    %v145 = vpack.c.bf16 %v142, %v141
    %146 = vst.msk [vmem:[#allocation2] sm:$0xff] %vm37, %v143
    %147 = vst.msk [vmem:[#allocation2 + $0x8] sm:$0xff] %vm37, %v144
    %148 = vst.msk [vmem:[#allocation2 + $0x10] sm:$0xff] %vm37, %v145
  $region25: #{forward.16} parent=0 // pred_fallthru
    _
  %v149 = vld [vmem:[#allocation2] sm:$0xff]
  %v150 = vld [vmem:[#allocation2 + $0x8] sm:$0xff]
  %v151 = vld [vmem:[#allocation2 + $0x10] sm:$0xff]
  %v152 = vld [vmem:[%s3] sm:$0xf]
  %v153 = vld [vmem:[%s3 + $0x4] sm:$0xf]
  %v154 = vld [vmem:[%s3 + $0x8] sm:$0xf]
  %v155 = vld [vmem:[%s3 + $0xc] sm:$0xf]
  %v156 = vld [vmem:[%s4] sm:$0x1]
  %v158 = vlaneseq
  %v159 = vshrl.u32 %v158, 7
  %v160 = vsub.s32 0, %v159
  %v161 = vrot.slane %v156, %v160
  %v167 = vunpack.c.l.b16 %v152
  %v168 = vunpack.c.l.b16 %v153
  %v169 = vunpack.c.l.b16 %v154
  %v170 = vunpack.c.l.b16 %v155
  %v171 = vpack.c.b16 %v168, %v167
  %v172 = vpack.c.b16 %v170, %v169
  %vm175 = vcmask 261120
  %v177 = vsel %vm175, %v149, 0
  %v180 = vsel %vm175, %v150, 0
  %v183 = vsel %vm175, %v151, 0
  %185 = vmatprep.subr.bf16.mxu0 0
  %186 = vmatpush1.bf16.msra.mxu0 %v171
  %187 = vmatprep.subr.bf16.mxu0 0
  %188 = vmatpush1.bf16.msra.mxu0 %v172
  %189 = vmatprep.subr.bf16.mxu0 0
  %190 = vmatpush1.bf16.msra.mxu0 0
  %191 = vmatprep.subr.bf16.mxu0 0
  %192 = vmatpush1.bf16.msra.mxu0 0
  %193 = vmatprep.subr.bf16.mxu0 0
  %194 = vmatpush1.bf16.msra.mxu0 0
  %195 = vmatprep.subr.bf16.mxu0 0
  %196 = vmatpush1.bf16.msra.mxu0 0
  %197 = vmatprep.subr.bf16.mxu0 0
  %198 = vmatpush1.bf16.msra.mxu0 0
  %199 = vmatprep.subr.bf16.mxu0 0
  %200 = vmatpush1.bf16.msra.mxu0 0
  %201 = vmatprep.subr.bf16.mxu0 0
  %202 = vmatpush1.bf16.msra.mxu0 0
  %203 = vmatprep.subr.bf16.mxu0 0
  %204 = vmatpush1.bf16.msra.mxu0 0
  %205 = vmatprep.subr.bf16.mxu0 0
  %206 = vmatpush1.bf16.msra.mxu0 0
  %207 = vmatprep.subr.bf16.mxu0 0
  %208 = vmatpush1.bf16.msra.mxu0 0
  %209 = vmatprep.subr.bf16.mxu0 0
  %210 = vmatpush1.bf16.msra.mxu0 0
  %211 = vmatprep.subr.bf16.mxu0 0
  %212 = vmatpush1.bf16.msra.mxu0 0
  %213 = vmatprep.subr.bf16.mxu0 0
  %214 = vmatpush1.bf16.msra.mxu0 0
  %215 = vmatprep.subr.bf16.mxu0 0
  %216 = vmatpush1.bf16.msra.mxu0 0
  %217 = vmatprep.mubr.bf16.mxu0 0
  %218 = vmatmul.mubr.bf16.gmra.mrb[0].mxu0 %v177
  %v219 = vpop.f32.mrb[0].mxu0
  %v220 = vadd.f32 %v161, %v219
  %v221 = vpop.f32.mrb[0].mxu0
  %v222 = vpop.f32.mrb[0].mxu0
  %v223 = vadd.f32 %v161, %v222
  %v224 = vpop.f32.mrb[0].mxu0
  %225 = vmatprep.mubr.bf16.mxu0 0
  %226 = vmatmul.mubr.bf16.gmra.mrb[0].mxu0 %v180
  %v227 = vpop.f32.mrb[0].mxu0
  %v228 = vadd.f32 %v161, %v227
  %v229 = vpop.f32.mrb[0].mxu0
  %v230 = vpop.f32.mrb[0].mxu0
  %v231 = vadd.f32 %v161, %v230
  %v232 = vpop.f32.mrb[0].mxu0
  %233 = vmatprep.mubr.bf16.mxu0 0
  %234 = vmatmul.mubr.bf16.gmra.mrb[0].mxu0 %v183
  %v235 = vpop.f32.mrb[0].mxu0
  %v236 = vadd.f32 %v161, %v235
  %v237 = vpop.f32.mrb[0].mxu0
  %v238 = vpop.f32.mrb[0].mxu0
  %v239 = vadd.f32 %v161, %v238
  %v240 = vpop.f32.mrb[0].mxu0
  %241 = vdwg.mxu0
  %v242 = vmul.f32 %v220, 0.5
  %v243 = vmul.f32 %v223, 0.5
  %v244 = vmul.f32 %v228, 0.5
  %v245 = vmul.f32 %v231, 0.5
  %v246 = vmul.f32 %v236, 0.5
  %v247 = vmul.f32 %v239, 0.5
  %v248 = vmul.f32 %v220, 0.70710677
  %v249 = vmul.f32 %v223, 0.70710677
  %v250 = vmul.f32 %v228, 0.70710677
  %v251 = vmul.f32 %v231, 0.70710677
  %v252 = vmul.f32 %v236, 0.70710677
  %v253 = vmul.f32 %v239, 0.70710677
  %vm254 = vcmp.ge.f32.partialorder %v248, 0.0
  %vm255 = vcmp.ge.f32.partialorder %v249, 0.0
  %vm256 = vcmp.ge.f32.partialorder %v250, 0.0
  %vm257 = vcmp.ge.f32.partialorder %v251, 0.0
  %vm258 = vcmp.ge.f32.partialorder %v252, 0.0
  %vm259 = vcmp.ge.f32.partialorder %v253, 0.0
  %v260 = vsel %vm254, 1.0, -1.0
  %v261 = vsel %vm255, 1.0, -1.0
  %v262 = vsel %vm256, 1.0, -1.0
  %v263 = vsel %vm257, 1.0, -1.0
  %v264 = vsel %vm258, 1.0, -1.0
  %v265 = vsel %vm259, 1.0, -1.0
  %v266 = vand.u32 2147483647, %v248
  %v267 = vand.u32 2147483647, %v249
  %v268 = vand.u32 2147483647, %v250
  %v269 = vand.u32 2147483647, %v251
  %v270 = vand.u32 2147483647, %v252
  %v271 = vand.u32 2147483647, %v253
  %v272 = vmul.f32 %v266, 0.3275911
  %v273 = vmul.f32 %v267, 0.3275911
  %v274 = vmul.f32 %v268, 0.3275911
  %v275 = vmul.f32 %v269, 0.3275911
  %v276 = vmul.f32 %v270, 0.3275911
  %v277 = vmul.f32 %v271, 0.3275911
  %v278 = vadd.f32 %v272, 1.0
  %v279 = vadd.f32 %v273, 1.0
  %v280 = vadd.f32 %v274, 1.0
  %v281 = vadd.f32 %v275, 1.0
  %v282 = vadd.f32 %v276, 1.0
  %v283 = vadd.f32 %v277, 1.0
  %v284 = vrcp.pop %v278
  %v285 = vmul.f32 1.0, %v284
  %v286 = vrcp.pop %v279
  %v287 = vmul.f32 1.0, %v286
  %v288 = vrcp.pop %v280
  %v289 = vmul.f32 1.0, %v288
  %v290 = vrcp.pop %v281
  %v291 = vmul.f32 1.0, %v290
  %v292 = vrcp.pop %v282
  %v293 = vmul.f32 1.0, %v292
  %v294 = vrcp.pop %v283
  %v295 = vmul.f32 1.0, %v294
  %v296 = vmul.f32 %v285, 1.0614054
  %v297 = vmul.f32 %v287, 1.0614054
  %v298 = vmul.f32 %v289, 1.0614054
  %v299 = vmul.f32 %v291, 1.0614054
  %v300 = vmul.f32 %v293, 1.0614054
  %v301 = vmul.f32 %v295, 1.0614054
  %v302 = vadd.f32 %v296, -1.4531521
  %v303 = vadd.f32 %v297, -1.4531521
  %v304 = vadd.f32 %v298, -1.4531521
  %v305 = vadd.f32 %v299, -1.4531521
  %v306 = vadd.f32 %v300, -1.4531521
  %v307 = vadd.f32 %v301, -1.4531521
  %v308 = vmul.f32 %v302, %v285
  %v309 = vmul.f32 %v303, %v287
  %v310 = vmul.f32 %v304, %v289
  %v311 = vmul.f32 %v305, %v291
  %v312 = vmul.f32 %v306, %v293
  %v313 = vmul.f32 %v307, %v295
  %v314 = vadd.f32 %v308, 1.4214138
  %v315 = vadd.f32 %v309, 1.4214138
  %v316 = vadd.f32 %v310, 1.4214138
  %v317 = vadd.f32 %v311, 1.4214138
  %v318 = vadd.f32 %v312, 1.4214138
  %v319 = vadd.f32 %v313, 1.4214138
  %v320 = vmul.f32 %v314, %v285
  %v321 = vmul.f32 %v315, %v287
  %v322 = vmul.f32 %v316, %v289
  %v323 = vmul.f32 %v317, %v291
  %v324 = vmul.f32 %v318, %v293
  %v325 = vmul.f32 %v319, %v295
  %v326 = vadd.f32 %v320, -0.28449672
  %v327 = vadd.f32 %v321, -0.28449672
  %v328 = vadd.f32 %v322, -0.28449672
  %v329 = vadd.f32 %v323, -0.28449672
  %v330 = vadd.f32 %v324, -0.28449672
  %v331 = vadd.f32 %v325, -0.28449672
  %v332 = vmul.f32 %v326, %v285
  %v333 = vmul.f32 %v327, %v287
  %v334 = vmul.f32 %v328, %v289
  %v335 = vmul.f32 %v329, %v291
  %v336 = vmul.f32 %v330, %v293
  %v337 = vmul.f32 %v331, %v295
  %v338 = vadd.f32 %v332, 0.2548296
  %v339 = vadd.f32 %v333, 0.2548296
  %v340 = vadd.f32 %v334, 0.2548296
  %v341 = vadd.f32 %v335, 0.2548296
  %v342 = vadd.f32 %v336, 0.2548296
  %v343 = vadd.f32 %v337, 0.2548296
  %v344 = vmul.f32 %v338, %v285
  %v345 = vmul.f32 %v339, %v287
  %v346 = vmul.f32 %v340, %v289
  %v347 = vmul.f32 %v341, %v291
  %v348 = vmul.f32 %v342, %v293
  %v349 = vmul.f32 %v343, %v295
  %v350 = vsub.f32 0.0, %v266
  %v351 = vsub.f32 0.0, %v267
  %v352 = vsub.f32 0.0, %v268
  %v353 = vsub.f32 0.0, %v269
  %v354 = vsub.f32 0.0, %v270
  %v355 = vsub.f32 0.0, %v271
  %v356 = vmul.f32 %v350, %v266
  %v357 = vmul.f32 %v351, %v267
  %v358 = vmul.f32 %v352, %v268
  %v359 = vmul.f32 %v353, %v269
  %v360 = vmul.f32 %v354, %v270
  %v361 = vmul.f32 %v355, %v271
  %v362 = vmul.f32 %v356, 1.442695
  %v363 = vpow.pop %v362
  %v364 = vmul.f32 %v357, 1.442695
  %v365 = vpow.pop %v364
  %v366 = vmul.f32 %v358, 1.442695
  %v367 = vpow.pop %v366
  %v368 = vmul.f32 %v359, 1.442695
  %v369 = vpow.pop %v368
  %v370 = vmul.f32 %v360, 1.442695
  %v371 = vpow.pop %v370
  %v372 = vmul.f32 %v361, 1.442695
  %v373 = vpow.pop %v372
  %v374 = vmul.f32 %v344, %v363
  %v375 = vmul.f32 %v345, %v365
  %v376 = vmul.f32 %v346, %v367
  %v377 = vmul.f32 %v347, %v369
  %v378 = vmul.f32 %v348, %v371
  %v379 = vmul.f32 %v349, %v373
  %v380 = vsub.f32 1.0, %v374
  %v381 = vsub.f32 1.0, %v375
  %v382 = vsub.f32 1.0, %v376
  %v383 = vsub.f32 1.0, %v377
  %v384 = vsub.f32 1.0, %v378
  %v385 = vsub.f32 1.0, %v379
  %v386 = vmul.f32 %v260, %v380
  %v387 = vmul.f32 %v261, %v381
  %v388 = vmul.f32 %v262, %v382
  %v389 = vmul.f32 %v263, %v383
  %v390 = vmul.f32 %v264, %v384
  %v391 = vmul.f32 %v265, %v385
  %v392 = vadd.f32 %v386, 1.0
  %v393 = vadd.f32 %v387, 1.0
  %v394 = vadd.f32 %v388, 1.0
  %v395 = vadd.f32 %v389, 1.0
  %v396 = vadd.f32 %v390, 1.0
  %v397 = vadd.f32 %v391, 1.0
  %v398 = vmul.f32 %v242, %v392
  %v399 = vmul.f32 %v243, %v393
  %v400 = vmul.f32 %v244, %v394
  %v401 = vmul.f32 %v245, %v395
  %v402 = vmul.f32 %v246, %v396
  %v403 = vmul.f32 %v247, %v397
  %v404 = vpack.c.bf16 %v399, %v398
  %v405 = vpack.c.bf16 %v401, %v400
  %v406 = vpack.c.bf16 %v403, %v402
  %v410 = vunpack.c.l.b16 %v404
  %v411 = vunpack.c.h.b16 %v404
  %v412 = vunpack.c.l.b16 %v405
  %v413 = vunpack.c.h.b16 %v405
  %v414 = vunpack.c.l.b16 %v406
  %v415 = vunpack.c.h.b16 %v406
  %v416 = vpack.c.b16 %v410, %v410
  %v417 = vpack.c.b16 %v411, %v411
  %v418 = vpack.c.b16 %v412, %v412
  %v419 = vpack.c.b16 %v413, %v413
  %v420 = vpack.c.b16 %v414, %v414
  %v421 = vpack.c.b16 %v415, %v415
  %428 = vst [vmem:[%s5] sm:$0xf] %v416
  %429 = vst [vmem:[%s5 + $0x4] sm:$0xf] %v417
  %430 = vst [vmem:[%s5 + $0x8] sm:$0xf] %v418
  %431 = vst [vmem:[%s5 + $0xc] sm:$0xf] %v419
  %432 = vst [vmem:[%s5 + $0x10] sm:$0xf] %v420
  %433 = vst [vmem:[%s5 + $0x14] sm:$0xf] %v421
  // Predicated region
  $region26: #{forward.16} parent=0 // pred_check
    _
  $region27: #{forward.16} parent=0 // pred_check_branch
    %435 = sbr.rel (0) target = $region29
  $region28: #{forward.16} parent=0 // pred_region
    _
  $region29: #{forward.16} parent=0 // pred_fallthru
    _
  // Predicated region
  $region30: #{forward.16} parent=0 // pred_check
    _
  $region31: #{forward.16} parent=0 // pred_check_branch
    %437 = sbr.rel (0) target = $region33
  $region32: #{forward.16} parent=0 // pred_region
    _
  $region33: #{forward.16} parent=0 // pred_fallthru
    _

// kernel: forward.23
$region0: #{forward.23}
  #allocation0 [shape = 'u32[]', space=smem, size = 0x4, offset = 0x4, fixed_abs, tag = 'smem constant byte address 0x4 - core index']
  #allocation1 [shape = 'u32[144,128]{1,0:T(1,128)}', space=vmem, size = 0x12000, scoped, tag = 'internal scratch']
  #allocation2 [shape = 'bf16[2,32]{1,0:T(2,128)(2,1)}', space=vmem, size = 0x200, scoped, tag = 'scratch operand']
  %s0 = inlined_call_operand.vmem [shape: bf16[2,32], index: 0, kind: input, shape index: {}]
  %s1 = inlined_call_operand.vmem [shape: f32[1,32], index: 1, kind: input, shape index: {}]
  %s2 = inlined_call_operand.vmem [shape: f32[1,32], index: 2, kind: input, shape index: {}]
  %s3 = inlined_call_operand.vmem [shape: bf16[32,128], index: 3, kind: input, shape index: {}]
  %s4 = inlined_call_operand.vmem [shape: f32[1,128], index: 4, kind: input, shape index: {}]
  %s5 = inlined_call_operand.hbm [shape: f32[2,128], index: 5, kind: output, shape index: {}]
  %s6 = sld [smem:[#allocation0]]
  $region34: #{forward.23} parent=0
    _
  %s8 = ssub.s32 1, %s6
  %s9 = scalar_select 0, %s8, %s6
  $region1: #{forward.23} parent=0
    #allocation3 [shape = 'u8[1024]{0}', space=vmem, size = 0x400, scoped, tag = 'output window, operand 0, single buffered']
    #allocation4 [shape = 's32[1]{0}', space=sflag, size = 0x4, scoped, tag = 'scoped memory for forward.23']
    %10 = vsyncpa [#allocation4], 0
    // Predicated region
    $region2: #{forward.23} parent=1 // pred_check
      _
    $region3: #{forward.23} parent=1 // pred_check_branch
      %12 = sbr.rel (0) target = $region5
    $region4: #{forward.23} parent=1 // pred_region
      _
    $region5: #{forward.23} parent=1 // pred_fallthru
      _
    // Predicated region
    $region6: #{forward.23} parent=1 // pred_check
      _
    $region7: #{forward.23} parent=1 // pred_check_branch
      %14 = sbr.rel (0) target = $region9
    $region8: #{forward.23} parent=1 // pred_region
      _
    $region9: #{forward.23} parent=1 // pred_fallthru
      _
    // Predicated region
    $region10: #{forward.23} parent=1 // pred_check
      _
    $region11: #{forward.23} parent=1 // pred_check_branch
      %16 = sbr.rel (0) target = $region13
    $region12: #{forward.23} parent=1 // pred_region
      _
    $region13: #{forward.23} parent=1 // pred_fallthru
      _
    // Predicated region
    $region14: #{forward.23} parent=1 // pred_check
      _
    $region15: #{forward.23} parent=1 // pred_check_branch
      %18 = sbr.rel (0) target = $region17
    $region16: #{forward.23} parent=1 // pred_region
      _
    $region17: #{forward.23} parent=1 // pred_fallthru
      _
    // Predicated region
    $region18: #{forward.23} parent=1 // pred_check
      _
    $region19: #{forward.23} parent=1 // pred_check_branch
      %20 = sbr.rel (0) target = $region21
    $region20: #{forward.23} parent=1 // pred_region
      _
    $region21: #{forward.23} parent=1 // pred_fallthru
      _
    %p22 = scmp.eq.s32.totalorder 0, 0
    // Predicated region
    $region22: #{forward.23} parent=1 // pred_check
      %p23 = pneg %p22
    $region23: #{forward.23} parent=1 // pred_check_branch
      %25 = sbr.rel (%p23) target = $region25
    $region24: #{forward.23} parent=1 // pred_region
      %v26 = vld [vmem:[%s0] sm:$0x1]
      %v27 = vunpack.c.l.bf16 %v26
      %vm28 = vcmask 254976
      %v29 = vsel %vm28, %v27, 0.0
      %30 = vadd.xlane.f32.xlu0 %v29
      %v31 = vpop.xlane.xlu0 %30
      %v32 = vrcp.pop 32.0
      %v33 = vmul.f32 %v31, %v32
      %v34 = vsub.f32 %v27, %v33
      %v35 = vmul.f32 %v34, %v34
      %v36 = vsel %vm28, %v35, 0.0
      %37 = vadd.xlane.f32.xlu0 %v36
      %v38 = vpop.xlane.xlu0 %37
      %v39 = vmul.f32 %v38, %v32
      %v40 = vadd.f32 %v39, 1e-06
      %v41 = vrsqrt.pop %v40
      %v42 = vmul.f32 %v34, %v41
      %v43 = vld [vmem:[%s1] sm:$0x1]
      %v45 = vlaneseq
      %v46 = vshrl.u32 %v45, 7
      %v47 = vsub.s32 0, %v46
      %v48 = vrot.slane %v43, %v47
      %v50 = vmul.f32 %v42, %v48
      %v51 = vld [vmem:[%s2] sm:$0x1]
      %v53 = vlaneseq
      %v54 = vshrl.u32 %v53, 7
      %v55 = vsub.s32 0, %v54
      %v56 = vrot.slane %v51, %v55
      %v58 = vadd.f32 %v50, %v56
      %v59 = vpack.c.bf16 %v58, %v58
      %vm60 = vcmask 253952
      %61 = vst.msk [vmem:[#allocation2] sm:$0x1] %vm60, %v59
    $region25: #{forward.23} parent=1 // pred_fallthru
      _
    %v62 = vld [vmem:[#allocation2] sm:$0x1]
    %v63 = vld [vmem:[%s3] sm:$0xf]
    %v64 = vld [vmem:[%s3 + $0x4] sm:$0xf]
    %v65 = vld [vmem:[%s3 + $0x8] sm:$0xf]
    %v66 = vld [vmem:[%s3 + $0xc] sm:$0xf]
    %v67 = vld [vmem:[%s4] sm:$0x1]
    %v69 = vlaneseq
    %v70 = vshrl.u32 %v69, 7
    %v71 = vsub.s32 0, %v70
    %v72 = vrot.slane %v67, %v71
    %v78 = vunpack.c.l.b16 %v63
    %v79 = vunpack.c.l.b16 %v64
    %v80 = vunpack.c.l.b16 %v65
    %v81 = vunpack.c.l.b16 %v66
    %v82 = vpack.c.b16 %v79, %v78
    %v83 = vpack.c.b16 %v81, %v80
    %vm86 = vcmask 261120
    %v88 = vsel %vm86, %v62, 0
    %90 = vmatprep.subr.bf16.mxu0 0
    %91 = vmatpush1.bf16.msra.mxu0 %v82
    %92 = vmatprep.subr.bf16.mxu0 0
    %93 = vmatpush1.bf16.msra.mxu0 %v83
    %94 = vmatprep.subr.bf16.mxu0 0
    %95 = vmatpush1.bf16.msra.mxu0 0
    %96 = vmatprep.subr.bf16.mxu0 0
    %97 = vmatpush1.bf16.msra.mxu0 0
    %98 = vmatprep.subr.bf16.mxu0 0
    %99 = vmatpush1.bf16.msra.mxu0 0
    %100 = vmatprep.subr.bf16.mxu0 0
    %101 = vmatpush1.bf16.msra.mxu0 0
    %102 = vmatprep.subr.bf16.mxu0 0
    %103 = vmatpush1.bf16.msra.mxu0 0
    %104 = vmatprep.subr.bf16.mxu0 0
    %105 = vmatpush1.bf16.msra.mxu0 0
    %106 = vmatprep.subr.bf16.mxu0 0
    %107 = vmatpush1.bf16.msra.mxu0 0
    %108 = vmatprep.subr.bf16.mxu0 0
    %109 = vmatpush1.bf16.msra.mxu0 0
    %110 = vmatprep.subr.bf16.mxu0 0
    %111 = vmatpush1.bf16.msra.mxu0 0
    %112 = vmatprep.subr.bf16.mxu0 0
    %113 = vmatpush1.bf16.msra.mxu0 0
    %114 = vmatprep.subr.bf16.mxu0 0
    %115 = vmatpush1.bf16.msra.mxu0 0
    %116 = vmatprep.subr.bf16.mxu0 0
    %117 = vmatpush1.bf16.msra.mxu0 0
    %118 = vmatprep.subr.bf16.mxu0 0
    %119 = vmatpush1.bf16.msra.mxu0 0
    %120 = vmatprep.subr.bf16.mxu0 0
    %121 = vmatpush1.bf16.msra.mxu0 0
    %122 = vmatprep.mubr.bf16.mxu0 0
    %123 = vmatmul.mubr.bf16.gmra.mrb[0].mxu0 %v88
    %v124 = vpop.f32.mrb[0].mxu0
    %v125 = vadd.f32 %v72, %v124
    %v126 = vpop.f32.mrb[0].mxu0
    %v127 = vpop.f32.mrb[0].mxu0
    %v128 = vpop.f32.mrb[0].mxu0
    %129 = vdwg.mxu0
    %130 = vst [vmem:[#allocation3] sm:$0x3] %v125
    // Predicated region
    $region26: #{forward.23} parent=1 // pred_check
      _
    $region27: #{forward.23} parent=1 // pred_check_branch
      %132 = sbr.rel (0) target = $region29
    $region28: #{forward.23} parent=1 // pred_region
      %s134 = ssub.s32 32, 32
      %135 = vsyncadd [#allocation4], %s134
      %s137 = sshll.u32 [#allocation3], 4
      %s138 = int_to_ptr.vmem [resolvable:$true] %s137
      %140 = dma.vmem_to_hbm [thread:$0]  %s138, 32, %s5, [#allocation4]
    $region29: #{forward.23} parent=1 // pred_fallthru
      _
    // Predicated region
    $region30: #{forward.23} parent=1 // pred_check
      _
    $region31: #{forward.23} parent=1 // pred_check_branch
      %142 = sbr.rel (0) target = $region33
    $region32: #{forward.23} parent=1 // pred_region
      %143 = dma.done [#allocation4], 32
    $region33: #{forward.23} parent=1 // pred_fallthru
      _
    %144 = vsyncpa [#allocation4], 1

</llo_original>
